<compile_context>
chip_gen: v7x
topology: tpu7x:2x2x1
jax: 0.10.0
libtpu: 0.0.40
codegen_flags: <defaults>
</compile_context>

<pallas_src>
import functools

import jax
import jax.numpy as jnp
from jax import lax
from jax.experimental import pallas as pl
from jax.experimental.pallas import tpu as pltpu

VOCAB = 100
EMBED = 50
HIDDEN = 128
NUM_LAYERS = 2
NUM_CLASSES = 4
PAD_IDX = 1  # padding_idx only affects training grads; forward is a plain lookup

C_PAD = 128     # classifier logits padded -> lane-dense output stores
SUBLANE = 8


# ------------------------------ fused kernel ---------------------------------
def _gru_gates(gi, gh, h, H):
    """PyTorch GRU cell update from precomputed input/hidden gate projections."""
    i_r, i_z, i_n = gi[:, :H], gi[:, H:2 * H], gi[:, 2 * H:]
    h_r, h_z, h_n = gh[:, :H], gh[:, H:2 * H], gh[:, 2 * H:]
    r = jax.nn.sigmoid(i_r + h_r)
    z = jax.nn.sigmoid(i_z + h_z)
    n = jnp.tanh(i_n + r * h_n)
    return (1.0 - z) * n + z * h


def fused_gru_clf_kernel(gi0_ref, whh0_ref, bhh0_ref,
                         wih1_ref, whh1_ref, bih1_ref, bhh1_ref,
                         wlin_ref, blin_ref, out_ref,
                         gi1_scr, y0_scr, *, seq_len, batch_pad):
    """Whole forward in one invocation.

    gi0_ref: (T*Bp, 3H)  precomputed layer-0 input-gate projections (bias folded)
    gi1_scr: (T*Bp, 3H)  hoisted layer-1 input-gate projections (scratch)
    y0_scr:  (T*Bp, H)   layer-0 hidden sequence (never leaves VMEM)
    out_ref: (Bp, C_PAD) lane-dense padded logits
    """
    T = seq_len
    Bp = batch_pad
    H = whh0_ref.shape[0]

    # ------------------------------ layer 0 ------------------------------
    # Input-side gates arrive precomputed (embedding fused with W_ih0 + b_ih0),
    # so only h @ W_hh0 remains on the serial critical path.
    whh0 = whh0_ref[...]
    bhh0 = bhh0_ref[...]

    def step0(t, h):
        off = pl.multiple_of(t * Bp, Bp)
        gi = gi0_ref[pl.ds(off, Bp), :]
        gh = jnp.dot(h, whh0, preferred_element_type=jnp.float32) + bhh0
        h_new = _gru_gates(gi, gh, h, H)
        y0_scr[pl.ds(off, Bp), :] = h_new
        return h_new

    h0 = jnp.zeros((Bp, H), jnp.float32)
    lax.fori_loop(0, T, step0, h0, unroll=True)

    # ------------------------------ layer 1 ------------------------------
    # Hoisted input-gate matmul: one (T*Bp, H) x (H, 3H) matmul for all steps.
    gi1_scr[...] = (jnp.dot(y0_scr[...], wih1_ref[...],
                            preferred_element_type=jnp.float32) + bih1_ref[...])

    whh1 = whh1_ref[...]
    bhh1 = bhh1_ref[...]

    def step1(t, h):
        off = pl.multiple_of(t * Bp, Bp)
        gi = gi1_scr[pl.ds(off, Bp), :]
        gh = jnp.dot(h, whh1, preferred_element_type=jnp.float32) + bhh1
        return _gru_gates(gi, gh, h, H)

    h_last = lax.fori_loop(0, T, step1, h0, unroll=True)

    # ---------------- classifier (lane-dense padded logits) ----------------
    out_ref[...] = (jnp.dot(h_last, wlin_ref[...],
                            preferred_element_type=jnp.float32) + blin_ref[...])


# --------------------- one-time parameter preprocessing ----------------------
def prepare_params(params):
    """Transpose / pad / fuse PyTorch-layout weights once, outside the forward."""
    # Fuse embedding + layer-0 input projection + its bias into one gate table:
    # G0[v] = Emb[v] @ W_ih_l0^T + b_ih_l0   -> forward just gathers rows of G0.
    gate_tbl0 = (params["embedding"] @ params["w_ih_l0"].T
                 + params["b_ih_l0"][None, :])                       # (VOCAB, 3H)
    wlin_t = jnp.zeros((HIDDEN, C_PAD), jnp.float32).at[:, :NUM_CLASSES].set(params["w_lin"].T)
    blin = jnp.zeros((1, C_PAD), jnp.float32).at[0, :NUM_CLASSES].set(params["b_lin"])
    return {
        "gate_tbl0": gate_tbl0.astype(jnp.float32),
        "whh0_t": params["w_hh_l0"].T,
        "bhh0": params["b_hh_l0"].reshape(1, 3 * HIDDEN),
        "wih1_t": params["w_ih_l1"].T,
        "whh1_t": params["w_hh_l1"].T,
        "bih1": params["b_ih_l1"].reshape(1, 3 * HIDDEN),
        "bhh1": params["b_hh_l1"].reshape(1, 3 * HIDDEN),
        "wlin_t": wlin_t,
        "blin": blin,
    }


# ------------------------------ full forward ---------------------------------
@jax.jit
def clf_gru_forward(prep, tokens):
    """tokens: (B, T) int32.  Mirrors ClfGRU.forward."""
    B, T = tokens.shape
    Bp = max(SUBLANE, ((B + SUBLANE - 1) // SUBLANE) * SUBLANE)

    # Fused embedding + layer-0 input-gate lookup (glue JAX gather),
    # time-major, batch padded to 8 sublanes.
    gi0 = jnp.take(prep["gate_tbl0"], tokens.T, axis=0)      # (T, B, 3H)
    gi0 = jnp.pad(gi0, ((0, 0), (0, Bp - B), (0, 0)))        # (T, Bp, 3H)
    gi0_flat = gi0.reshape(T * Bp, 3 * HIDDEN)

    kernel = functools.partial(fused_gru_clf_kernel, seq_len=T, batch_pad=Bp)
    logits_pad = pl.pallas_call(
        kernel,
        out_shape=jax.ShapeDtypeStruct((Bp, C_PAD), jnp.float32),
        scratch_shapes=[
            pltpu.VMEM((T * Bp, 3 * HIDDEN), jnp.float32),   # hoisted layer-1 gates
            pltpu.VMEM((T * Bp, HIDDEN), jnp.float32),       # layer-0 outputs (never hit HBM)
        ],
    )(gi0_flat,
      prep["whh0_t"], prep["bhh0"],
      prep["wih1_t"], prep["whh1_t"], prep["bih1"], prep["bhh1"],
      prep["wlin_t"], prep["blin"])

    return logits_pad[:B, :NUM_CLASSES]


# --------------------------- pure-JAX reference ------------------------------
def _gru_cell_ref(x_t, h, w_ih, w_hh, b_ih, b_hh):
    gi = x_t @ w_ih.T + b_ih
    gh = h @ w_hh.T + b_hh
    i_r, i_z, i_n = jnp.split(gi, 3, axis=-1)
    h_r, h_z, h_n = jnp.split(gh, 3, axis=-1)
    r = jax.nn.sigmoid(i_r + h_r)
    z = jax.nn.sigmoid(i_z + h_z)
    n = jnp.tanh(i_n + r * h_n)
    return (1.0 - z) * n + z * h


def clf_gru_reference(params, tokens):
    embeds = jnp.take(params["embedding"], tokens, axis=0)
    x = jnp.transpose(embeds, (1, 0, 2))  # (T, B, D)
    B = tokens.shape[0]

    def run_layer(x_seq, w_ih, w_hh, b_ih, b_hh):
        def step(h, x_t):
            h_new = _gru_cell_ref(x_t, h, w_ih, w_hh, b_ih, b_hh)
            return h_new, h_new
        h0 = jnp.zeros((B, HIDDEN), jnp.float32)
        _, ys = jax.lax.scan(step, h0, x_seq)
        return ys

    y0 = run_layer(x, params["w_ih_l0"], params["w_hh_l0"],
                   params["b_ih_l0"], params["b_hh_l0"])
    y1 = run_layer(y0, params["w_ih_l1"], params["w_hh_l1"],
                   params["b_ih_l1"], params["b_hh_l1"])
    h_last = y1[-1]
    return h_last @ params["w_lin"].T + params["b_lin"]


# --------------------------------- params ------------------------------------
def init_params(key):
    ks = jax.random.split(key, 12)
    s = 0.1
    params = {
        "embedding": jax.random.normal(ks[0], (VOCAB, EMBED), jnp.float32) * s,
        # layer 0: input 50 -> hidden 128
        "w_ih_l0": jax.random.normal(ks[1], (3 * HIDDEN, EMBED), jnp.float32) * s,
        "w_hh_l0": jax.random.normal(ks[2], (3 * HIDDEN, HIDDEN), jnp.float32) * s,
        "b_ih_l0": jax.random.normal(ks[3], (3 * HIDDEN,), jnp.float32) * s,
        "b_hh_l0": jax.random.normal(ks[4], (3 * HIDDEN,), jnp.float32) * s,
        # layer 1: hidden 128 -> hidden 128
        "w_ih_l1": jax.random.normal(ks[5], (3 * HIDDEN, HIDDEN), jnp.float32) * s,
        "w_hh_l1": jax.random.normal(ks[6], (3 * HIDDEN, HIDDEN), jnp.float32) * s,
        "b_ih_l1": jax.random.normal(ks[7], (3 * HIDDEN,), jnp.float32) * s,
        "b_hh_l1": jax.random.normal(ks[8], (3 * HIDDEN,), jnp.float32) * s,
        # classifier
        "w_lin": jax.random.normal(ks[9], (NUM_CLASSES, HIDDEN), jnp.float32) * s,
        "b_lin": jax.random.normal(ks[10], (NUM_CLASSES,), jnp.float32) * s,
    }
    # zero the padding row like nn.Embedding(padding_idx=1) does at init
    params["embedding"] = params["embedding"].at[PAD_IDX].set(0.0)
    return params


if __name__ == "__main__":
    B, T = 2, 8
    key = jax.random.PRNGKey(0)
    pkey, tkey = jax.random.split(key)
    params = init_params(pkey)
    tokens = jax.random.randint(tkey, (B, T), 0, VOCAB, dtype=jnp.int32)

    prep = prepare_params(params)          # one-time weight transpose/fuse (outside forward)
    logits = clf_gru_forward(prep, tokens)
    logits = jax.block_until_ready(logits)

    ref = clf_gru_reference(params, tokens)
    assert logits.shape == (B, NUM_CLASSES)
    assert jnp.allclose(logits, ref, atol=1e-4, rtol=1e-4), (logits, ref)

    print("KERNEL_OK")
</pallas_src>

<mosaic_0001>
module attributes {stable_mosaic.version = 11 : i64} {
  func.func @fused_gru_clf_kernel(%arg0: memref<64x384xf32, #tpu.memory_space<vmem>>, %arg1: memref<128x384xf32, #tpu.memory_space<vmem>>, %arg2: memref<1x384xf32, #tpu.memory_space<vmem>>, %arg3: memref<128x384xf32, #tpu.memory_space<vmem>>, %arg4: memref<128x384xf32, #tpu.memory_space<vmem>>, %arg5: memref<1x384xf32, #tpu.memory_space<vmem>>, %arg6: memref<1x384xf32, #tpu.memory_space<vmem>>, %arg7: memref<128x128xf32, #tpu.memory_space<vmem>>, %arg8: memref<1x128xf32, #tpu.memory_space<vmem>>, %arg9: memref<8x128xf32, #tpu.memory_space<vmem>>, %arg10: memref<64x384xf32, #tpu.memory_space<vmem>>, %arg11: memref<64x128xf32, #tpu.memory_space<vmem>>) attributes {dimension_semantics = [], scalar_prefetch = 0 : i64, scratch_operands = 2 : i64, tpu.core_type = #tpu.core_type<tc>} {
    %c0 = arith.constant 0 : index
    %c0_0 = arith.constant 0 : index
    %0 = vector.load %arg1[%c0, %c0_0] : memref<128x384xf32, #tpu.memory_space<vmem>>, vector<128x384xf32>
    %c0_1 = arith.constant 0 : index
    %c0_2 = arith.constant 0 : index
    %1 = vector.load %arg2[%c0_1, %c0_2] : memref<1x384xf32, #tpu.memory_space<vmem>>, vector<1x384xf32>
    %cst = arith.constant 0.000000e+00 : f32
    %2 = vector.broadcast %cst : f32 to vector<8x128xf32>
    %c0_i32 = arith.constant 0 : i32
    %c8_i32 = arith.constant 8 : i32
    %3 = arith.muli %c0_i32, %c8_i32 : i32
    %4 = tpu.assume_multiple %3, 8 : i32
    %5 = arith.index_cast %4 : i32 to index
    %c0_3 = arith.constant 0 : index
    %6 = vector.load %arg0[%5, %c0_3] : memref<64x384xf32, #tpu.memory_space<vmem>>, vector<8x384xf32>
    %cst_4 = arith.constant dense<0.000000e+00> : vector<8x384xf32>
    %7 = tpu.matmul %2, %0, %cst_4 {dimension_numbers = #tpu.dot_dimension_numbers<[1], [0], [0], [1], [0, 0, 1, 1], [], []>} : vector<8x128xf32>, vector<128x384xf32>, vector<8x384xf32> -> vector<8x384xf32>
    %8 = vector.broadcast %1 : vector<1x384xf32> to vector<8x384xf32>
    %9 = arith.addf %7, %8 : vector<8x384xf32>
    %10 = vector.extract_strided_slice %6 {offsets = [0, 0], sizes = [8, 128], strides = [1, 1]} : vector<8x384xf32> to vector<8x128xf32>
    %11 = vector.extract_strided_slice %6 {offsets = [0, 128], sizes = [8, 128], strides = [1, 1]} : vector<8x384xf32> to vector<8x128xf32>
    %12 = vector.extract_strided_slice %6 {offsets = [0, 256], sizes = [8, 128], strides = [1, 1]} : vector<8x384xf32> to vector<8x128xf32>
    %13 = vector.extract_strided_slice %9 {offsets = [0, 0], sizes = [8, 128], strides = [1, 1]} : vector<8x384xf32> to vector<8x128xf32>
    %14 = vector.extract_strided_slice %9 {offsets = [0, 128], sizes = [8, 128], strides = [1, 1]} : vector<8x384xf32> to vector<8x128xf32>
    %15 = vector.extract_strided_slice %9 {offsets = [0, 256], sizes = [8, 128], strides = [1, 1]} : vector<8x384xf32> to vector<8x128xf32>
    %16 = arith.addf %10, %13 : vector<8x128xf32>
    %17 = arith.negf %16 : vector<8x128xf32>
    %18 = math.exp %17 : vector<8x128xf32>
    %cst_5 = arith.constant 1.000000e+00 : f32
    %19 = vector.broadcast %cst_5 : f32 to vector<8x128xf32>
    %20 = arith.addf %19, %18 : vector<8x128xf32>
    %21 = arith.divf %19, %20 : vector<8x128xf32>
    %22 = arith.addf %11, %14 : vector<8x128xf32>
    %23 = arith.negf %22 : vector<8x128xf32>
    %24 = math.exp %23 : vector<8x128xf32>
    %cst_6 = arith.constant 1.000000e+00 : f32
    %25 = vector.broadcast %cst_6 : f32 to vector<8x128xf32>
    %26 = arith.addf %25, %24 : vector<8x128xf32>
    %27 = arith.divf %25, %26 : vector<8x128xf32>
    %28 = arith.mulf %21, %15 : vector<8x128xf32>
    %29 = arith.addf %12, %28 : vector<8x128xf32>
    %30 = math.tanh %29 : vector<8x128xf32>
    %cst_7 = arith.constant 1.000000e+00 : f32
    %31 = vector.broadcast %cst_7 : f32 to vector<8x128xf32>
    %32 = arith.subf %31, %27 : vector<8x128xf32>
    %33 = arith.mulf %32, %30 : vector<8x128xf32>
    %34 = arith.mulf %27, %2 : vector<8x128xf32>
    %35 = arith.addf %33, %34 : vector<8x128xf32>
    %36 = arith.index_cast %4 : i32 to index
    %c0_8 = arith.constant 0 : index
    %37 = vector.load %arg11[%36, %c0_8] : memref<64x128xf32, #tpu.memory_space<vmem>>, vector<8x128xf32>
    tpu.vector_store %arg11[%36, %c0_8], %35 {strides = array<i32>} : memref<64x128xf32, #tpu.memory_space<vmem>>, vector<8x128xf32>,
    %c1_i32 = arith.constant 1 : i32
    %c8_i32_9 = arith.constant 8 : i32
    %38 = arith.muli %c1_i32, %c8_i32_9 : i32
    %39 = tpu.assume_multiple %38, 8 : i32
    %40 = arith.index_cast %39 : i32 to index
    %c0_10 = arith.constant 0 : index
    %41 = vector.load %arg0[%40, %c0_10] : memref<64x384xf32, #tpu.memory_space<vmem>>, vector<8x384xf32>
    %cst_11 = arith.constant dense<0.000000e+00> : vector<8x384xf32>
    %42 = tpu.matmul %35, %0, %cst_11 {dimension_numbers = #tpu.dot_dimension_numbers<[1], [0], [0], [1], [0, 0, 1, 1], [], []>} : vector<8x128xf32>, vector<128x384xf32>, vector<8x384xf32> -> vector<8x384xf32>
    %43 = vector.broadcast %1 : vector<1x384xf32> to vector<8x384xf32>
    %44 = arith.addf %42, %43 : vector<8x384xf32>
    %45 = vector.extract_strided_slice %41 {offsets = [0, 0], sizes = [8, 128], strides = [1, 1]} : vector<8x384xf32> to vector<8x128xf32>
    %46 = vector.extract_strided_slice %41 {offsets = [0, 128], sizes = [8, 128], strides = [1, 1]} : vector<8x384xf32> to vector<8x128xf32>
    %47 = vector.extract_strided_slice %41 {offsets = [0, 256], sizes = [8, 128], strides = [1, 1]} : vector<8x384xf32> to vector<8x128xf32>
    %48 = vector.extract_strided_slice %44 {offsets = [0, 0], sizes = [8, 128], strides = [1, 1]} : vector<8x384xf32> to vector<8x128xf32>
    %49 = vector.extract_strided_slice %44 {offsets = [0, 128], sizes = [8, 128], strides = [1, 1]} : vector<8x384xf32> to vector<8x128xf32>
    %50 = vector.extract_strided_slice %44 {offsets = [0, 256], sizes = [8, 128], strides = [1, 1]} : vector<8x384xf32> to vector<8x128xf32>
    %51 = arith.addf %45, %48 : vector<8x128xf32>
    %52 = arith.negf %51 : vector<8x128xf32>
    %53 = math.exp %52 : vector<8x128xf32>
    %cst_12 = arith.constant 1.000000e+00 : f32
    %54 = vector.broadcast %cst_12 : f32 to vector<8x128xf32>
    %55 = arith.addf %54, %53 : vector<8x128xf32>
    %56 = arith.divf %54, %55 : vector<8x128xf32>
    %57 = arith.addf %46, %49 : vector<8x128xf32>
    %58 = arith.negf %57 : vector<8x128xf32>
    %59 = math.exp %58 : vector<8x128xf32>
    %cst_13 = arith.constant 1.000000e+00 : f32
    %60 = vector.broadcast %cst_13 : f32 to vector<8x128xf32>
    %61 = arith.addf %60, %59 : vector<8x128xf32>
    %62 = arith.divf %60, %61 : vector<8x128xf32>
    %63 = arith.mulf %56, %50 : vector<8x128xf32>
    %64 = arith.addf %47, %63 : vector<8x128xf32>
    %65 = math.tanh %64 : vector<8x128xf32>
    %cst_14 = arith.constant 1.000000e+00 : f32
    %66 = vector.broadcast %cst_14 : f32 to vector<8x128xf32>
    %67 = arith.subf %66, %62 : vector<8x128xf32>
    %68 = arith.mulf %67, %65 : vector<8x128xf32>
    %69 = arith.mulf %62, %35 : vector<8x128xf32>
    %70 = arith.addf %68, %69 : vector<8x128xf32>
    %71 = arith.index_cast %39 : i32 to index
    %c0_15 = arith.constant 0 : index
    %72 = vector.load %arg11[%71, %c0_15] : memref<64x128xf32, #tpu.memory_space<vmem>>, vector<8x128xf32>
    tpu.vector_store %arg11[%71, %c0_15], %70 {strides = array<i32>} : memref<64x128xf32, #tpu.memory_space<vmem>>, vector<8x128xf32>,
    %c2_i32 = arith.constant 2 : i32
    %c8_i32_16 = arith.constant 8 : i32
    %73 = arith.muli %c2_i32, %c8_i32_16 : i32
    %74 = tpu.assume_multiple %73, 8 : i32
    %75 = arith.index_cast %74 : i32 to index
    %c0_17 = arith.constant 0 : index
    %76 = vector.load %arg0[%75, %c0_17] : memref<64x384xf32, #tpu.memory_space<vmem>>, vector<8x384xf32>
    %cst_18 = arith.constant dense<0.000000e+00> : vector<8x384xf32>
    %77 = tpu.matmul %70, %0, %cst_18 {dimension_numbers = #tpu.dot_dimension_numbers<[1], [0], [0], [1], [0, 0, 1, 1], [], []>} : vector<8x128xf32>, vector<128x384xf32>, vector<8x384xf32> -> vector<8x384xf32>
    %78 = vector.broadcast %1 : vector<1x384xf32> to vector<8x384xf32>
    %79 = arith.addf %77, %78 : vector<8x384xf32>
    %80 = vector.extract_strided_slice %76 {offsets = [0, 0], sizes = [8, 128], strides = [1, 1]} : vector<8x384xf32> to vector<8x128xf32>
    %81 = vector.extract_strided_slice %76 {offsets = [0, 128], sizes = [8, 128], strides = [1, 1]} : vector<8x384xf32> to vector<8x128xf32>
    %82 = vector.extract_strided_slice %76 {offsets = [0, 256], sizes = [8, 128], strides = [1, 1]} : vector<8x384xf32> to vector<8x128xf32>
    %83 = vector.extract_strided_slice %79 {offsets = [0, 0], sizes = [8, 128], strides = [1, 1]} : vector<8x384xf32> to vector<8x128xf32>
    %84 = vector.extract_strided_slice %79 {offsets = [0, 128], sizes = [8, 128], strides = [1, 1]} : vector<8x384xf32> to vector<8x128xf32>
    %85 = vector.extract_strided_slice %79 {offsets = [0, 256], sizes = [8, 128], strides = [1, 1]} : vector<8x384xf32> to vector<8x128xf32>
    %86 = arith.addf %80, %83 : vector<8x128xf32>
    %87 = arith.negf %86 : vector<8x128xf32>
    %88 = math.exp %87 : vector<8x128xf32>
    %cst_19 = arith.constant 1.000000e+00 : f32
    %89 = vector.broadcast %cst_19 : f32 to vector<8x128xf32>
    %90 = arith.addf %89, %88 : vector<8x128xf32>
    %91 = arith.divf %89, %90 : vector<8x128xf32>
    %92 = arith.addf %81, %84 : vector<8x128xf32>
    %93 = arith.negf %92 : vector<8x128xf32>
    %94 = math.exp %93 : vector<8x128xf32>
    %cst_20 = arith.constant 1.000000e+00 : f32
    %95 = vector.broadcast %cst_20 : f32 to vector<8x128xf32>
    %96 = arith.addf %95, %94 : vector<8x128xf32>
    %97 = arith.divf %95, %96 : vector<8x128xf32>
    %98 = arith.mulf %91, %85 : vector<8x128xf32>
    %99 = arith.addf %82, %98 : vector<8x128xf32>
    %100 = math.tanh %99 : vector<8x128xf32>
    %cst_21 = arith.constant 1.000000e+00 : f32
    %101 = vector.broadcast %cst_21 : f32 to vector<8x128xf32>
    %102 = arith.subf %101, %97 : vector<8x128xf32>
    %103 = arith.mulf %102, %100 : vector<8x128xf32>
    %104 = arith.mulf %97, %70 : vector<8x128xf32>
    %105 = arith.addf %103, %104 : vector<8x128xf32>
    %106 = arith.index_cast %74 : i32 to index
    %c0_22 = arith.constant 0 : index
    %107 = vector.load %arg11[%106, %c0_22] : memref<64x128xf32, #tpu.memory_space<vmem>>, vector<8x128xf32>
    tpu.vector_store %arg11[%106, %c0_22], %105 {strides = array<i32>} : memref<64x128xf32, #tpu.memory_space<vmem>>, vector<8x128xf32>,
    %c3_i32 = arith.constant 3 : i32
    %c8_i32_23 = arith.constant 8 : i32
    %108 = arith.muli %c3_i32, %c8_i32_23 : i32
    %109 = tpu.assume_multiple %108, 8 : i32
    %110 = arith.index_cast %109 : i32 to index
    %c0_24 = arith.constant 0 : index
    %111 = vector.load %arg0[%110, %c0_24] : memref<64x384xf32, #tpu.memory_space<vmem>>, vector<8x384xf32>
    %cst_25 = arith.constant dense<0.000000e+00> : vector<8x384xf32>
    %112 = tpu.matmul %105, %0, %cst_25 {dimension_numbers = #tpu.dot_dimension_numbers<[1], [0], [0], [1], [0, 0, 1, 1], [], []>} : vector<8x128xf32>, vector<128x384xf32>, vector<8x384xf32> -> vector<8x384xf32>
    %113 = vector.broadcast %1 : vector<1x384xf32> to vector<8x384xf32>
    %114 = arith.addf %112, %113 : vector<8x384xf32>
    %115 = vector.extract_strided_slice %111 {offsets = [0, 0], sizes = [8, 128], strides = [1, 1]} : vector<8x384xf32> to vector<8x128xf32>
    %116 = vector.extract_strided_slice %111 {offsets = [0, 128], sizes = [8, 128], strides = [1, 1]} : vector<8x384xf32> to vector<8x128xf32>
    %117 = vector.extract_strided_slice %111 {offsets = [0, 256], sizes = [8, 128], strides = [1, 1]} : vector<8x384xf32> to vector<8x128xf32>
    %118 = vector.extract_strided_slice %114 {offsets = [0, 0], sizes = [8, 128], strides = [1, 1]} : vector<8x384xf32> to vector<8x128xf32>
    %119 = vector.extract_strided_slice %114 {offsets = [0, 128], sizes = [8, 128], strides = [1, 1]} : vector<8x384xf32> to vector<8x128xf32>
    %120 = vector.extract_strided_slice %114 {offsets = [0, 256], sizes = [8, 128], strides = [1, 1]} : vector<8x384xf32> to vector<8x128xf32>
    %121 = arith.addf %115, %118 : vector<8x128xf32>
    %122 = arith.negf %121 : vector<8x128xf32>
    %123 = math.exp %122 : vector<8x128xf32>
    %cst_26 = arith.constant 1.000000e+00 : f32
    %124 = vector.broadcast %cst_26 : f32 to vector<8x128xf32>
    %125 = arith.addf %124, %123 : vector<8x128xf32>
    %126 = arith.divf %124, %125 : vector<8x128xf32>
    %127 = arith.addf %116, %119 : vector<8x128xf32>
    %128 = arith.negf %127 : vector<8x128xf32>
    %129 = math.exp %128 : vector<8x128xf32>
    %cst_27 = arith.constant 1.000000e+00 : f32
    %130 = vector.broadcast %cst_27 : f32 to vector<8x128xf32>
    %131 = arith.addf %130, %129 : vector<8x128xf32>
    %132 = arith.divf %130, %131 : vector<8x128xf32>
    %133 = arith.mulf %126, %120 : vector<8x128xf32>
    %134 = arith.addf %117, %133 : vector<8x128xf32>
    %135 = math.tanh %134 : vector<8x128xf32>
    %cst_28 = arith.constant 1.000000e+00 : f32
    %136 = vector.broadcast %cst_28 : f32 to vector<8x128xf32>
    %137 = arith.subf %136, %132 : vector<8x128xf32>
    %138 = arith.mulf %137, %135 : vector<8x128xf32>
    %139 = arith.mulf %132, %105 : vector<8x128xf32>
    %140 = arith.addf %138, %139 : vector<8x128xf32>
    %141 = arith.index_cast %109 : i32 to index
    %c0_29 = arith.constant 0 : index
    %142 = vector.load %arg11[%141, %c0_29] : memref<64x128xf32, #tpu.memory_space<vmem>>, vector<8x128xf32>
    tpu.vector_store %arg11[%141, %c0_29], %140 {strides = array<i32>} : memref<64x128xf32, #tpu.memory_space<vmem>>, vector<8x128xf32>,
    %c4_i32 = arith.constant 4 : i32
    %c8_i32_30 = arith.constant 8 : i32
    %143 = arith.muli %c4_i32, %c8_i32_30 : i32
    %144 = tpu.assume_multiple %143, 8 : i32
    %145 = arith.index_cast %144 : i32 to index
    %c0_31 = arith.constant 0 : index
    %146 = vector.load %arg0[%145, %c0_31] : memref<64x384xf32, #tpu.memory_space<vmem>>, vector<8x384xf32>
    %cst_32 = arith.constant dense<0.000000e+00> : vector<8x384xf32>
    %147 = tpu.matmul %140, %0, %cst_32 {dimension_numbers = #tpu.dot_dimension_numbers<[1], [0], [0], [1], [0, 0, 1, 1], [], []>} : vector<8x128xf32>, vector<128x384xf32>, vector<8x384xf32> -> vector<8x384xf32>
    %148 = vector.broadcast %1 : vector<1x384xf32> to vector<8x384xf32>
    %149 = arith.addf %147, %148 : vector<8x384xf32>
    %150 = vector.extract_strided_slice %146 {offsets = [0, 0], sizes = [8, 128], strides = [1, 1]} : vector<8x384xf32> to vector<8x128xf32>
    %151 = vector.extract_strided_slice %146 {offsets = [0, 128], sizes = [8, 128], strides = [1, 1]} : vector<8x384xf32> to vector<8x128xf32>
    %152 = vector.extract_strided_slice %146 {offsets = [0, 256], sizes = [8, 128], strides = [1, 1]} : vector<8x384xf32> to vector<8x128xf32>
    %153 = vector.extract_strided_slice %149 {offsets = [0, 0], sizes = [8, 128], strides = [1, 1]} : vector<8x384xf32> to vector<8x128xf32>
    %154 = vector.extract_strided_slice %149 {offsets = [0, 128], sizes = [8, 128], strides = [1, 1]} : vector<8x384xf32> to vector<8x128xf32>
    %155 = vector.extract_strided_slice %149 {offsets = [0, 256], sizes = [8, 128], strides = [1, 1]} : vector<8x384xf32> to vector<8x128xf32>
    %156 = arith.addf %150, %153 : vector<8x128xf32>
    %157 = arith.negf %156 : vector<8x128xf32>
    %158 = math.exp %157 : vector<8x128xf32>
    %cst_33 = arith.constant 1.000000e+00 : f32
    %159 = vector.broadcast %cst_33 : f32 to vector<8x128xf32>
    %160 = arith.addf %159, %158 : vector<8x128xf32>
    %161 = arith.divf %159, %160 : vector<8x128xf32>
    %162 = arith.addf %151, %154 : vector<8x128xf32>
    %163 = arith.negf %162 : vector<8x128xf32>
    %164 = math.exp %163 : vector<8x128xf32>
    %cst_34 = arith.constant 1.000000e+00 : f32
    %165 = vector.broadcast %cst_34 : f32 to vector<8x128xf32>
    %166 = arith.addf %165, %164 : vector<8x128xf32>
    %167 = arith.divf %165, %166 : vector<8x128xf32>
    %168 = arith.mulf %161, %155 : vector<8x128xf32>
    %169 = arith.addf %152, %168 : vector<8x128xf32>
    %170 = math.tanh %169 : vector<8x128xf32>
    %cst_35 = arith.constant 1.000000e+00 : f32
    %171 = vector.broadcast %cst_35 : f32 to vector<8x128xf32>
    %172 = arith.subf %171, %167 : vector<8x128xf32>
    %173 = arith.mulf %172, %170 : vector<8x128xf32>
    %174 = arith.mulf %167, %140 : vector<8x128xf32>
    %175 = arith.addf %173, %174 : vector<8x128xf32>
    %176 = arith.index_cast %144 : i32 to index
    %c0_36 = arith.constant 0 : index
    %177 = vector.load %arg11[%176, %c0_36] : memref<64x128xf32, #tpu.memory_space<vmem>>, vector<8x128xf32>
    tpu.vector_store %arg11[%176, %c0_36], %175 {strides = array<i32>} : memref<64x128xf32, #tpu.memory_space<vmem>>, vector<8x128xf32>,
    %c5_i32 = arith.constant 5 : i32
    %c8_i32_37 = arith.constant 8 : i32
    %178 = arith.muli %c5_i32, %c8_i32_37 : i32
    %179 = tpu.assume_multiple %178, 8 : i32
    %180 = arith.index_cast %179 : i32 to index
    %c0_38 = arith.constant 0 : index
    %181 = vector.load %arg0[%180, %c0_38] : memref<64x384xf32, #tpu.memory_space<vmem>>, vector<8x384xf32>
    %cst_39 = arith.constant dense<0.000000e+00> : vector<8x384xf32>
    %182 = tpu.matmul %175, %0, %cst_39 {dimension_numbers = #tpu.dot_dimension_numbers<[1], [0], [0], [1], [0, 0, 1, 1], [], []>} : vector<8x128xf32>, vector<128x384xf32>, vector<8x384xf32> -> vector<8x384xf32>
    %183 = vector.broadcast %1 : vector<1x384xf32> to vector<8x384xf32>
    %184 = arith.addf %182, %183 : vector<8x384xf32>
    %185 = vector.extract_strided_slice %181 {offsets = [0, 0], sizes = [8, 128], strides = [1, 1]} : vector<8x384xf32> to vector<8x128xf32>
    %186 = vector.extract_strided_slice %181 {offsets = [0, 128], sizes = [8, 128], strides = [1, 1]} : vector<8x384xf32> to vector<8x128xf32>
    %187 = vector.extract_strided_slice %181 {offsets = [0, 256], sizes = [8, 128], strides = [1, 1]} : vector<8x384xf32> to vector<8x128xf32>
    %188 = vector.extract_strided_slice %184 {offsets = [0, 0], sizes = [8, 128], strides = [1, 1]} : vector<8x384xf32> to vector<8x128xf32>
    %189 = vector.extract_strided_slice %184 {offsets = [0, 128], sizes = [8, 128], strides = [1, 1]} : vector<8x384xf32> to vector<8x128xf32>
    %190 = vector.extract_strided_slice %184 {offsets = [0, 256], sizes = [8, 128], strides = [1, 1]} : vector<8x384xf32> to vector<8x128xf32>
    %191 = arith.addf %185, %188 : vector<8x128xf32>
    %192 = arith.negf %191 : vector<8x128xf32>
    %193 = math.exp %192 : vector<8x128xf32>
    %cst_40 = arith.constant 1.000000e+00 : f32
    %194 = vector.broadcast %cst_40 : f32 to vector<8x128xf32>
    %195 = arith.addf %194, %193 : vector<8x128xf32>
    %196 = arith.divf %194, %195 : vector<8x128xf32>
    %197 = arith.addf %186, %189 : vector<8x128xf32>
    %198 = arith.negf %197 : vector<8x128xf32>
    %199 = math.exp %198 : vector<8x128xf32>
    %cst_41 = arith.constant 1.000000e+00 : f32
    %200 = vector.broadcast %cst_41 : f32 to vector<8x128xf32>
    %201 = arith.addf %200, %199 : vector<8x128xf32>
    %202 = arith.divf %200, %201 : vector<8x128xf32>
    %203 = arith.mulf %196, %190 : vector<8x128xf32>
    %204 = arith.addf %187, %203 : vector<8x128xf32>
    %205 = math.tanh %204 : vector<8x128xf32>
    %cst_42 = arith.constant 1.000000e+00 : f32
    %206 = vector.broadcast %cst_42 : f32 to vector<8x128xf32>
    %207 = arith.subf %206, %202 : vector<8x128xf32>
    %208 = arith.mulf %207, %205 : vector<8x128xf32>
    %209 = arith.mulf %202, %175 : vector<8x128xf32>
    %210 = arith.addf %208, %209 : vector<8x128xf32>
    %211 = arith.index_cast %179 : i32 to index
    %c0_43 = arith.constant 0 : index
    %212 = vector.load %arg11[%211, %c0_43] : memref<64x128xf32, #tpu.memory_space<vmem>>, vector<8x128xf32>
    tpu.vector_store %arg11[%211, %c0_43], %210 {strides = array<i32>} : memref<64x128xf32, #tpu.memory_space<vmem>>, vector<8x128xf32>,
    %c6_i32 = arith.constant 6 : i32
    %c8_i32_44 = arith.constant 8 : i32
    %213 = arith.muli %c6_i32, %c8_i32_44 : i32
    %214 = tpu.assume_multiple %213, 8 : i32
    %215 = arith.index_cast %214 : i32 to index
    %c0_45 = arith.constant 0 : index
    %216 = vector.load %arg0[%215, %c0_45] : memref<64x384xf32, #tpu.memory_space<vmem>>, vector<8x384xf32>
    %cst_46 = arith.constant dense<0.000000e+00> : vector<8x384xf32>
    %217 = tpu.matmul %210, %0, %cst_46 {dimension_numbers = #tpu.dot_dimension_numbers<[1], [0], [0], [1], [0, 0, 1, 1], [], []>} : vector<8x128xf32>, vector<128x384xf32>, vector<8x384xf32> -> vector<8x384xf32>
    %218 = vector.broadcast %1 : vector<1x384xf32> to vector<8x384xf32>
    %219 = arith.addf %217, %218 : vector<8x384xf32>
    %220 = vector.extract_strided_slice %216 {offsets = [0, 0], sizes = [8, 128], strides = [1, 1]} : vector<8x384xf32> to vector<8x128xf32>
    %221 = vector.extract_strided_slice %216 {offsets = [0, 128], sizes = [8, 128], strides = [1, 1]} : vector<8x384xf32> to vector<8x128xf32>
    %222 = vector.extract_strided_slice %216 {offsets = [0, 256], sizes = [8, 128], strides = [1, 1]} : vector<8x384xf32> to vector<8x128xf32>
    %223 = vector.extract_strided_slice %219 {offsets = [0, 0], sizes = [8, 128], strides = [1, 1]} : vector<8x384xf32> to vector<8x128xf32>
    %224 = vector.extract_strided_slice %219 {offsets = [0, 128], sizes = [8, 128], strides = [1, 1]} : vector<8x384xf32> to vector<8x128xf32>
    %225 = vector.extract_strided_slice %219 {offsets = [0, 256], sizes = [8, 128], strides = [1, 1]} : vector<8x384xf32> to vector<8x128xf32>
    %226 = arith.addf %220, %223 : vector<8x128xf32>
    %227 = arith.negf %226 : vector<8x128xf32>
    %228 = math.exp %227 : vector<8x128xf32>
    %cst_47 = arith.constant 1.000000e+00 : f32
    %229 = vector.broadcast %cst_47 : f32 to vector<8x128xf32>
    %230 = arith.addf %229, %228 : vector<8x128xf32>
    %231 = arith.divf %229, %230 : vector<8x128xf32>
    %232 = arith.addf %221, %224 : vector<8x128xf32>
    %233 = arith.negf %232 : vector<8x128xf32>
    %234 = math.exp %233 : vector<8x128xf32>
    %cst_48 = arith.constant 1.000000e+00 : f32
    %235 = vector.broadcast %cst_48 : f32 to vector<8x128xf32>
    %236 = arith.addf %235, %234 : vector<8x128xf32>
    %237 = arith.divf %235, %236 : vector<8x128xf32>
    %238 = arith.mulf %231, %225 : vector<8x128xf32>
    %239 = arith.addf %222, %238 : vector<8x128xf32>
    %240 = math.tanh %239 : vector<8x128xf32>
    %cst_49 = arith.constant 1.000000e+00 : f32
    %241 = vector.broadcast %cst_49 : f32 to vector<8x128xf32>
    %242 = arith.subf %241, %237 : vector<8x128xf32>
    %243 = arith.mulf %242, %240 : vector<8x128xf32>
    %244 = arith.mulf %237, %210 : vector<8x128xf32>
    %245 = arith.addf %243, %244 : vector<8x128xf32>
    %246 = arith.index_cast %214 : i32 to index
    %c0_50 = arith.constant 0 : index
    %247 = vector.load %arg11[%246, %c0_50] : memref<64x128xf32, #tpu.memory_space<vmem>>, vector<8x128xf32>
    tpu.vector_store %arg11[%246, %c0_50], %245 {strides = array<i32>} : memref<64x128xf32, #tpu.memory_space<vmem>>, vector<8x128xf32>,
    %c7_i32 = arith.constant 7 : i32
    %c8_i32_51 = arith.constant 8 : i32
    %248 = arith.muli %c7_i32, %c8_i32_51 : i32
    %249 = tpu.assume_multiple %248, 8 : i32
    %250 = arith.index_cast %249 : i32 to index
    %c0_52 = arith.constant 0 : index
    %251 = vector.load %arg0[%250, %c0_52] : memref<64x384xf32, #tpu.memory_space<vmem>>, vector<8x384xf32>
    %cst_53 = arith.constant dense<0.000000e+00> : vector<8x384xf32>
    %252 = tpu.matmul %245, %0, %cst_53 {dimension_numbers = #tpu.dot_dimension_numbers<[1], [0], [0], [1], [0, 0, 1, 1], [], []>} : vector<8x128xf32>, vector<128x384xf32>, vector<8x384xf32> -> vector<8x384xf32>
    %253 = vector.broadcast %1 : vector<1x384xf32> to vector<8x384xf32>
    %254 = arith.addf %252, %253 : vector<8x384xf32>
    %255 = vector.extract_strided_slice %251 {offsets = [0, 0], sizes = [8, 128], strides = [1, 1]} : vector<8x384xf32> to vector<8x128xf32>
    %256 = vector.extract_strided_slice %251 {offsets = [0, 128], sizes = [8, 128], strides = [1, 1]} : vector<8x384xf32> to vector<8x128xf32>
    %257 = vector.extract_strided_slice %251 {offsets = [0, 256], sizes = [8, 128], strides = [1, 1]} : vector<8x384xf32> to vector<8x128xf32>
    %258 = vector.extract_strided_slice %254 {offsets = [0, 0], sizes = [8, 128], strides = [1, 1]} : vector<8x384xf32> to vector<8x128xf32>
    %259 = vector.extract_strided_slice %254 {offsets = [0, 128], sizes = [8, 128], strides = [1, 1]} : vector<8x384xf32> to vector<8x128xf32>
    %260 = vector.extract_strided_slice %254 {offsets = [0, 256], sizes = [8, 128], strides = [1, 1]} : vector<8x384xf32> to vector<8x128xf32>
    %261 = arith.addf %255, %258 : vector<8x128xf32>
    %262 = arith.negf %261 : vector<8x128xf32>
    %263 = math.exp %262 : vector<8x128xf32>
    %cst_54 = arith.constant 1.000000e+00 : f32
    %264 = vector.broadcast %cst_54 : f32 to vector<8x128xf32>
    %265 = arith.addf %264, %263 : vector<8x128xf32>
    %266 = arith.divf %264, %265 : vector<8x128xf32>
    %267 = arith.addf %256, %259 : vector<8x128xf32>
    %268 = arith.negf %267 : vector<8x128xf32>
    %269 = math.exp %268 : vector<8x128xf32>
    %cst_55 = arith.constant 1.000000e+00 : f32
    %270 = vector.broadcast %cst_55 : f32 to vector<8x128xf32>
    %271 = arith.addf %270, %269 : vector<8x128xf32>
    %272 = arith.divf %270, %271 : vector<8x128xf32>
    %273 = arith.mulf %266, %260 : vector<8x128xf32>
    %274 = arith.addf %257, %273 : vector<8x128xf32>
    %275 = math.tanh %274 : vector<8x128xf32>
    %cst_56 = arith.constant 1.000000e+00 : f32
    %276 = vector.broadcast %cst_56 : f32 to vector<8x128xf32>
    %277 = arith.subf %276, %272 : vector<8x128xf32>
    %278 = arith.mulf %277, %275 : vector<8x128xf32>
    %279 = arith.mulf %272, %245 : vector<8x128xf32>
    %280 = arith.addf %278, %279 : vector<8x128xf32>
    %281 = arith.index_cast %249 : i32 to index
    %c0_57 = arith.constant 0 : index
    %282 = vector.load %arg11[%281, %c0_57] : memref<64x128xf32, #tpu.memory_space<vmem>>, vector<8x128xf32>
    tpu.vector_store %arg11[%281, %c0_57], %280 {strides = array<i32>} : memref<64x128xf32, #tpu.memory_space<vmem>>, vector<8x128xf32>,
    %c8_i32_58 = arith.constant 8 : i32
    %c0_59 = arith.constant 0 : index
    %c0_60 = arith.constant 0 : index
    %283 = vector.load %arg11[%c0_59, %c0_60] : memref<64x128xf32, #tpu.memory_space<vmem>>, vector<64x128xf32>
    %c0_61 = arith.constant 0 : index
    %c0_62 = arith.constant 0 : index
    %284 = vector.load %arg3[%c0_61, %c0_62] : memref<128x384xf32, #tpu.memory_space<vmem>>, vector<128x384xf32>
    %cst_63 = arith.constant dense<0.000000e+00> : vector<64x384xf32>
    %285 = tpu.matmul %283, %284, %cst_63 {dimension_numbers = #tpu.dot_dimension_numbers<[1], [0], [0], [1], [0, 0, 1, 1], [], []>} : vector<64x128xf32>, vector<128x384xf32>, vector<64x384xf32> -> vector<64x384xf32>
    %c0_64 = arith.constant 0 : index
    %c0_65 = arith.constant 0 : index
    %286 = vector.load %arg5[%c0_64, %c0_65] : memref<1x384xf32, #tpu.memory_space<vmem>>, vector<1x384xf32>
    %287 = vector.broadcast %286 : vector<1x384xf32> to vector<64x384xf32>
    %288 = arith.addf %285, %287 : vector<64x384xf32>
    %c0_66 = arith.constant 0 : index
    %c0_67 = arith.constant 0 : index
    %289 = vector.load %arg10[%c0_66, %c0_67] : memref<64x384xf32, #tpu.memory_space<vmem>>, vector<64x384xf32>
    tpu.vector_store %arg10[%c0_66, %c0_67], %288 {strides = array<i32>} : memref<64x384xf32, #tpu.memory_space<vmem>>, vector<64x384xf32>,
    %c0_68 = arith.constant 0 : index
    %c0_69 = arith.constant 0 : index
    %290 = vector.load %arg4[%c0_68, %c0_69] : memref<128x384xf32, #tpu.memory_space<vmem>>, vector<128x384xf32>
    %c0_70 = arith.constant 0 : index
    %c0_71 = arith.constant 0 : index
    %291 = vector.load %arg6[%c0_70, %c0_71] : memref<1x384xf32, #tpu.memory_space<vmem>>, vector<1x384xf32>
    %c0_i32_72 = arith.constant 0 : i32
    %c8_i32_73 = arith.constant 8 : i32
    %292 = arith.muli %c0_i32_72, %c8_i32_73 : i32
    %293 = tpu.assume_multiple %292, 8 : i32
    %294 = arith.index_cast %293 : i32 to index
    %c0_74 = arith.constant 0 : index
    %295 = vector.load %arg10[%294, %c0_74] : memref<64x384xf32, #tpu.memory_space<vmem>>, vector<8x384xf32>
    %cst_75 = arith.constant dense<0.000000e+00> : vector<8x384xf32>
    %296 = tpu.matmul %2, %290, %cst_75 {dimension_numbers = #tpu.dot_dimension_numbers<[1], [0], [0], [1], [0, 0, 1, 1], [], []>} : vector<8x128xf32>, vector<128x384xf32>, vector<8x384xf32> -> vector<8x384xf32>
    %297 = vector.broadcast %291 : vector<1x384xf32> to vector<8x384xf32>
    %298 = arith.addf %296, %297 : vector<8x384xf32>
    %299 = vector.extract_strided_slice %295 {offsets = [0, 0], sizes = [8, 128], strides = [1, 1]} : vector<8x384xf32> to vector<8x128xf32>
    %300 = vector.extract_strided_slice %295 {offsets = [0, 128], sizes = [8, 128], strides = [1, 1]} : vector<8x384xf32> to vector<8x128xf32>
    %301 = vector.extract_strided_slice %295 {offsets = [0, 256], sizes = [8, 128], strides = [1, 1]} : vector<8x384xf32> to vector<8x128xf32>
    %302 = vector.extract_strided_slice %298 {offsets = [0, 0], sizes = [8, 128], strides = [1, 1]} : vector<8x384xf32> to vector<8x128xf32>
    %303 = vector.extract_strided_slice %298 {offsets = [0, 128], sizes = [8, 128], strides = [1, 1]} : vector<8x384xf32> to vector<8x128xf32>
    %304 = vector.extract_strided_slice %298 {offsets = [0, 256], sizes = [8, 128], strides = [1, 1]} : vector<8x384xf32> to vector<8x128xf32>
    %305 = arith.addf %299, %302 : vector<8x128xf32>
    %306 = arith.negf %305 : vector<8x128xf32>
    %307 = math.exp %306 : vector<8x128xf32>
    %cst_76 = arith.constant 1.000000e+00 : f32
    %308 = vector.broadcast %cst_76 : f32 to vector<8x128xf32>
    %309 = arith.addf %308, %307 : vector<8x128xf32>
    %310 = arith.divf %308, %309 : vector<8x128xf32>
    %311 = arith.addf %300, %303 : vector<8x128xf32>
    %312 = arith.negf %311 : vector<8x128xf32>
    %313 = math.exp %312 : vector<8x128xf32>
    %cst_77 = arith.constant 1.000000e+00 : f32
    %314 = vector.broadcast %cst_77 : f32 to vector<8x128xf32>
    %315 = arith.addf %314, %313 : vector<8x128xf32>
    %316 = arith.divf %314, %315 : vector<8x128xf32>
    %317 = arith.mulf %310, %304 : vector<8x128xf32>
    %318 = arith.addf %301, %317 : vector<8x128xf32>
    %319 = math.tanh %318 : vector<8x128xf32>
    %cst_78 = arith.constant 1.000000e+00 : f32
    %320 = vector.broadcast %cst_78 : f32 to vector<8x128xf32>
    %321 = arith.subf %320, %316 : vector<8x128xf32>
    %322 = arith.mulf %321, %319 : vector<8x128xf32>
    %323 = arith.mulf %316, %2 : vector<8x128xf32>
    %324 = arith.addf %322, %323 : vector<8x128xf32>
    %c1_i32_79 = arith.constant 1 : i32
    %c8_i32_80 = arith.constant 8 : i32
    %325 = arith.muli %c1_i32_79, %c8_i32_80 : i32
    %326 = tpu.assume_multiple %325, 8 : i32
    %327 = arith.index_cast %326 : i32 to index
    %c0_81 = arith.constant 0 : index
    %328 = vector.load %arg10[%327, %c0_81] : memref<64x384xf32, #tpu.memory_space<vmem>>, vector<8x384xf32>
    %cst_82 = arith.constant dense<0.000000e+00> : vector<8x384xf32>
    %329 = tpu.matmul %324, %290, %cst_82 {dimension_numbers = #tpu.dot_dimension_numbers<[1], [0], [0], [1], [0, 0, 1, 1], [], []>} : vector<8x128xf32>, vector<128x384xf32>, vector<8x384xf32> -> vector<8x384xf32>
    %330 = vector.broadcast %291 : vector<1x384xf32> to vector<8x384xf32>
    %331 = arith.addf %329, %330 : vector<8x384xf32>
    %332 = vector.extract_strided_slice %328 {offsets = [0, 0], sizes = [8, 128], strides = [1, 1]} : vector<8x384xf32> to vector<8x128xf32>
    %333 = vector.extract_strided_slice %328 {offsets = [0, 128], sizes = [8, 128], strides = [1, 1]} : vector<8x384xf32> to vector<8x128xf32>
    %334 = vector.extract_strided_slice %328 {offsets = [0, 256], sizes = [8, 128], strides = [1, 1]} : vector<8x384xf32> to vector<8x128xf32>
    %335 = vector.extract_strided_slice %331 {offsets = [0, 0], sizes = [8, 128], strides = [1, 1]} : vector<8x384xf32> to vector<8x128xf32>
    %336 = vector.extract_strided_slice %331 {offsets = [0, 128], sizes = [8, 128], strides = [1, 1]} : vector<8x384xf32> to vector<8x128xf32>
    %337 = vector.extract_strided_slice %331 {offsets = [0, 256], sizes = [8, 128], strides = [1, 1]} : vector<8x384xf32> to vector<8x128xf32>
    %338 = arith.addf %332, %335 : vector<8x128xf32>
    %339 = arith.negf %338 : vector<8x128xf32>
    %340 = math.exp %339 : vector<8x128xf32>
    %cst_83 = arith.constant 1.000000e+00 : f32
    %341 = vector.broadcast %cst_83 : f32 to vector<8x128xf32>
    %342 = arith.addf %341, %340 : vector<8x128xf32>
    %343 = arith.divf %341, %342 : vector<8x128xf32>
    %344 = arith.addf %333, %336 : vector<8x128xf32>
    %345 = arith.negf %344 : vector<8x128xf32>
    %346 = math.exp %345 : vector<8x128xf32>
    %cst_84 = arith.constant 1.000000e+00 : f32
    %347 = vector.broadcast %cst_84 : f32 to vector<8x128xf32>
    %348 = arith.addf %347, %346 : vector<8x128xf32>
    %349 = arith.divf %347, %348 : vector<8x128xf32>
    %350 = arith.mulf %343, %337 : vector<8x128xf32>
    %351 = arith.addf %334, %350 : vector<8x128xf32>
    %352 = math.tanh %351 : vector<8x128xf32>
    %cst_85 = arith.constant 1.000000e+00 : f32
    %353 = vector.broadcast %cst_85 : f32 to vector<8x128xf32>
    %354 = arith.subf %353, %349 : vector<8x128xf32>
    %355 = arith.mulf %354, %352 : vector<8x128xf32>
    %356 = arith.mulf %349, %324 : vector<8x128xf32>
    %357 = arith.addf %355, %356 : vector<8x128xf32>
    %c2_i32_86 = arith.constant 2 : i32
    %c8_i32_87 = arith.constant 8 : i32
    %358 = arith.muli %c2_i32_86, %c8_i32_87 : i32
    %359 = tpu.assume_multiple %358, 8 : i32
    %360 = arith.index_cast %359 : i32 to index
    %c0_88 = arith.constant 0 : index
    %361 = vector.load %arg10[%360, %c0_88] : memref<64x384xf32, #tpu.memory_space<vmem>>, vector<8x384xf32>
    %cst_89 = arith.constant dense<0.000000e+00> : vector<8x384xf32>
    %362 = tpu.matmul %357, %290, %cst_89 {dimension_numbers = #tpu.dot_dimension_numbers<[1], [0], [0], [1], [0, 0, 1, 1], [], []>} : vector<8x128xf32>, vector<128x384xf32>, vector<8x384xf32> -> vector<8x384xf32>
    %363 = vector.broadcast %291 : vector<1x384xf32> to vector<8x384xf32>
    %364 = arith.addf %362, %363 : vector<8x384xf32>
    %365 = vector.extract_strided_slice %361 {offsets = [0, 0], sizes = [8, 128], strides = [1, 1]} : vector<8x384xf32> to vector<8x128xf32>
    %366 = vector.extract_strided_slice %361 {offsets = [0, 128], sizes = [8, 128], strides = [1, 1]} : vector<8x384xf32> to vector<8x128xf32>
    %367 = vector.extract_strided_slice %361 {offsets = [0, 256], sizes = [8, 128], strides = [1, 1]} : vector<8x384xf32> to vector<8x128xf32>
    %368 = vector.extract_strided_slice %364 {offsets = [0, 0], sizes = [8, 128], strides = [1, 1]} : vector<8x384xf32> to vector<8x128xf32>
    %369 = vector.extract_strided_slice %364 {offsets = [0, 128], sizes = [8, 128], strides = [1, 1]} : vector<8x384xf32> to vector<8x128xf32>
    %370 = vector.extract_strided_slice %364 {offsets = [0, 256], sizes = [8, 128], strides = [1, 1]} : vector<8x384xf32> to vector<8x128xf32>
    %371 = arith.addf %365, %368 : vector<8x128xf32>
    %372 = arith.negf %371 : vector<8x128xf32>
    %373 = math.exp %372 : vector<8x128xf32>
    %cst_90 = arith.constant 1.000000e+00 : f32
    %374 = vector.broadcast %cst_90 : f32 to vector<8x128xf32>
    %375 = arith.addf %374, %373 : vector<8x128xf32>
    %376 = arith.divf %374, %375 : vector<8x128xf32>
    %377 = arith.addf %366, %369 : vector<8x128xf32>
    %378 = arith.negf %377 : vector<8x128xf32>
    %379 = math.exp %378 : vector<8x128xf32>
    %cst_91 = arith.constant 1.000000e+00 : f32
    %380 = vector.broadcast %cst_91 : f32 to vector<8x128xf32>
    %381 = arith.addf %380, %379 : vector<8x128xf32>
    %382 = arith.divf %380, %381 : vector<8x128xf32>
    %383 = arith.mulf %376, %370 : vector<8x128xf32>
    %384 = arith.addf %367, %383 : vector<8x128xf32>
    %385 = math.tanh %384 : vector<8x128xf32>
    %cst_92 = arith.constant 1.000000e+00 : f32
    %386 = vector.broadcast %cst_92 : f32 to vector<8x128xf32>
    %387 = arith.subf %386, %382 : vector<8x128xf32>
    %388 = arith.mulf %387, %385 : vector<8x128xf32>
    %389 = arith.mulf %382, %357 : vector<8x128xf32>
    %390 = arith.addf %388, %389 : vector<8x128xf32>
    %c3_i32_93 = arith.constant 3 : i32
    %c8_i32_94 = arith.constant 8 : i32
    %391 = arith.muli %c3_i32_93, %c8_i32_94 : i32
    %392 = tpu.assume_multiple %391, 8 : i32
    %393 = arith.index_cast %392 : i32 to index
    %c0_95 = arith.constant 0 : index
    %394 = vector.load %arg10[%393, %c0_95] : memref<64x384xf32, #tpu.memory_space<vmem>>, vector<8x384xf32>
    %cst_96 = arith.constant dense<0.000000e+00> : vector<8x384xf32>
    %395 = tpu.matmul %390, %290, %cst_96 {dimension_numbers = #tpu.dot_dimension_numbers<[1], [0], [0], [1], [0, 0, 1, 1], [], []>} : vector<8x128xf32>, vector<128x384xf32>, vector<8x384xf32> -> vector<8x384xf32>
    %396 = vector.broadcast %291 : vector<1x384xf32> to vector<8x384xf32>
    %397 = arith.addf %395, %396 : vector<8x384xf32>
    %398 = vector.extract_strided_slice %394 {offsets = [0, 0], sizes = [8, 128], strides = [1, 1]} : vector<8x384xf32> to vector<8x128xf32>
    %399 = vector.extract_strided_slice %394 {offsets = [0, 128], sizes = [8, 128], strides = [1, 1]} : vector<8x384xf32> to vector<8x128xf32>
    %400 = vector.extract_strided_slice %394 {offsets = [0, 256], sizes = [8, 128], strides = [1, 1]} : vector<8x384xf32> to vector<8x128xf32>
    %401 = vector.extract_strided_slice %397 {offsets = [0, 0], sizes = [8, 128], strides = [1, 1]} : vector<8x384xf32> to vector<8x128xf32>
    %402 = vector.extract_strided_slice %397 {offsets = [0, 128], sizes = [8, 128], strides = [1, 1]} : vector<8x384xf32> to vector<8x128xf32>
    %403 = vector.extract_strided_slice %397 {offsets = [0, 256], sizes = [8, 128], strides = [1, 1]} : vector<8x384xf32> to vector<8x128xf32>
    %404 = arith.addf %398, %401 : vector<8x128xf32>
    %405 = arith.negf %404 : vector<8x128xf32>
    %406 = math.exp %405 : vector<8x128xf32>
    %cst_97 = arith.constant 1.000000e+00 : f32
    %407 = vector.broadcast %cst_97 : f32 to vector<8x128xf32>
    %408 = arith.addf %407, %406 : vector<8x128xf32>
    %409 = arith.divf %407, %408 : vector<8x128xf32>
    %410 = arith.addf %399, %402 : vector<8x128xf32>
    %411 = arith.negf %410 : vector<8x128xf32>
    %412 = math.exp %411 : vector<8x128xf32>
    %cst_98 = arith.constant 1.000000e+00 : f32
    %413 = vector.broadcast %cst_98 : f32 to vector<8x128xf32>
    %414 = arith.addf %413, %412 : vector<8x128xf32>
    %415 = arith.divf %413, %414 : vector<8x128xf32>
    %416 = arith.mulf %409, %403 : vector<8x128xf32>
    %417 = arith.addf %400, %416 : vector<8x128xf32>
    %418 = math.tanh %417 : vector<8x128xf32>
    %cst_99 = arith.constant 1.000000e+00 : f32
    %419 = vector.broadcast %cst_99 : f32 to vector<8x128xf32>
    %420 = arith.subf %419, %415 : vector<8x128xf32>
    %421 = arith.mulf %420, %418 : vector<8x128xf32>
    %422 = arith.mulf %415, %390 : vector<8x128xf32>
    %423 = arith.addf %421, %422 : vector<8x128xf32>
    %c4_i32_100 = arith.constant 4 : i32
    %c8_i32_101 = arith.constant 8 : i32
    %424 = arith.muli %c4_i32_100, %c8_i32_101 : i32
    %425 = tpu.assume_multiple %424, 8 : i32
    %426 = arith.index_cast %425 : i32 to index
    %c0_102 = arith.constant 0 : index
    %427 = vector.load %arg10[%426, %c0_102] : memref<64x384xf32, #tpu.memory_space<vmem>>, vector<8x384xf32>
    %cst_103 = arith.constant dense<0.000000e+00> : vector<8x384xf32>
    %428 = tpu.matmul %423, %290, %cst_103 {dimension_numbers = #tpu.dot_dimension_numbers<[1], [0], [0], [1], [0, 0, 1, 1], [], []>} : vector<8x128xf32>, vector<128x384xf32>, vector<8x384xf32> -> vector<8x384xf32>
    %429 = vector.broadcast %291 : vector<1x384xf32> to vector<8x384xf32>
    %430 = arith.addf %428, %429 : vector<8x384xf32>
    %431 = vector.extract_strided_slice %427 {offsets = [0, 0], sizes = [8, 128], strides = [1, 1]} : vector<8x384xf32> to vector<8x128xf32>
    %432 = vector.extract_strided_slice %427 {offsets = [0, 128], sizes = [8, 128], strides = [1, 1]} : vector<8x384xf32> to vector<8x128xf32>
    %433 = vector.extract_strided_slice %427 {offsets = [0, 256], sizes = [8, 128], strides = [1, 1]} : vector<8x384xf32> to vector<8x128xf32>
    %434 = vector.extract_strided_slice %430 {offsets = [0, 0], sizes = [8, 128], strides = [1, 1]} : vector<8x384xf32> to vector<8x128xf32>
    %435 = vector.extract_strided_slice %430 {offsets = [0, 128], sizes = [8, 128], strides = [1, 1]} : vector<8x384xf32> to vector<8x128xf32>
    %436 = vector.extract_strided_slice %430 {offsets = [0, 256], sizes = [8, 128], strides = [1, 1]} : vector<8x384xf32> to vector<8x128xf32>
    %437 = arith.addf %431, %434 : vector<8x128xf32>
    %438 = arith.negf %437 : vector<8x128xf32>
    %439 = math.exp %438 : vector<8x128xf32>
    %cst_104 = arith.constant 1.000000e+00 : f32
    %440 = vector.broadcast %cst_104 : f32 to vector<8x128xf32>
    %441 = arith.addf %440, %439 : vector<8x128xf32>
    %442 = arith.divf %440, %441 : vector<8x128xf32>
    %443 = arith.addf %432, %435 : vector<8x128xf32>
    %444 = arith.negf %443 : vector<8x128xf32>
    %445 = math.exp %444 : vector<8x128xf32>
    %cst_105 = arith.constant 1.000000e+00 : f32
    %446 = vector.broadcast %cst_105 : f32 to vector<8x128xf32>
    %447 = arith.addf %446, %445 : vector<8x128xf32>
    %448 = arith.divf %446, %447 : vector<8x128xf32>
    %449 = arith.mulf %442, %436 : vector<8x128xf32>
    %450 = arith.addf %433, %449 : vector<8x128xf32>
    %451 = math.tanh %450 : vector<8x128xf32>
    %cst_106 = arith.constant 1.000000e+00 : f32
    %452 = vector.broadcast %cst_106 : f32 to vector<8x128xf32>
    %453 = arith.subf %452, %448 : vector<8x128xf32>
    %454 = arith.mulf %453, %451 : vector<8x128xf32>
    %455 = arith.mulf %448, %423 : vector<8x128xf32>
    %456 = arith.addf %454, %455 : vector<8x128xf32>
    %c5_i32_107 = arith.constant 5 : i32
    %c8_i32_108 = arith.constant 8 : i32
    %457 = arith.muli %c5_i32_107, %c8_i32_108 : i32
    %458 = tpu.assume_multiple %457, 8 : i32
    %459 = arith.index_cast %458 : i32 to index
    %c0_109 = arith.constant 0 : index
    %460 = vector.load %arg10[%459, %c0_109] : memref<64x384xf32, #tpu.memory_space<vmem>>, vector<8x384xf32>
    %cst_110 = arith.constant dense<0.000000e+00> : vector<8x384xf32>
    %461 = tpu.matmul %456, %290, %cst_110 {dimension_numbers = #tpu.dot_dimension_numbers<[1], [0], [0], [1], [0, 0, 1, 1], [], []>} : vector<8x128xf32>, vector<128x384xf32>, vector<8x384xf32> -> vector<8x384xf32>
    %462 = vector.broadcast %291 : vector<1x384xf32> to vector<8x384xf32>
    %463 = arith.addf %461, %462 : vector<8x384xf32>
    %464 = vector.extract_strided_slice %460 {offsets = [0, 0], sizes = [8, 128], strides = [1, 1]} : vector<8x384xf32> to vector<8x128xf32>
    %465 = vector.extract_strided_slice %460 {offsets = [0, 128], sizes = [8, 128], strides = [1, 1]} : vector<8x384xf32> to vector<8x128xf32>
    %466 = vector.extract_strided_slice %460 {offsets = [0, 256], sizes = [8, 128], strides = [1, 1]} : vector<8x384xf32> to vector<8x128xf32>
    %467 = vector.extract_strided_slice %463 {offsets = [0, 0], sizes = [8, 128], strides = [1, 1]} : vector<8x384xf32> to vector<8x128xf32>
    %468 = vector.extract_strided_slice %463 {offsets = [0, 128], sizes = [8, 128], strides = [1, 1]} : vector<8x384xf32> to vector<8x128xf32>
    %469 = vector.extract_strided_slice %463 {offsets = [0, 256], sizes = [8, 128], strides = [1, 1]} : vector<8x384xf32> to vector<8x128xf32>
    %470 = arith.addf %464, %467 : vector<8x128xf32>
    %471 = arith.negf %470 : vector<8x128xf32>
    %472 = math.exp %471 : vector<8x128xf32>
    %cst_111 = arith.constant 1.000000e+00 : f32
    %473 = vector.broadcast %cst_111 : f32 to vector<8x128xf32>
    %474 = arith.addf %473, %472 : vector<8x128xf32>
    %475 = arith.divf %473, %474 : vector<8x128xf32>
    %476 = arith.addf %465, %468 : vector<8x128xf32>
    %477 = arith.negf %476 : vector<8x128xf32>
    %478 = math.exp %477 : vector<8x128xf32>
    %cst_112 = arith.constant 1.000000e+00 : f32
    %479 = vector.broadcast %cst_112 : f32 to vector<8x128xf32>
    %480 = arith.addf %479, %478 : vector<8x128xf32>
    %481 = arith.divf %479, %480 : vector<8x128xf32>
    %482 = arith.mulf %475, %469 : vector<8x128xf32>
    %483 = arith.addf %466, %482 : vector<8x128xf32>
    %484 = math.tanh %483 : vector<8x128xf32>
    %cst_113 = arith.constant 1.000000e+00 : f32
    %485 = vector.broadcast %cst_113 : f32 to vector<8x128xf32>
    %486 = arith.subf %485, %481 : vector<8x128xf32>
    %487 = arith.mulf %486, %484 : vector<8x128xf32>
    %488 = arith.mulf %481, %456 : vector<8x128xf32>
    %489 = arith.addf %487, %488 : vector<8x128xf32>
    %c6_i32_114 = arith.constant 6 : i32
    %c8_i32_115 = arith.constant 8 : i32
    %490 = arith.muli %c6_i32_114, %c8_i32_115 : i32
    %491 = tpu.assume_multiple %490, 8 : i32
    %492 = arith.index_cast %491 : i32 to index
    %c0_116 = arith.constant 0 : index
    %493 = vector.load %arg10[%492, %c0_116] : memref<64x384xf32, #tpu.memory_space<vmem>>, vector<8x384xf32>
    %cst_117 = arith.constant dense<0.000000e+00> : vector<8x384xf32>
    %494 = tpu.matmul %489, %290, %cst_117 {dimension_numbers = #tpu.dot_dimension_numbers<[1], [0], [0], [1], [0, 0, 1, 1], [], []>} : vector<8x128xf32>, vector<128x384xf32>, vector<8x384xf32> -> vector<8x384xf32>
    %495 = vector.broadcast %291 : vector<1x384xf32> to vector<8x384xf32>
    %496 = arith.addf %494, %495 : vector<8x384xf32>
    %497 = vector.extract_strided_slice %493 {offsets = [0, 0], sizes = [8, 128], strides = [1, 1]} : vector<8x384xf32> to vector<8x128xf32>
    %498 = vector.extract_strided_slice %493 {offsets = [0, 128], sizes = [8, 128], strides = [1, 1]} : vector<8x384xf32> to vector<8x128xf32>
    %499 = vector.extract_strided_slice %493 {offsets = [0, 256], sizes = [8, 128], strides = [1, 1]} : vector<8x384xf32> to vector<8x128xf32>
    %500 = vector.extract_strided_slice %496 {offsets = [0, 0], sizes = [8, 128], strides = [1, 1]} : vector<8x384xf32> to vector<8x128xf32>
    %501 = vector.extract_strided_slice %496 {offsets = [0, 128], sizes = [8, 128], strides = [1, 1]} : vector<8x384xf32> to vector<8x128xf32>
    %502 = vector.extract_strided_slice %496 {offsets = [0, 256], sizes = [8, 128], strides = [1, 1]} : vector<8x384xf32> to vector<8x128xf32>
    %503 = arith.addf %497, %500 : vector<8x128xf32>
    %504 = arith.negf %503 : vector<8x128xf32>
    %505 = math.exp %504 : vector<8x128xf32>
    %cst_118 = arith.constant 1.000000e+00 : f32
    %506 = vector.broadcast %cst_118 : f32 to vector<8x128xf32>
    %507 = arith.addf %506, %505 : vector<8x128xf32>
    %508 = arith.divf %506, %507 : vector<8x128xf32>
    %509 = arith.addf %498, %501 : vector<8x128xf32>
    %510 = arith.negf %509 : vector<8x128xf32>
    %511 = math.exp %510 : vector<8x128xf32>
    %cst_119 = arith.constant 1.000000e+00 : f32
    %512 = vector.broadcast %cst_119 : f32 to vector<8x128xf32>
    %513 = arith.addf %512, %511 : vector<8x128xf32>
    %514 = arith.divf %512, %513 : vector<8x128xf32>
    %515 = arith.mulf %508, %502 : vector<8x128xf32>
    %516 = arith.addf %499, %515 : vector<8x128xf32>
    %517 = math.tanh %516 : vector<8x128xf32>
    %cst_120 = arith.constant 1.000000e+00 : f32
    %518 = vector.broadcast %cst_120 : f32 to vector<8x128xf32>
    %519 = arith.subf %518, %514 : vector<8x128xf32>
    %520 = arith.mulf %519, %517 : vector<8x128xf32>
    %521 = arith.mulf %514, %489 : vector<8x128xf32>
    %522 = arith.addf %520, %521 : vector<8x128xf32>
    %c7_i32_121 = arith.constant 7 : i32
    %c8_i32_122 = arith.constant 8 : i32
    %523 = arith.muli %c7_i32_121, %c8_i32_122 : i32
    %524 = tpu.assume_multiple %523, 8 : i32
    %525 = arith.index_cast %524 : i32 to index
    %c0_123 = arith.constant 0 : index
    %526 = vector.load %arg10[%525, %c0_123] : memref<64x384xf32, #tpu.memory_space<vmem>>, vector<8x384xf32>
    %cst_124 = arith.constant dense<0.000000e+00> : vector<8x384xf32>
    %527 = tpu.matmul %522, %290, %cst_124 {dimension_numbers = #tpu.dot_dimension_numbers<[1], [0], [0], [1], [0, 0, 1, 1], [], []>} : vector<8x128xf32>, vector<128x384xf32>, vector<8x384xf32> -> vector<8x384xf32>
    %528 = vector.broadcast %291 : vector<1x384xf32> to vector<8x384xf32>
    %529 = arith.addf %527, %528 : vector<8x384xf32>
    %530 = vector.extract_strided_slice %526 {offsets = [0, 0], sizes = [8, 128], strides = [1, 1]} : vector<8x384xf32> to vector<8x128xf32>
    %531 = vector.extract_strided_slice %526 {offsets = [0, 128], sizes = [8, 128], strides = [1, 1]} : vector<8x384xf32> to vector<8x128xf32>
    %532 = vector.extract_strided_slice %526 {offsets = [0, 256], sizes = [8, 128], strides = [1, 1]} : vector<8x384xf32> to vector<8x128xf32>
    %533 = vector.extract_strided_slice %529 {offsets = [0, 0], sizes = [8, 128], strides = [1, 1]} : vector<8x384xf32> to vector<8x128xf32>
    %534 = vector.extract_strided_slice %529 {offsets = [0, 128], sizes = [8, 128], strides = [1, 1]} : vector<8x384xf32> to vector<8x128xf32>
    %535 = vector.extract_strided_slice %529 {offsets = [0, 256], sizes = [8, 128], strides = [1, 1]} : vector<8x384xf32> to vector<8x128xf32>
    %536 = arith.addf %530, %533 : vector<8x128xf32>
    %537 = arith.negf %536 : vector<8x128xf32>
    %538 = math.exp %537 : vector<8x128xf32>
    %cst_125 = arith.constant 1.000000e+00 : f32
    %539 = vector.broadcast %cst_125 : f32 to vector<8x128xf32>
    %540 = arith.addf %539, %538 : vector<8x128xf32>
    %541 = arith.divf %539, %540 : vector<8x128xf32>
    %542 = arith.addf %531, %534 : vector<8x128xf32>
    %543 = arith.negf %542 : vector<8x128xf32>
    %544 = math.exp %543 : vector<8x128xf32>
    %cst_126 = arith.constant 1.000000e+00 : f32
    %545 = vector.broadcast %cst_126 : f32 to vector<8x128xf32>
    %546 = arith.addf %545, %544 : vector<8x128xf32>
    %547 = arith.divf %545, %546 : vector<8x128xf32>
    %548 = arith.mulf %541, %535 : vector<8x128xf32>
    %549 = arith.addf %532, %548 : vector<8x128xf32>
    %550 = math.tanh %549 : vector<8x128xf32>
    %cst_127 = arith.constant 1.000000e+00 : f32
    %551 = vector.broadcast %cst_127 : f32 to vector<8x128xf32>
    %552 = arith.subf %551, %547 : vector<8x128xf32>
    %553 = arith.mulf %552, %550 : vector<8x128xf32>
    %554 = arith.mulf %547, %522 : vector<8x128xf32>
    %555 = arith.addf %553, %554 : vector<8x128xf32>
    %c8_i32_128 = arith.constant 8 : i32
    %c0_129 = arith.constant 0 : index
    %c0_130 = arith.constant 0 : index
    %556 = vector.load %arg7[%c0_129, %c0_130] : memref<128x128xf32, #tpu.memory_space<vmem>>, vector<128x128xf32>
    %cst_131 = arith.constant dense<0.000000e+00> : vector<8x128xf32>
    %557 = tpu.matmul %555, %556, %cst_131 {dimension_numbers = #tpu.dot_dimension_numbers<[1], [0], [0], [1], [0, 0, 1, 1], [], []>} : vector<8x128xf32>, vector<128x128xf32>, vector<8x128xf32> -> vector<8x128xf32>
    %c0_132 = arith.constant 0 : index
    %c0_133 = arith.constant 0 : index
    %558 = vector.load %arg8[%c0_132, %c0_133] : memref<1x128xf32, #tpu.memory_space<vmem>>, vector<1x128xf32>
    %559 = vector.broadcast %558 : vector<1x128xf32> to vector<8x128xf32>
    %560 = arith.addf %557, %559 : vector<8x128xf32>
    %c0_134 = arith.constant 0 : index
    %c0_135 = arith.constant 0 : index
    %561 = vector.load %arg9[%c0_134, %c0_135] : memref<8x128xf32, #tpu.memory_space<vmem>>, vector<8x128xf32>
    tpu.vector_store %arg9[%c0_134, %c0_135], %560 {strides = array<i32>} : memref<8x128xf32, #tpu.memory_space<vmem>>, vector<8x128xf32>,
    return
  }
}

</mosaic_0001>

<llo_original>
// kernel: clf_gru_forward.1
$region0: #{clf_gru_forward.1}
  #allocation0 [shape = 'u32[]', space=smem, size = 0x4, offset = 0x4, fixed_abs, tag = 'smem constant byte address 0x4 - core index']
  #allocation1 [shape = 'u32[144,128]{1,0:T(1,128)}', space=vmem, size = 0x12000, scoped, tag = 'internal scratch']
  #allocation2 [shape = 'f32[64,384]{1,0:T(8,128)}', space=vmem, size = 0x18000, scoped, tag = 'scratch operand']
  #allocation3 [shape = 'f32[64,128]{1,0:T(8,128)}', space=vmem, size = 0x8000, scoped, tag = 'scratch operand']
  %s0 = inlined_call_operand.vmem [shape: f32[64,384], index: 0, kind: input, shape index: {}]
  %s1 = inlined_call_operand.vmem [shape: f32[128,384], index: 1, kind: input, shape index: {}]
  %s2 = inlined_call_operand.vmem [shape: f32[1,384], index: 2, kind: input, shape index: {}]
  %s3 = inlined_call_operand.vmem [shape: f32[128,384], index: 3, kind: input, shape index: {}]
  %s4 = inlined_call_operand.hbm [shape: f32[128,384], index: 4, kind: input, shape index: {}]
  %s5 = inlined_call_operand.vmem [shape: f32[1,384], index: 5, kind: input, shape index: {}]
  %s6 = inlined_call_operand.vmem [shape: f32[1,384], index: 6, kind: input, shape index: {}]
  %s7 = inlined_call_operand.vmem [shape: f32[128,128], index: 7, kind: input, shape index: {}]
  %s8 = inlined_call_operand.vmem [shape: f32[1,128], index: 8, kind: input, shape index: {}]
  %s9 = inlined_call_operand.vmem [shape: f32[8,128], index: 9, kind: output, shape index: {}]
  %s10 = sld [smem:[#allocation0]]
  $region50: #{clf_gru_forward.1} parent=0
    _
  %s12 = ssub.s32 1, %s10
  %s13 = scalar_select 0, %s12, %s10
  $region1: #{clf_gru_forward.1} parent=0
    #allocation4 [shape = 'u8[196608]{0}', space=vmem, size = 0x30000, scoped, tag = 'input window, operand 4, single buffered']
    #allocation5 [shape = 's32[1]{0}', space=sflag, size = 0x4, scoped, tag = 'scoped memory for clf_gru_forward.1']
    %14 = vsyncpa [#allocation5], 0
    // Predicated region
    $region2: #{clf_gru_forward.1} parent=1 // pred_check
      _
    $region3: #{clf_gru_forward.1} parent=1 // pred_check_branch
      %16 = sbr.rel (0) target = $region5
    $region4: #{clf_gru_forward.1} parent=1 // pred_region
      _
    $region5: #{clf_gru_forward.1} parent=1 // pred_fallthru
      _
    // Predicated region
    $region6: #{clf_gru_forward.1} parent=1 // pred_check
      _
    $region7: #{clf_gru_forward.1} parent=1 // pred_check_branch
      %18 = sbr.rel (0) target = $region9
    $region8: #{clf_gru_forward.1} parent=1 // pred_region
      _
    $region9: #{clf_gru_forward.1} parent=1 // pred_fallthru
      _
    // Predicated region
    $region10: #{clf_gru_forward.1} parent=1 // pred_check
      _
    $region11: #{clf_gru_forward.1} parent=1 // pred_check_branch
      %20 = sbr.rel (0) target = $region13
    $region12: #{clf_gru_forward.1} parent=1 // pred_region
      _
    $region13: #{clf_gru_forward.1} parent=1 // pred_fallthru
      _
    // Predicated region
    $region14: #{clf_gru_forward.1} parent=1 // pred_check
      _
    $region15: #{clf_gru_forward.1} parent=1 // pred_check_branch
      %22 = sbr.rel (0) target = $region17
    $region16: #{clf_gru_forward.1} parent=1 // pred_region
      _
    $region17: #{clf_gru_forward.1} parent=1 // pred_fallthru
      _
    // Predicated region
    $region18: #{clf_gru_forward.1} parent=1 // pred_check
      _
    $region19: #{clf_gru_forward.1} parent=1 // pred_check_branch
      %24 = sbr.rel (0) target = $region21
    $region20: #{clf_gru_forward.1} parent=1 // pred_region
      %s26 = ssub.s32 6144, 6144
      %27 = vsyncadd [#allocation5], %s26
      %s28 = sshll.u32 [#allocation4], 4
      %s29 = int_to_ptr.vmem [resolvable:$true] %s28
      %34 = dma.hbm_to_vmem [thread:$0]  %s4, 6144, %s29, [#allocation5], 384, 384, 24
    $region21: #{clf_gru_forward.1} parent=1 // pred_fallthru
      _
    // Predicated region
    $region22: #{clf_gru_forward.1} parent=1 // pred_check
      _
    $region23: #{clf_gru_forward.1} parent=1 // pred_check_branch
      %36 = sbr.rel (0) target = $region25
    $region24: #{clf_gru_forward.1} parent=1 // pred_region
      _
    $region25: #{clf_gru_forward.1} parent=1 // pred_fallthru
      _
    // Predicated region
    $region26: #{clf_gru_forward.1} parent=1 // pred_check
      _
    $region27: #{clf_gru_forward.1} parent=1 // pred_check_branch
      %38 = sbr.rel (0) target = $region29
    $region28: #{clf_gru_forward.1} parent=1 // pred_region
      _
    $region29: #{clf_gru_forward.1} parent=1 // pred_fallthru
      _
    // Predicated region
    $region30: #{clf_gru_forward.1} parent=1 // pred_check
      _
    $region31: #{clf_gru_forward.1} parent=1 // pred_check_branch
      %40 = sbr.rel (0) target = $region33
    $region32: #{clf_gru_forward.1} parent=1 // pred_region
      _
    $region33: #{clf_gru_forward.1} parent=1 // pred_fallthru
      _
    // Predicated region
    $region34: #{clf_gru_forward.1} parent=1 // pred_check
      _
    $region35: #{clf_gru_forward.1} parent=1 // pred_check_branch
      %42 = sbr.rel (0) target = $region37
    $region36: #{clf_gru_forward.1} parent=1 // pred_region
      _
    $region37: #{clf_gru_forward.1} parent=1 // pred_fallthru
      _
    // Predicated region
    $region38: #{clf_gru_forward.1} parent=1 // pred_check
      _
    $region39: #{clf_gru_forward.1} parent=1 // pred_check_branch
      %44 = sbr.rel (0) target = $region41
    $region40: #{clf_gru_forward.1} parent=1 // pred_region
      %45 = dma.done [#allocation5], 6144
    $region41: #{clf_gru_forward.1} parent=1 // pred_fallthru
      _
    %v46 = vld [vmem:[%s1] sm:$0xff]
    %v47 = vld [vmem:[%s1 + $0x8] sm:$0xff]
    %v48 = vld [vmem:[%s1 + $0x10] sm:$0xff]
    %v49 = vld [vmem:[%s1 + $0x18] sm:$0xff]
    %v50 = vld [vmem:[%s1 + $0x20] sm:$0xff]
    %v51 = vld [vmem:[%s1 + $0x28] sm:$0xff]
    %v52 = vld [vmem:[%s1 + $0x30] sm:$0xff]
    %v53 = vld [vmem:[%s1 + $0x38] sm:$0xff]
    %v54 = vld [vmem:[%s1 + $0x40] sm:$0xff]
    %v55 = vld [vmem:[%s1 + $0x48] sm:$0xff]
    %v56 = vld [vmem:[%s1 + $0x50] sm:$0xff]
    %v57 = vld [vmem:[%s1 + $0x58] sm:$0xff]
    %v58 = vld [vmem:[%s1 + $0x60] sm:$0xff]
    %v59 = vld [vmem:[%s1 + $0x68] sm:$0xff]
    %v60 = vld [vmem:[%s1 + $0x70] sm:$0xff]
    %v61 = vld [vmem:[%s1 + $0x78] sm:$0xff]
    %v62 = vld [vmem:[%s1 + $0x80] sm:$0xff]
    %v63 = vld [vmem:[%s1 + $0x88] sm:$0xff]
    %v64 = vld [vmem:[%s1 + $0x90] sm:$0xff]
    %v65 = vld [vmem:[%s1 + $0x98] sm:$0xff]
    %v66 = vld [vmem:[%s1 + $0xa0] sm:$0xff]
    %v67 = vld [vmem:[%s1 + $0xa8] sm:$0xff]
    %v68 = vld [vmem:[%s1 + $0xb0] sm:$0xff]
    %v69 = vld [vmem:[%s1 + $0xb8] sm:$0xff]
    %v70 = vld [vmem:[%s1 + $0xc0] sm:$0xff]
    %v71 = vld [vmem:[%s1 + $0xc8] sm:$0xff]
    %v72 = vld [vmem:[%s1 + $0xd0] sm:$0xff]
    %v73 = vld [vmem:[%s1 + $0xd8] sm:$0xff]
    %v74 = vld [vmem:[%s1 + $0xe0] sm:$0xff]
    %v75 = vld [vmem:[%s1 + $0xe8] sm:$0xff]
    %v76 = vld [vmem:[%s1 + $0xf0] sm:$0xff]
    %v77 = vld [vmem:[%s1 + $0xf8] sm:$0xff]
    %v78 = vld [vmem:[%s1 + $0x100] sm:$0xff]
    %v79 = vld [vmem:[%s1 + $0x108] sm:$0xff]
    %v80 = vld [vmem:[%s1 + $0x110] sm:$0xff]
    %v81 = vld [vmem:[%s1 + $0x118] sm:$0xff]
    %v82 = vld [vmem:[%s1 + $0x120] sm:$0xff]
    %v83 = vld [vmem:[%s1 + $0x128] sm:$0xff]
    %v84 = vld [vmem:[%s1 + $0x130] sm:$0xff]
    %v85 = vld [vmem:[%s1 + $0x138] sm:$0xff]
    %v86 = vld [vmem:[%s1 + $0x140] sm:$0xff]
    %v87 = vld [vmem:[%s1 + $0x148] sm:$0xff]
    %v88 = vld [vmem:[%s1 + $0x150] sm:$0xff]
    %v89 = vld [vmem:[%s1 + $0x158] sm:$0xff]
    %v90 = vld [vmem:[%s1 + $0x160] sm:$0xff]
    %v91 = vld [vmem:[%s1 + $0x168] sm:$0xff]
    %v92 = vld [vmem:[%s1 + $0x170] sm:$0xff]
    %v93 = vld [vmem:[%s1 + $0x178] sm:$0xff]
    %v94 = vld [vmem:[%s2] sm:$0x7]
    %s95 = smul.u32 0, 3
    %s96 = smul.addr %s95, 8
    %s97 = scalar_lea.vmem %s0, %s96
    %v98 = vld [vmem:[%s97] sm:$0xff]
    %v99 = vld [vmem:[%s97 + $0x8] sm:$0xff]
    %v100 = vld [vmem:[%s97 + $0x10] sm:$0xff]
    %v102 = vlaneseq
    %v103 = vshrl.u32 %v102, 7
    %v104 = vsub.s32 0, %v103
    %v105 = vrot.slane %v94, %v104
    %v106 = vlaneseq
    %v107 = vshrl.u32 %v106, 7
    %v108 = vsub.s32 1, %v107
    %v109 = vrot.slane %v94, %v108
    %v110 = vlaneseq
    %v111 = vshrl.u32 %v110, 7
    %v112 = vsub.s32 2, %v111
    %v113 = vrot.slane %v94, %v112
    %117 = vmatprep.subr.mxu0 %v47
    %118 = vmatpush1.msra.mxu0 %v46
    %119 = vmatprep.subr.mxu0 %v50
    %120 = vmatpush1.msra.mxu0 %v49
    %121 = vmatprep.subr.mxu0 %v53
    %122 = vmatpush1.msra.mxu0 %v52
    %123 = vmatprep.subr.mxu0 %v56
    %124 = vmatpush1.msra.mxu0 %v55
    %125 = vmatprep.subr.mxu0 %v59
    %126 = vmatpush1.msra.mxu0 %v58
    %127 = vmatprep.subr.mxu0 %v62
    %128 = vmatpush1.msra.mxu0 %v61
    %129 = vmatprep.subr.mxu0 %v65
    %130 = vmatpush1.msra.mxu0 %v64
    %131 = vmatprep.subr.mxu0 %v68
    %132 = vmatpush1.msra.mxu0 %v67
    %133 = vmatprep.subr.mxu0 %v71
    %134 = vmatpush1.msra.mxu0 %v70
    %135 = vmatprep.subr.mxu0 %v74
    %136 = vmatpush1.msra.mxu0 %v73
    %137 = vmatprep.subr.mxu0 %v77
    %138 = vmatpush1.msra.mxu0 %v76
    %139 = vmatprep.subr.mxu0 %v80
    %140 = vmatpush1.msra.mxu0 %v79
    %141 = vmatprep.subr.mxu0 %v83
    %142 = vmatpush1.msra.mxu0 %v82
    %143 = vmatprep.subr.mxu0 %v86
    %144 = vmatpush1.msra.mxu0 %v85
    %145 = vmatprep.subr.mxu0 %v89
    %146 = vmatpush1.msra.mxu0 %v88
    %147 = vmatprep.subr.mxu0 %v92
    %148 = vmatpush1.msra.mxu0 %v91
    %149 = vmatprep.subr.mxu0 0.0
    %150 = vmatpush1.msra.mxu0 0.0
    %151 = vmatprep.subr.mxu0 0.0
    %152 = vmatpush1.msra.mxu0 0.0
    %153 = vmatprep.subr.mxu0 0.0
    %154 = vmatpush1.msra.mxu0 0.0
    %155 = vmatprep.subr.mxu0 0.0
    %156 = vmatpush1.msra.mxu0 0.0
    %157 = vmatprep.subr.mxu0 0.0
    %158 = vmatpush1.msra.mxu0 0.0
    %159 = vmatprep.subr.mxu0 0.0
    %160 = vmatpush1.msra.mxu0 0.0
    %161 = vmatprep.subr.mxu0 0.0
    %162 = vmatpush1.msra.mxu0 0.0
    %163 = vmatprep.subr.mxu0 0.0
    %164 = vmatpush1.msra.mxu0 0.0
    %165 = vmatprep.subr.mxu0 0.0
    %166 = vmatpush1.msra.mxu0 0.0
    %167 = vmatprep.subr.mxu0 0.0
    %168 = vmatpush1.msra.mxu0 0.0
    %169 = vmatprep.subr.mxu0 0.0
    %170 = vmatpush1.msra.mxu0 0.0
    %171 = vmatprep.subr.mxu0 0.0
    %172 = vmatpush1.msra.mxu0 0.0
    %173 = vmatprep.subr.mxu0 0.0
    %174 = vmatpush1.msra.mxu0 0.0
    %175 = vmatprep.subr.mxu0 0.0
    %176 = vmatpush1.msra.mxu0 0.0
    %177 = vmatprep.subr.mxu0 0.0
    %178 = vmatpush1.msra.mxu0 0.0
    %179 = vmatprep.subr.mxu0 0.0
    %180 = vmatpush1.msra.mxu0 0.0
    %181 = vmatprep.mubr.f32.mxu0 0.0
    %182 = vmatmul.mubr.f32.gmra.mrb[0].mxu0 0.0
    %v183 = vpop.f32.mrb[0].mxu0
    %v184 = vadd.f32 %v105, %v183
    %v185 = vpop.f32.mrb[0].mxu0
    %v186 = vadd.f32 %v109, %v185
    %187 = vdwg.mxu0
    %188 = vmatprep.subr.mxu0 0.0
    %189 = vmatpush1.msra.mxu0 %v48
    %190 = vmatprep.subr.mxu0 0.0
    %191 = vmatpush1.msra.mxu0 %v51
    %192 = vmatprep.subr.mxu0 0.0
    %193 = vmatpush1.msra.mxu0 %v54
    %194 = vmatprep.subr.mxu0 0.0
    %195 = vmatpush1.msra.mxu0 %v57
    %196 = vmatprep.subr.mxu0 0.0
    %197 = vmatpush1.msra.mxu0 %v60
    %198 = vmatprep.subr.mxu0 0.0
    %199 = vmatpush1.msra.mxu0 %v63
    %200 = vmatprep.subr.mxu0 0.0
    %201 = vmatpush1.msra.mxu0 %v66
    %202 = vmatprep.subr.mxu0 0.0
    %203 = vmatpush1.msra.mxu0 %v69
    %204 = vmatprep.subr.mxu0 0.0
    %205 = vmatpush1.msra.mxu0 %v72
    %206 = vmatprep.subr.mxu0 0.0
    %207 = vmatpush1.msra.mxu0 %v75
    %208 = vmatprep.subr.mxu0 0.0
    %209 = vmatpush1.msra.mxu0 %v78
    %210 = vmatprep.subr.mxu0 0.0
    %211 = vmatpush1.msra.mxu0 %v81
    %212 = vmatprep.subr.mxu0 0.0
    %213 = vmatpush1.msra.mxu0 %v84
    %214 = vmatprep.subr.mxu0 0.0
    %215 = vmatpush1.msra.mxu0 %v87
    %216 = vmatprep.subr.mxu0 0.0
    %217 = vmatpush1.msra.mxu0 %v90
    %218 = vmatprep.subr.mxu0 0.0
    %219 = vmatpush1.msra.mxu0 %v93
    %220 = vmatprep.subr.mxu0 0.0
    %221 = vmatpush1.msra.mxu0 0.0
    %222 = vmatprep.subr.mxu0 0.0
    %223 = vmatpush1.msra.mxu0 0.0
    %224 = vmatprep.subr.mxu0 0.0
    %225 = vmatpush1.msra.mxu0 0.0
    %226 = vmatprep.subr.mxu0 0.0
    %227 = vmatpush1.msra.mxu0 0.0
    %228 = vmatprep.subr.mxu0 0.0
    %229 = vmatpush1.msra.mxu0 0.0
    %230 = vmatprep.subr.mxu0 0.0
    %231 = vmatpush1.msra.mxu0 0.0
    %232 = vmatprep.subr.mxu0 0.0
    %233 = vmatpush1.msra.mxu0 0.0
    %234 = vmatprep.subr.mxu0 0.0
    %235 = vmatpush1.msra.mxu0 0.0
    %236 = vmatprep.subr.mxu0 0.0
    %237 = vmatpush1.msra.mxu0 0.0
    %238 = vmatprep.subr.mxu0 0.0
    %239 = vmatpush1.msra.mxu0 0.0
    %240 = vmatprep.subr.mxu0 0.0
    %241 = vmatpush1.msra.mxu0 0.0
    %242 = vmatprep.subr.mxu0 0.0
    %243 = vmatpush1.msra.mxu0 0.0
    %244 = vmatprep.subr.mxu0 0.0
    %245 = vmatpush1.msra.mxu0 0.0
    %246 = vmatprep.subr.mxu0 0.0
    %247 = vmatpush1.msra.mxu0 0.0
    %248 = vmatprep.subr.mxu0 0.0
    %249 = vmatpush1.msra.mxu0 0.0
    %250 = vmatprep.subr.mxu0 0.0
    %251 = vmatpush1.msra.mxu0 0.0
    %252 = vmatprep.mubr.f32.mxu0 0.0
    %253 = vmatmul.mubr.f32.gmra.mrb[0].mxu0 0.0
    %v254 = vpop.f32.mrb[0].mxu0
    %v255 = vadd.f32 %v113, %v254
    %v256 = vpop.f32.mrb[0].mxu0
    %257 = vdwg.mxu0
    %v258 = vadd.f32 %v98, %v184
    %v259 = vxor.u32 %v258, 2147483648
    %v260 = vmul.f32 %v259, 1.442695
    %v261 = vpow.pop %v260
    %v262 = vadd.f32 %v261, 1.0
    %v263 = vrcp.pop %v262
    %v264 = vmul.f32 1.0, %v263
    %v265 = vadd.f32 %v99, %v186
    %v266 = vxor.u32 %v265, 2147483648
    %v267 = vmul.f32 %v266, 1.442695
    %v268 = vpow.pop %v267
    %v269 = vadd.f32 %v268, 1.0
    %v270 = vrcp.pop %v269
    %v271 = vmul.f32 1.0, %v270
    %v272 = vmul.f32 %v264, %v255
    %v273 = vadd.f32 %v100, %v272
    %v274 = vtanh.pop %v273
    %v275 = vsub.f32 1.0, %v271
    %v276 = vmul.f32 %v275, %v274
    %v277 = vmul.f32 %v271, 0.0
    %v278 = vadd.f32 %v276, %v277
    %279 = vst [vmem:[#allocation3] sm:$0xff] %v278
    %s280 = smul.u32 1, 3
    %s281 = smul.addr %s280, 8
    %s282 = scalar_lea.vmem %s0, %s281
    %v283 = vld [vmem:[%s282] sm:$0xff]
    %v284 = vld [vmem:[%s282 + $0x8] sm:$0xff]
    %v285 = vld [vmem:[%s282 + $0x10] sm:$0xff]
    %286 = vmatprep.subr.mxu0 %v47
    %287 = vmatpush1.msra.mxu0 %v46
    %288 = vmatprep.subr.mxu0 %v50
    %289 = vmatpush1.msra.mxu0 %v49
    %290 = vmatprep.subr.mxu0 %v53
    %291 = vmatpush1.msra.mxu0 %v52
    %292 = vmatprep.subr.mxu0 %v56
    %293 = vmatpush1.msra.mxu0 %v55
    %294 = vmatprep.subr.mxu0 %v59
    %295 = vmatpush1.msra.mxu0 %v58
    %296 = vmatprep.subr.mxu0 %v62
    %297 = vmatpush1.msra.mxu0 %v61
    %298 = vmatprep.subr.mxu0 %v65
    %299 = vmatpush1.msra.mxu0 %v64
    %300 = vmatprep.subr.mxu0 %v68
    %301 = vmatpush1.msra.mxu0 %v67
    %302 = vmatprep.subr.mxu0 %v71
    %303 = vmatpush1.msra.mxu0 %v70
    %304 = vmatprep.subr.mxu0 %v74
    %305 = vmatpush1.msra.mxu0 %v73
    %306 = vmatprep.subr.mxu0 %v77
    %307 = vmatpush1.msra.mxu0 %v76
    %308 = vmatprep.subr.mxu0 %v80
    %309 = vmatpush1.msra.mxu0 %v79
    %310 = vmatprep.subr.mxu0 %v83
    %311 = vmatpush1.msra.mxu0 %v82
    %312 = vmatprep.subr.mxu0 %v86
    %313 = vmatpush1.msra.mxu0 %v85
    %314 = vmatprep.subr.mxu0 %v89
    %315 = vmatpush1.msra.mxu0 %v88
    %316 = vmatprep.subr.mxu0 %v92
    %317 = vmatpush1.msra.mxu0 %v91
    %318 = vmatprep.subr.mxu0 0.0
    %319 = vmatpush1.msra.mxu0 0.0
    %320 = vmatprep.subr.mxu0 0.0
    %321 = vmatpush1.msra.mxu0 0.0
    %322 = vmatprep.subr.mxu0 0.0
    %323 = vmatpush1.msra.mxu0 0.0
    %324 = vmatprep.subr.mxu0 0.0
    %325 = vmatpush1.msra.mxu0 0.0
    %326 = vmatprep.subr.mxu0 0.0
    %327 = vmatpush1.msra.mxu0 0.0
    %328 = vmatprep.subr.mxu0 0.0
    %329 = vmatpush1.msra.mxu0 0.0
    %330 = vmatprep.subr.mxu0 0.0
    %331 = vmatpush1.msra.mxu0 0.0
    %332 = vmatprep.subr.mxu0 0.0
    %333 = vmatpush1.msra.mxu0 0.0
    %334 = vmatprep.subr.mxu0 0.0
    %335 = vmatpush1.msra.mxu0 0.0
    %336 = vmatprep.subr.mxu0 0.0
    %337 = vmatpush1.msra.mxu0 0.0
    %338 = vmatprep.subr.mxu0 0.0
    %339 = vmatpush1.msra.mxu0 0.0
    %340 = vmatprep.subr.mxu0 0.0
    %341 = vmatpush1.msra.mxu0 0.0
    %342 = vmatprep.subr.mxu0 0.0
    %343 = vmatpush1.msra.mxu0 0.0
    %344 = vmatprep.subr.mxu0 0.0
    %345 = vmatpush1.msra.mxu0 0.0
    %346 = vmatprep.subr.mxu0 0.0
    %347 = vmatpush1.msra.mxu0 0.0
    %348 = vmatprep.subr.mxu0 0.0
    %349 = vmatpush1.msra.mxu0 0.0
    %350 = vmatprep.mubr.f32.mxu0 0.0
    %351 = vmatmul.mubr.f32.gmra.mrb[0].mxu0 %v278
    %v352 = vpop.f32.mrb[0].mxu0
    %v353 = vadd.f32 %v105, %v352
    %v354 = vpop.f32.mrb[0].mxu0
    %v355 = vadd.f32 %v109, %v354
    %356 = vdwg.mxu0
    %357 = vmatprep.subr.mxu0 0.0
    %358 = vmatpush1.msra.mxu0 %v48
    %359 = vmatprep.subr.mxu0 0.0
    %360 = vmatpush1.msra.mxu0 %v51
    %361 = vmatprep.subr.mxu0 0.0
    %362 = vmatpush1.msra.mxu0 %v54
    %363 = vmatprep.subr.mxu0 0.0
    %364 = vmatpush1.msra.mxu0 %v57
    %365 = vmatprep.subr.mxu0 0.0
    %366 = vmatpush1.msra.mxu0 %v60
    %367 = vmatprep.subr.mxu0 0.0
    %368 = vmatpush1.msra.mxu0 %v63
    %369 = vmatprep.subr.mxu0 0.0
    %370 = vmatpush1.msra.mxu0 %v66
    %371 = vmatprep.subr.mxu0 0.0
    %372 = vmatpush1.msra.mxu0 %v69
    %373 = vmatprep.subr.mxu0 0.0
    %374 = vmatpush1.msra.mxu0 %v72
    %375 = vmatprep.subr.mxu0 0.0
    %376 = vmatpush1.msra.mxu0 %v75
    %377 = vmatprep.subr.mxu0 0.0
    %378 = vmatpush1.msra.mxu0 %v78
    %379 = vmatprep.subr.mxu0 0.0
    %380 = vmatpush1.msra.mxu0 %v81
    %381 = vmatprep.subr.mxu0 0.0
    %382 = vmatpush1.msra.mxu0 %v84
    %383 = vmatprep.subr.mxu0 0.0
    %384 = vmatpush1.msra.mxu0 %v87
    %385 = vmatprep.subr.mxu0 0.0
    %386 = vmatpush1.msra.mxu0 %v90
    %387 = vmatprep.subr.mxu0 0.0
    %388 = vmatpush1.msra.mxu0 %v93
    %389 = vmatprep.subr.mxu0 0.0
    %390 = vmatpush1.msra.mxu0 0.0
    %391 = vmatprep.subr.mxu0 0.0
    %392 = vmatpush1.msra.mxu0 0.0
    %393 = vmatprep.subr.mxu0 0.0
    %394 = vmatpush1.msra.mxu0 0.0
    %395 = vmatprep.subr.mxu0 0.0
    %396 = vmatpush1.msra.mxu0 0.0
    %397 = vmatprep.subr.mxu0 0.0
    %398 = vmatpush1.msra.mxu0 0.0
    %399 = vmatprep.subr.mxu0 0.0
    %400 = vmatpush1.msra.mxu0 0.0
    %401 = vmatprep.subr.mxu0 0.0
    %402 = vmatpush1.msra.mxu0 0.0
    %403 = vmatprep.subr.mxu0 0.0
    %404 = vmatpush1.msra.mxu0 0.0
    %405 = vmatprep.subr.mxu0 0.0
    %406 = vmatpush1.msra.mxu0 0.0
    %407 = vmatprep.subr.mxu0 0.0
    %408 = vmatpush1.msra.mxu0 0.0
    %409 = vmatprep.subr.mxu0 0.0
    %410 = vmatpush1.msra.mxu0 0.0
    %411 = vmatprep.subr.mxu0 0.0
    %412 = vmatpush1.msra.mxu0 0.0
    %413 = vmatprep.subr.mxu0 0.0
    %414 = vmatpush1.msra.mxu0 0.0
    %415 = vmatprep.subr.mxu0 0.0
    %416 = vmatpush1.msra.mxu0 0.0
    %417 = vmatprep.subr.mxu0 0.0
    %418 = vmatpush1.msra.mxu0 0.0
    %419 = vmatprep.subr.mxu0 0.0
    %420 = vmatpush1.msra.mxu0 0.0
    %421 = vmatprep.mubr.f32.mxu0 0.0
    %422 = vmatmul.mubr.f32.gmra.mrb[0].mxu0 %v278
    %v423 = vpop.f32.mrb[0].mxu0
    %v424 = vadd.f32 %v113, %v423
    %v425 = vpop.f32.mrb[0].mxu0
    %426 = vdwg.mxu0
    %v427 = vadd.f32 %v283, %v353
    %v428 = vxor.u32 %v427, 2147483648
    %v429 = vmul.f32 %v428, 1.442695
    %v430 = vpow.pop %v429
    %v431 = vadd.f32 %v430, 1.0
    %v432 = vrcp.pop %v431
    %v433 = vmul.f32 1.0, %v432
    %v434 = vadd.f32 %v284, %v355
    %v435 = vxor.u32 %v434, 2147483648
    %v436 = vmul.f32 %v435, 1.442695
    %v437 = vpow.pop %v436
    %v438 = vadd.f32 %v437, 1.0
    %v439 = vrcp.pop %v438
    %v440 = vmul.f32 1.0, %v439
    %v441 = vmul.f32 %v433, %v424
    %v442 = vadd.f32 %v285, %v441
    %v443 = vtanh.pop %v442
    %v444 = vsub.f32 1.0, %v440
    %v445 = vmul.f32 %v444, %v443
    %v446 = vmul.f32 %v440, %v278
    %v447 = vadd.f32 %v445, %v446
    %s448 = scalar_lea.vmem [#allocation3], 8
    %449 = vst [vmem:[%s448] sm:$0xff] %v447
    %s450 = smul.u32 2, 3
    %s451 = smul.addr %s450, 8
    %s452 = scalar_lea.vmem %s0, %s451
    %v453 = vld [vmem:[%s452] sm:$0xff]
    %v454 = vld [vmem:[%s452 + $0x8] sm:$0xff]
    %v455 = vld [vmem:[%s452 + $0x10] sm:$0xff]
    %456 = vmatprep.subr.mxu0 %v47
    %457 = vmatpush1.msra.mxu0 %v46
    %458 = vmatprep.subr.mxu0 %v50
    %459 = vmatpush1.msra.mxu0 %v49
    %460 = vmatprep.subr.mxu0 %v53
    %461 = vmatpush1.msra.mxu0 %v52
    %462 = vmatprep.subr.mxu0 %v56
    %463 = vmatpush1.msra.mxu0 %v55
    %464 = vmatprep.subr.mxu0 %v59
    %465 = vmatpush1.msra.mxu0 %v58
    %466 = vmatprep.subr.mxu0 %v62
    %467 = vmatpush1.msra.mxu0 %v61
    %468 = vmatprep.subr.mxu0 %v65
    %469 = vmatpush1.msra.mxu0 %v64
    %470 = vmatprep.subr.mxu0 %v68
    %471 = vmatpush1.msra.mxu0 %v67
    %472 = vmatprep.subr.mxu0 %v71
    %473 = vmatpush1.msra.mxu0 %v70
    %474 = vmatprep.subr.mxu0 %v74
    %475 = vmatpush1.msra.mxu0 %v73
    %476 = vmatprep.subr.mxu0 %v77
    %477 = vmatpush1.msra.mxu0 %v76
    %478 = vmatprep.subr.mxu0 %v80
    %479 = vmatpush1.msra.mxu0 %v79
    %480 = vmatprep.subr.mxu0 %v83
    %481 = vmatpush1.msra.mxu0 %v82
    %482 = vmatprep.subr.mxu0 %v86
    %483 = vmatpush1.msra.mxu0 %v85
    %484 = vmatprep.subr.mxu0 %v89
    %485 = vmatpush1.msra.mxu0 %v88
    %486 = vmatprep.subr.mxu0 %v92
    %487 = vmatpush1.msra.mxu0 %v91
    %488 = vmatprep.subr.mxu0 0.0
    %489 = vmatpush1.msra.mxu0 0.0
    %490 = vmatprep.subr.mxu0 0.0
    %491 = vmatpush1.msra.mxu0 0.0
    %492 = vmatprep.subr.mxu0 0.0
    %493 = vmatpush1.msra.mxu0 0.0
    %494 = vmatprep.subr.mxu0 0.0
    %495 = vmatpush1.msra.mxu0 0.0
    %496 = vmatprep.subr.mxu0 0.0
    %497 = vmatpush1.msra.mxu0 0.0
    %498 = vmatprep.subr.mxu0 0.0
    %499 = vmatpush1.msra.mxu0 0.0
    %500 = vmatprep.subr.mxu0 0.0
    %501 = vmatpush1.msra.mxu0 0.0
    %502 = vmatprep.subr.mxu0 0.0
    %503 = vmatpush1.msra.mxu0 0.0
    %504 = vmatprep.subr.mxu0 0.0
    %505 = vmatpush1.msra.mxu0 0.0
    %506 = vmatprep.subr.mxu0 0.0
    %507 = vmatpush1.msra.mxu0 0.0
    %508 = vmatprep.subr.mxu0 0.0
    %509 = vmatpush1.msra.mxu0 0.0
    %510 = vmatprep.subr.mxu0 0.0
    %511 = vmatpush1.msra.mxu0 0.0
    %512 = vmatprep.subr.mxu0 0.0
    %513 = vmatpush1.msra.mxu0 0.0
    %514 = vmatprep.subr.mxu0 0.0
    %515 = vmatpush1.msra.mxu0 0.0
    %516 = vmatprep.subr.mxu0 0.0
    %517 = vmatpush1.msra.mxu0 0.0
    %518 = vmatprep.subr.mxu0 0.0
    %519 = vmatpush1.msra.mxu0 0.0
    %520 = vmatprep.mubr.f32.mxu0 0.0
    %521 = vmatmul.mubr.f32.gmra.mrb[0].mxu0 %v447
    %v522 = vpop.f32.mrb[0].mxu0
    %v523 = vadd.f32 %v105, %v522
    %v524 = vpop.f32.mrb[0].mxu0
    %v525 = vadd.f32 %v109, %v524
    %526 = vdwg.mxu0
    %527 = vmatprep.subr.mxu0 0.0
    %528 = vmatpush1.msra.mxu0 %v48
    %529 = vmatprep.subr.mxu0 0.0
    %530 = vmatpush1.msra.mxu0 %v51
    %531 = vmatprep.subr.mxu0 0.0
    %532 = vmatpush1.msra.mxu0 %v54
    %533 = vmatprep.subr.mxu0 0.0
    %534 = vmatpush1.msra.mxu0 %v57
    %535 = vmatprep.subr.mxu0 0.0
    %536 = vmatpush1.msra.mxu0 %v60
    %537 = vmatprep.subr.mxu0 0.0
    %538 = vmatpush1.msra.mxu0 %v63
    %539 = vmatprep.subr.mxu0 0.0
    %540 = vmatpush1.msra.mxu0 %v66
    %541 = vmatprep.subr.mxu0 0.0
    %542 = vmatpush1.msra.mxu0 %v69
    %543 = vmatprep.subr.mxu0 0.0
    %544 = vmatpush1.msra.mxu0 %v72
    %545 = vmatprep.subr.mxu0 0.0
    %546 = vmatpush1.msra.mxu0 %v75
    %547 = vmatprep.subr.mxu0 0.0
    %548 = vmatpush1.msra.mxu0 %v78
    %549 = vmatprep.subr.mxu0 0.0
    %550 = vmatpush1.msra.mxu0 %v81
    %551 = vmatprep.subr.mxu0 0.0
    %552 = vmatpush1.msra.mxu0 %v84
    %553 = vmatprep.subr.mxu0 0.0
    %554 = vmatpush1.msra.mxu0 %v87
    %555 = vmatprep.subr.mxu0 0.0
    %556 = vmatpush1.msra.mxu0 %v90
    %557 = vmatprep.subr.mxu0 0.0
    %558 = vmatpush1.msra.mxu0 %v93
    %559 = vmatprep.subr.mxu0 0.0
    %560 = vmatpush1.msra.mxu0 0.0
    %561 = vmatprep.subr.mxu0 0.0
    %562 = vmatpush1.msra.mxu0 0.0
    %563 = vmatprep.subr.mxu0 0.0
    %564 = vmatpush1.msra.mxu0 0.0
    %565 = vmatprep.subr.mxu0 0.0
    %566 = vmatpush1.msra.mxu0 0.0
    %567 = vmatprep.subr.mxu0 0.0
    %568 = vmatpush1.msra.mxu0 0.0
    %569 = vmatprep.subr.mxu0 0.0
    %570 = vmatpush1.msra.mxu0 0.0
    %571 = vmatprep.subr.mxu0 0.0
    %572 = vmatpush1.msra.mxu0 0.0
    %573 = vmatprep.subr.mxu0 0.0
    %574 = vmatpush1.msra.mxu0 0.0
    %575 = vmatprep.subr.mxu0 0.0
    %576 = vmatpush1.msra.mxu0 0.0
    %577 = vmatprep.subr.mxu0 0.0
    %578 = vmatpush1.msra.mxu0 0.0
    %579 = vmatprep.subr.mxu0 0.0
    %580 = vmatpush1.msra.mxu0 0.0
    %581 = vmatprep.subr.mxu0 0.0
    %582 = vmatpush1.msra.mxu0 0.0
    %583 = vmatprep.subr.mxu0 0.0
    %584 = vmatpush1.msra.mxu0 0.0
    %585 = vmatprep.subr.mxu0 0.0
    %586 = vmatpush1.msra.mxu0 0.0
    %587 = vmatprep.subr.mxu0 0.0
    %588 = vmatpush1.msra.mxu0 0.0
    %589 = vmatprep.subr.mxu0 0.0
    %590 = vmatpush1.msra.mxu0 0.0
    %591 = vmatprep.mubr.f32.mxu0 0.0
    %592 = vmatmul.mubr.f32.gmra.mrb[0].mxu0 %v447
    %v593 = vpop.f32.mrb[0].mxu0
    %v594 = vadd.f32 %v113, %v593
    %v595 = vpop.f32.mrb[0].mxu0
    %596 = vdwg.mxu0
    %v597 = vadd.f32 %v453, %v523
    %v598 = vxor.u32 %v597, 2147483648
    %v599 = vmul.f32 %v598, 1.442695
    %v600 = vpow.pop %v599
    %v601 = vadd.f32 %v600, 1.0
    %v602 = vrcp.pop %v601
    %v603 = vmul.f32 1.0, %v602
    %v604 = vadd.f32 %v454, %v525
    %v605 = vxor.u32 %v604, 2147483648
    %v606 = vmul.f32 %v605, 1.442695
    %v607 = vpow.pop %v606
    %v608 = vadd.f32 %v607, 1.0
    %v609 = vrcp.pop %v608
    %v610 = vmul.f32 1.0, %v609
    %v611 = vmul.f32 %v603, %v594
    %v612 = vadd.f32 %v455, %v611
    %v613 = vtanh.pop %v612
    %v614 = vsub.f32 1.0, %v610
    %v615 = vmul.f32 %v614, %v613
    %v616 = vmul.f32 %v610, %v447
    %v617 = vadd.f32 %v615, %v616
    %s618 = scalar_lea.vmem [#allocation3], 16
    %619 = vst [vmem:[%s618] sm:$0xff] %v617
    %s620 = smul.u32 3, 3
    %s621 = smul.addr %s620, 8
    %s622 = scalar_lea.vmem %s0, %s621
    %v623 = vld [vmem:[%s622] sm:$0xff]
    %v624 = vld [vmem:[%s622 + $0x8] sm:$0xff]
    %v625 = vld [vmem:[%s622 + $0x10] sm:$0xff]
    %626 = vmatprep.subr.mxu0 %v47
    %627 = vmatpush1.msra.mxu0 %v46
    %628 = vmatprep.subr.mxu0 %v50
    %629 = vmatpush1.msra.mxu0 %v49
    %630 = vmatprep.subr.mxu0 %v53
    %631 = vmatpush1.msra.mxu0 %v52
    %632 = vmatprep.subr.mxu0 %v56
    %633 = vmatpush1.msra.mxu0 %v55
    %634 = vmatprep.subr.mxu0 %v59
    %635 = vmatpush1.msra.mxu0 %v58
    %636 = vmatprep.subr.mxu0 %v62
    %637 = vmatpush1.msra.mxu0 %v61
    %638 = vmatprep.subr.mxu0 %v65
    %639 = vmatpush1.msra.mxu0 %v64
    %640 = vmatprep.subr.mxu0 %v68
    %641 = vmatpush1.msra.mxu0 %v67
    %642 = vmatprep.subr.mxu0 %v71
    %643 = vmatpush1.msra.mxu0 %v70
    %644 = vmatprep.subr.mxu0 %v74
    %645 = vmatpush1.msra.mxu0 %v73
    %646 = vmatprep.subr.mxu0 %v77
    %647 = vmatpush1.msra.mxu0 %v76
    %648 = vmatprep.subr.mxu0 %v80
    %649 = vmatpush1.msra.mxu0 %v79
    %650 = vmatprep.subr.mxu0 %v83
    %651 = vmatpush1.msra.mxu0 %v82
    %652 = vmatprep.subr.mxu0 %v86
    %653 = vmatpush1.msra.mxu0 %v85
    %654 = vmatprep.subr.mxu0 %v89
    %655 = vmatpush1.msra.mxu0 %v88
    %656 = vmatprep.subr.mxu0 %v92
    %657 = vmatpush1.msra.mxu0 %v91
    %658 = vmatprep.subr.mxu0 0.0
    %659 = vmatpush1.msra.mxu0 0.0
    %660 = vmatprep.subr.mxu0 0.0
    %661 = vmatpush1.msra.mxu0 0.0
    %662 = vmatprep.subr.mxu0 0.0
    %663 = vmatpush1.msra.mxu0 0.0
    %664 = vmatprep.subr.mxu0 0.0
    %665 = vmatpush1.msra.mxu0 0.0
    %666 = vmatprep.subr.mxu0 0.0
    %667 = vmatpush1.msra.mxu0 0.0
    %668 = vmatprep.subr.mxu0 0.0
    %669 = vmatpush1.msra.mxu0 0.0
    %670 = vmatprep.subr.mxu0 0.0
    %671 = vmatpush1.msra.mxu0 0.0
    %672 = vmatprep.subr.mxu0 0.0
    %673 = vmatpush1.msra.mxu0 0.0
    %674 = vmatprep.subr.mxu0 0.0
    %675 = vmatpush1.msra.mxu0 0.0
    %676 = vmatprep.subr.mxu0 0.0
    %677 = vmatpush1.msra.mxu0 0.0
    %678 = vmatprep.subr.mxu0 0.0
    %679 = vmatpush1.msra.mxu0 0.0
    %680 = vmatprep.subr.mxu0 0.0
    %681 = vmatpush1.msra.mxu0 0.0
    %682 = vmatprep.subr.mxu0 0.0
    %683 = vmatpush1.msra.mxu0 0.0
    %684 = vmatprep.subr.mxu0 0.0
    %685 = vmatpush1.msra.mxu0 0.0
    %686 = vmatprep.subr.mxu0 0.0
    %687 = vmatpush1.msra.mxu0 0.0
    %688 = vmatprep.subr.mxu0 0.0
    %689 = vmatpush1.msra.mxu0 0.0
    %690 = vmatprep.mubr.f32.mxu0 0.0
    %691 = vmatmul.mubr.f32.gmra.mrb[0].mxu0 %v617
    %v692 = vpop.f32.mrb[0].mxu0
    %v693 = vadd.f32 %v105, %v692
    %v694 = vpop.f32.mrb[0].mxu0
    %v695 = vadd.f32 %v109, %v694
    %696 = vdwg.mxu0
    %697 = vmatprep.subr.mxu0 0.0
    %698 = vmatpush1.msra.mxu0 %v48
    %699 = vmatprep.subr.mxu0 0.0
    %700 = vmatpush1.msra.mxu0 %v51
    %701 = vmatprep.subr.mxu0 0.0
    %702 = vmatpush1.msra.mxu0 %v54
    %703 = vmatprep.subr.mxu0 0.0
    %704 = vmatpush1.msra.mxu0 %v57
    %705 = vmatprep.subr.mxu0 0.0
    %706 = vmatpush1.msra.mxu0 %v60
    %707 = vmatprep.subr.mxu0 0.0
    %708 = vmatpush1.msra.mxu0 %v63
    %709 = vmatprep.subr.mxu0 0.0
    %710 = vmatpush1.msra.mxu0 %v66
    %711 = vmatprep.subr.mxu0 0.0
    %712 = vmatpush1.msra.mxu0 %v69
    %713 = vmatprep.subr.mxu0 0.0
    %714 = vmatpush1.msra.mxu0 %v72
    %715 = vmatprep.subr.mxu0 0.0
    %716 = vmatpush1.msra.mxu0 %v75
    %717 = vmatprep.subr.mxu0 0.0
    %718 = vmatpush1.msra.mxu0 %v78
    %719 = vmatprep.subr.mxu0 0.0
    %720 = vmatpush1.msra.mxu0 %v81
    %721 = vmatprep.subr.mxu0 0.0
    %722 = vmatpush1.msra.mxu0 %v84
    %723 = vmatprep.subr.mxu0 0.0
    %724 = vmatpush1.msra.mxu0 %v87
    %725 = vmatprep.subr.mxu0 0.0
    %726 = vmatpush1.msra.mxu0 %v90
    %727 = vmatprep.subr.mxu0 0.0
    %728 = vmatpush1.msra.mxu0 %v93
    %729 = vmatprep.subr.mxu0 0.0
    %730 = vmatpush1.msra.mxu0 0.0
    %731 = vmatprep.subr.mxu0 0.0
    %732 = vmatpush1.msra.mxu0 0.0
    %733 = vmatprep.subr.mxu0 0.0
    %734 = vmatpush1.msra.mxu0 0.0
    %735 = vmatprep.subr.mxu0 0.0
    %736 = vmatpush1.msra.mxu0 0.0
    %737 = vmatprep.subr.mxu0 0.0
    %738 = vmatpush1.msra.mxu0 0.0
    %739 = vmatprep.subr.mxu0 0.0
    %740 = vmatpush1.msra.mxu0 0.0
    %741 = vmatprep.subr.mxu0 0.0
    %742 = vmatpush1.msra.mxu0 0.0
    %743 = vmatprep.subr.mxu0 0.0
    %744 = vmatpush1.msra.mxu0 0.0
    %745 = vmatprep.subr.mxu0 0.0
    %746 = vmatpush1.msra.mxu0 0.0
    %747 = vmatprep.subr.mxu0 0.0
    %748 = vmatpush1.msra.mxu0 0.0
    %749 = vmatprep.subr.mxu0 0.0
    %750 = vmatpush1.msra.mxu0 0.0
    %751 = vmatprep.subr.mxu0 0.0
    %752 = vmatpush1.msra.mxu0 0.0
    %753 = vmatprep.subr.mxu0 0.0
    %754 = vmatpush1.msra.mxu0 0.0
    %755 = vmatprep.subr.mxu0 0.0
    %756 = vmatpush1.msra.mxu0 0.0
    %757 = vmatprep.subr.mxu0 0.0
    %758 = vmatpush1.msra.mxu0 0.0
    %759 = vmatprep.subr.mxu0 0.0
    %760 = vmatpush1.msra.mxu0 0.0
    %761 = vmatprep.mubr.f32.mxu0 0.0
    %762 = vmatmul.mubr.f32.gmra.mrb[0].mxu0 %v617
    %v763 = vpop.f32.mrb[0].mxu0
    %v764 = vadd.f32 %v113, %v763
    %v765 = vpop.f32.mrb[0].mxu0
    %766 = vdwg.mxu0
    %v767 = vadd.f32 %v623, %v693
    %v768 = vxor.u32 %v767, 2147483648
    %v769 = vmul.f32 %v768, 1.442695
    %v770 = vpow.pop %v769
    %v771 = vadd.f32 %v770, 1.0
    %v772 = vrcp.pop %v771
    %v773 = vmul.f32 1.0, %v772
    %v774 = vadd.f32 %v624, %v695
    %v775 = vxor.u32 %v774, 2147483648
    %v776 = vmul.f32 %v775, 1.442695
    %v777 = vpow.pop %v776
    %v778 = vadd.f32 %v777, 1.0
    %v779 = vrcp.pop %v778
    %v780 = vmul.f32 1.0, %v779
    %v781 = vmul.f32 %v773, %v764
    %v782 = vadd.f32 %v625, %v781
    %v783 = vtanh.pop %v782
    %v784 = vsub.f32 1.0, %v780
    %v785 = vmul.f32 %v784, %v783
    %v786 = vmul.f32 %v780, %v617
    %v787 = vadd.f32 %v785, %v786
    %s788 = scalar_lea.vmem [#allocation3], 24
    %789 = vst [vmem:[%s788] sm:$0xff] %v787
    %s790 = smul.u32 4, 3
    %s791 = smul.addr %s790, 8
    %s792 = scalar_lea.vmem %s0, %s791
    %v793 = vld [vmem:[%s792] sm:$0xff]
    %v794 = vld [vmem:[%s792 + $0x8] sm:$0xff]
    %v795 = vld [vmem:[%s792 + $0x10] sm:$0xff]
    %796 = vmatprep.subr.mxu0 %v47
    %797 = vmatpush1.msra.mxu0 %v46
    %798 = vmatprep.subr.mxu0 %v50
    %799 = vmatpush1.msra.mxu0 %v49
    %800 = vmatprep.subr.mxu0 %v53
    %801 = vmatpush1.msra.mxu0 %v52
    %802 = vmatprep.subr.mxu0 %v56
    %803 = vmatpush1.msra.mxu0 %v55
    %804 = vmatprep.subr.mxu0 %v59
    %805 = vmatpush1.msra.mxu0 %v58
    %806 = vmatprep.subr.mxu0 %v62
    %807 = vmatpush1.msra.mxu0 %v61
    %808 = vmatprep.subr.mxu0 %v65
    %809 = vmatpush1.msra.mxu0 %v64
    %810 = vmatprep.subr.mxu0 %v68
    %811 = vmatpush1.msra.mxu0 %v67
    %812 = vmatprep.subr.mxu0 %v71
    %813 = vmatpush1.msra.mxu0 %v70
    %814 = vmatprep.subr.mxu0 %v74
    %815 = vmatpush1.msra.mxu0 %v73
    %816 = vmatprep.subr.mxu0 %v77
    %817 = vmatpush1.msra.mxu0 %v76
    %818 = vmatprep.subr.mxu0 %v80
    %819 = vmatpush1.msra.mxu0 %v79
    %820 = vmatprep.subr.mxu0 %v83
    %821 = vmatpush1.msra.mxu0 %v82
    %822 = vmatprep.subr.mxu0 %v86
    %823 = vmatpush1.msra.mxu0 %v85
    %824 = vmatprep.subr.mxu0 %v89
    %825 = vmatpush1.msra.mxu0 %v88
    %826 = vmatprep.subr.mxu0 %v92
    %827 = vmatpush1.msra.mxu0 %v91
    %828 = vmatprep.subr.mxu0 0.0
    %829 = vmatpush1.msra.mxu0 0.0
    %830 = vmatprep.subr.mxu0 0.0
    %831 = vmatpush1.msra.mxu0 0.0
    %832 = vmatprep.subr.mxu0 0.0
    %833 = vmatpush1.msra.mxu0 0.0
    %834 = vmatprep.subr.mxu0 0.0
    %835 = vmatpush1.msra.mxu0 0.0
    %836 = vmatprep.subr.mxu0 0.0
    %837 = vmatpush1.msra.mxu0 0.0
    %838 = vmatprep.subr.mxu0 0.0
    %839 = vmatpush1.msra.mxu0 0.0
    %840 = vmatprep.subr.mxu0 0.0
    %841 = vmatpush1.msra.mxu0 0.0
    %842 = vmatprep.subr.mxu0 0.0
    %843 = vmatpush1.msra.mxu0 0.0
    %844 = vmatprep.subr.mxu0 0.0
    %845 = vmatpush1.msra.mxu0 0.0
    %846 = vmatprep.subr.mxu0 0.0
    %847 = vmatpush1.msra.mxu0 0.0
    %848 = vmatprep.subr.mxu0 0.0
    %849 = vmatpush1.msra.mxu0 0.0
    %850 = vmatprep.subr.mxu0 0.0
    %851 = vmatpush1.msra.mxu0 0.0
    %852 = vmatprep.subr.mxu0 0.0
    %853 = vmatpush1.msra.mxu0 0.0
    %854 = vmatprep.subr.mxu0 0.0
    %855 = vmatpush1.msra.mxu0 0.0
    %856 = vmatprep.subr.mxu0 0.0
    %857 = vmatpush1.msra.mxu0 0.0
    %858 = vmatprep.subr.mxu0 0.0
    %859 = vmatpush1.msra.mxu0 0.0
    %860 = vmatprep.mubr.f32.mxu0 0.0
    %861 = vmatmul.mubr.f32.gmra.mrb[0].mxu0 %v787
    %v862 = vpop.f32.mrb[0].mxu0
    %v863 = vadd.f32 %v105, %v862
    %v864 = vpop.f32.mrb[0].mxu0
    %v865 = vadd.f32 %v109, %v864
    %866 = vdwg.mxu0
    %867 = vmatprep.subr.mxu0 0.0
    %868 = vmatpush1.msra.mxu0 %v48
    %869 = vmatprep.subr.mxu0 0.0
    %870 = vmatpush1.msra.mxu0 %v51
    %871 = vmatprep.subr.mxu0 0.0
    %872 = vmatpush1.msra.mxu0 %v54
    %873 = vmatprep.subr.mxu0 0.0
    %874 = vmatpush1.msra.mxu0 %v57
    %875 = vmatprep.subr.mxu0 0.0
    %876 = vmatpush1.msra.mxu0 %v60
    %877 = vmatprep.subr.mxu0 0.0
    %878 = vmatpush1.msra.mxu0 %v63
    %879 = vmatprep.subr.mxu0 0.0
    %880 = vmatpush1.msra.mxu0 %v66
    %881 = vmatprep.subr.mxu0 0.0
    %882 = vmatpush1.msra.mxu0 %v69
    %883 = vmatprep.subr.mxu0 0.0
    %884 = vmatpush1.msra.mxu0 %v72
    %885 = vmatprep.subr.mxu0 0.0
    %886 = vmatpush1.msra.mxu0 %v75
    %887 = vmatprep.subr.mxu0 0.0
    %888 = vmatpush1.msra.mxu0 %v78
    %889 = vmatprep.subr.mxu0 0.0
    %890 = vmatpush1.msra.mxu0 %v81
    %891 = vmatprep.subr.mxu0 0.0
    %892 = vmatpush1.msra.mxu0 %v84
    %893 = vmatprep.subr.mxu0 0.0
    %894 = vmatpush1.msra.mxu0 %v87
    %895 = vmatprep.subr.mxu0 0.0
    %896 = vmatpush1.msra.mxu0 %v90
    %897 = vmatprep.subr.mxu0 0.0
    %898 = vmatpush1.msra.mxu0 %v93
    %899 = vmatprep.subr.mxu0 0.0
    %900 = vmatpush1.msra.mxu0 0.0
    %901 = vmatprep.subr.mxu0 0.0
    %902 = vmatpush1.msra.mxu0 0.0
    %903 = vmatprep.subr.mxu0 0.0
    %904 = vmatpush1.msra.mxu0 0.0
    %905 = vmatprep.subr.mxu0 0.0
    %906 = vmatpush1.msra.mxu0 0.0
    %907 = vmatprep.subr.mxu0 0.0
    %908 = vmatpush1.msra.mxu0 0.0
    %909 = vmatprep.subr.mxu0 0.0
    %910 = vmatpush1.msra.mxu0 0.0
    %911 = vmatprep.subr.mxu0 0.0
    %912 = vmatpush1.msra.mxu0 0.0
    %913 = vmatprep.subr.mxu0 0.0
    %914 = vmatpush1.msra.mxu0 0.0
    %915 = vmatprep.subr.mxu0 0.0
    %916 = vmatpush1.msra.mxu0 0.0
    %917 = vmatprep.subr.mxu0 0.0
    %918 = vmatpush1.msra.mxu0 0.0
    %919 = vmatprep.subr.mxu0 0.0
    %920 = vmatpush1.msra.mxu0 0.0
    %921 = vmatprep.subr.mxu0 0.0
    %922 = vmatpush1.msra.mxu0 0.0
    %923 = vmatprep.subr.mxu0 0.0
    %924 = vmatpush1.msra.mxu0 0.0
    %925 = vmatprep.subr.mxu0 0.0
    %926 = vmatpush1.msra.mxu0 0.0
    %927 = vmatprep.subr.mxu0 0.0
    %928 = vmatpush1.msra.mxu0 0.0
    %929 = vmatprep.subr.mxu0 0.0
    %930 = vmatpush1.msra.mxu0 0.0
    %931 = vmatprep.mubr.f32.mxu0 0.0
    %932 = vmatmul.mubr.f32.gmra.mrb[0].mxu0 %v787
    %v933 = vpop.f32.mrb[0].mxu0
    %v934 = vadd.f32 %v113, %v933
    %v935 = vpop.f32.mrb[0].mxu0
    %936 = vdwg.mxu0
    %v937 = vadd.f32 %v793, %v863
    %v938 = vxor.u32 %v937, 2147483648
    %v939 = vmul.f32 %v938, 1.442695
    %v940 = vpow.pop %v939
    %v941 = vadd.f32 %v940, 1.0
    %v942 = vrcp.pop %v941
    %v943 = vmul.f32 1.0, %v942
    %v944 = vadd.f32 %v794, %v865
    %v945 = vxor.u32 %v944, 2147483648
    %v946 = vmul.f32 %v945, 1.442695
    %v947 = vpow.pop %v946
    %v948 = vadd.f32 %v947, 1.0
    %v949 = vrcp.pop %v948
    %v950 = vmul.f32 1.0, %v949
    %v951 = vmul.f32 %v943, %v934
    %v952 = vadd.f32 %v795, %v951
    %v953 = vtanh.pop %v952
    %v954 = vsub.f32 1.0, %v950
    %v955 = vmul.f32 %v954, %v953
    %v956 = vmul.f32 %v950, %v787
    %v957 = vadd.f32 %v955, %v956
    %s958 = scalar_lea.vmem [#allocation3], 32
    %959 = vst [vmem:[%s958] sm:$0xff] %v957
    %s960 = smul.u32 5, 3
    %s961 = smul.addr %s960, 8
    %s962 = scalar_lea.vmem %s0, %s961
    %v963 = vld [vmem:[%s962] sm:$0xff]
    %v964 = vld [vmem:[%s962 + $0x8] sm:$0xff]
    %v965 = vld [vmem:[%s962 + $0x10] sm:$0xff]
    %966 = vmatprep.subr.mxu0 %v47
    %967 = vmatpush1.msra.mxu0 %v46
    %968 = vmatprep.subr.mxu0 %v50
    %969 = vmatpush1.msra.mxu0 %v49
    %970 = vmatprep.subr.mxu0 %v53
    %971 = vmatpush1.msra.mxu0 %v52
    %972 = vmatprep.subr.mxu0 %v56
    %973 = vmatpush1.msra.mxu0 %v55
    %974 = vmatprep.subr.mxu0 %v59
    %975 = vmatpush1.msra.mxu0 %v58
    %976 = vmatprep.subr.mxu0 %v62
    %977 = vmatpush1.msra.mxu0 %v61
    %978 = vmatprep.subr.mxu0 %v65
    %979 = vmatpush1.msra.mxu0 %v64
    %980 = vmatprep.subr.mxu0 %v68
    %981 = vmatpush1.msra.mxu0 %v67
    %982 = vmatprep.subr.mxu0 %v71
    %983 = vmatpush1.msra.mxu0 %v70
    %984 = vmatprep.subr.mxu0 %v74
    %985 = vmatpush1.msra.mxu0 %v73
    %986 = vmatprep.subr.mxu0 %v77
    %987 = vmatpush1.msra.mxu0 %v76
    %988 = vmatprep.subr.mxu0 %v80
    %989 = vmatpush1.msra.mxu0 %v79
    %990 = vmatprep.subr.mxu0 %v83
    %991 = vmatpush1.msra.mxu0 %v82
    %992 = vmatprep.subr.mxu0 %v86
    %993 = vmatpush1.msra.mxu0 %v85
    %994 = vmatprep.subr.mxu0 %v89
    %995 = vmatpush1.msra.mxu0 %v88
    %996 = vmatprep.subr.mxu0 %v92
    %997 = vmatpush1.msra.mxu0 %v91
    %998 = vmatprep.subr.mxu0 0.0
    %999 = vmatpush1.msra.mxu0 0.0
    %1000 = vmatprep.subr.mxu0 0.0
    %1001 = vmatpush1.msra.mxu0 0.0
    %1002 = vmatprep.subr.mxu0 0.0
    %1003 = vmatpush1.msra.mxu0 0.0
    %1004 = vmatprep.subr.mxu0 0.0
    %1005 = vmatpush1.msra.mxu0 0.0
    %1006 = vmatprep.subr.mxu0 0.0
    %1007 = vmatpush1.msra.mxu0 0.0
    %1008 = vmatprep.subr.mxu0 0.0
    %1009 = vmatpush1.msra.mxu0 0.0
    %1010 = vmatprep.subr.mxu0 0.0
    %1011 = vmatpush1.msra.mxu0 0.0
    %1012 = vmatprep.subr.mxu0 0.0
    %1013 = vmatpush1.msra.mxu0 0.0
    %1014 = vmatprep.subr.mxu0 0.0
    %1015 = vmatpush1.msra.mxu0 0.0
    %1016 = vmatprep.subr.mxu0 0.0
    %1017 = vmatpush1.msra.mxu0 0.0
    %1018 = vmatprep.subr.mxu0 0.0
    %1019 = vmatpush1.msra.mxu0 0.0
    %1020 = vmatprep.subr.mxu0 0.0
    %1021 = vmatpush1.msra.mxu0 0.0
    %1022 = vmatprep.subr.mxu0 0.0
    %1023 = vmatpush1.msra.mxu0 0.0
    %1024 = vmatprep.subr.mxu0 0.0
    %1025 = vmatpush1.msra.mxu0 0.0
    %1026 = vmatprep.subr.mxu0 0.0
    %1027 = vmatpush1.msra.mxu0 0.0
    %1028 = vmatprep.subr.mxu0 0.0
    %1029 = vmatpush1.msra.mxu0 0.0
    %1030 = vmatprep.mubr.f32.mxu0 0.0
    %1031 = vmatmul.mubr.f32.gmra.mrb[0].mxu0 %v957
    %v1032 = vpop.f32.mrb[0].mxu0
    %v1033 = vadd.f32 %v105, %v1032
    %v1034 = vpop.f32.mrb[0].mxu0
    %v1035 = vadd.f32 %v109, %v1034
    %1036 = vdwg.mxu0
    %1037 = vmatprep.subr.mxu0 0.0
    %1038 = vmatpush1.msra.mxu0 %v48
    %1039 = vmatprep.subr.mxu0 0.0
    %1040 = vmatpush1.msra.mxu0 %v51
    %1041 = vmatprep.subr.mxu0 0.0
    %1042 = vmatpush1.msra.mxu0 %v54
    %1043 = vmatprep.subr.mxu0 0.0
    %1044 = vmatpush1.msra.mxu0 %v57
    %1045 = vmatprep.subr.mxu0 0.0
    %1046 = vmatpush1.msra.mxu0 %v60
    %1047 = vmatprep.subr.mxu0 0.0
    %1048 = vmatpush1.msra.mxu0 %v63
    %1049 = vmatprep.subr.mxu0 0.0
    %1050 = vmatpush1.msra.mxu0 %v66
    %1051 = vmatprep.subr.mxu0 0.0
    %1052 = vmatpush1.msra.mxu0 %v69
    %1053 = vmatprep.subr.mxu0 0.0
    %1054 = vmatpush1.msra.mxu0 %v72
    %1055 = vmatprep.subr.mxu0 0.0
    %1056 = vmatpush1.msra.mxu0 %v75
    %1057 = vmatprep.subr.mxu0 0.0
    %1058 = vmatpush1.msra.mxu0 %v78
    %1059 = vmatprep.subr.mxu0 0.0
    %1060 = vmatpush1.msra.mxu0 %v81
    %1061 = vmatprep.subr.mxu0 0.0
    %1062 = vmatpush1.msra.mxu0 %v84
    %1063 = vmatprep.subr.mxu0 0.0
    %1064 = vmatpush1.msra.mxu0 %v87
    %1065 = vmatprep.subr.mxu0 0.0
    %1066 = vmatpush1.msra.mxu0 %v90
    %1067 = vmatprep.subr.mxu0 0.0
    %1068 = vmatpush1.msra.mxu0 %v93
    %1069 = vmatprep.subr.mxu0 0.0
    %1070 = vmatpush1.msra.mxu0 0.0
    %1071 = vmatprep.subr.mxu0 0.0
    %1072 = vmatpush1.msra.mxu0 0.0
    %1073 = vmatprep.subr.mxu0 0.0
    %1074 = vmatpush1.msra.mxu0 0.0
    %1075 = vmatprep.subr.mxu0 0.0
    %1076 = vmatpush1.msra.mxu0 0.0
    %1077 = vmatprep.subr.mxu0 0.0
    %1078 = vmatpush1.msra.mxu0 0.0
    %1079 = vmatprep.subr.mxu0 0.0
    %1080 = vmatpush1.msra.mxu0 0.0
    %1081 = vmatprep.subr.mxu0 0.0
    %1082 = vmatpush1.msra.mxu0 0.0
    %1083 = vmatprep.subr.mxu0 0.0
    %1084 = vmatpush1.msra.mxu0 0.0
    %1085 = vmatprep.subr.mxu0 0.0
    %1086 = vmatpush1.msra.mxu0 0.0
    %1087 = vmatprep.subr.mxu0 0.0
    %1088 = vmatpush1.msra.mxu0 0.0
    %1089 = vmatprep.subr.mxu0 0.0
    %1090 = vmatpush1.msra.mxu0 0.0
    %1091 = vmatprep.subr.mxu0 0.0
    %1092 = vmatpush1.msra.mxu0 0.0
    %1093 = vmatprep.subr.mxu0 0.0
    %1094 = vmatpush1.msra.mxu0 0.0
    %1095 = vmatprep.subr.mxu0 0.0
    %1096 = vmatpush1.msra.mxu0 0.0
    %1097 = vmatprep.subr.mxu0 0.0
    %1098 = vmatpush1.msra.mxu0 0.0
    %1099 = vmatprep.subr.mxu0 0.0
    %1100 = vmatpush1.msra.mxu0 0.0
    %1101 = vmatprep.mubr.f32.mxu0 0.0
    %1102 = vmatmul.mubr.f32.gmra.mrb[0].mxu0 %v957
    %v1103 = vpop.f32.mrb[0].mxu0
    %v1104 = vadd.f32 %v113, %v1103
    %v1105 = vpop.f32.mrb[0].mxu0
    %1106 = vdwg.mxu0
    %v1107 = vadd.f32 %v963, %v1033
    %v1108 = vxor.u32 %v1107, 2147483648
    %v1109 = vmul.f32 %v1108, 1.442695
    %v1110 = vpow.pop %v1109
    %v1111 = vadd.f32 %v1110, 1.0
    %v1112 = vrcp.pop %v1111
    %v1113 = vmul.f32 1.0, %v1112
    %v1114 = vadd.f32 %v964, %v1035
    %v1115 = vxor.u32 %v1114, 2147483648
    %v1116 = vmul.f32 %v1115, 1.442695
    %v1117 = vpow.pop %v1116
    %v1118 = vadd.f32 %v1117, 1.0
    %v1119 = vrcp.pop %v1118
    %v1120 = vmul.f32 1.0, %v1119
    %v1121 = vmul.f32 %v1113, %v1104
    %v1122 = vadd.f32 %v965, %v1121
    %v1123 = vtanh.pop %v1122
    %v1124 = vsub.f32 1.0, %v1120
    %v1125 = vmul.f32 %v1124, %v1123
    %v1126 = vmul.f32 %v1120, %v957
    %v1127 = vadd.f32 %v1125, %v1126
    %s1128 = scalar_lea.vmem [#allocation3], 40
    %1129 = vst [vmem:[%s1128] sm:$0xff] %v1127
    %s1130 = smul.u32 6, 3
    %s1131 = smul.addr %s1130, 8
    %s1132 = scalar_lea.vmem %s0, %s1131
    %v1133 = vld [vmem:[%s1132] sm:$0xff]
    %v1134 = vld [vmem:[%s1132 + $0x8] sm:$0xff]
    %v1135 = vld [vmem:[%s1132 + $0x10] sm:$0xff]
    %1136 = vmatprep.subr.mxu0 %v47
    %1137 = vmatpush1.msra.mxu0 %v46
    %1138 = vmatprep.subr.mxu0 %v50
    %1139 = vmatpush1.msra.mxu0 %v49
    %1140 = vmatprep.subr.mxu0 %v53
    %1141 = vmatpush1.msra.mxu0 %v52
    %1142 = vmatprep.subr.mxu0 %v56
    %1143 = vmatpush1.msra.mxu0 %v55
    %1144 = vmatprep.subr.mxu0 %v59
    %1145 = vmatpush1.msra.mxu0 %v58
    %1146 = vmatprep.subr.mxu0 %v62
    %1147 = vmatpush1.msra.mxu0 %v61
    %1148 = vmatprep.subr.mxu0 %v65
    %1149 = vmatpush1.msra.mxu0 %v64
    %1150 = vmatprep.subr.mxu0 %v68
    %1151 = vmatpush1.msra.mxu0 %v67
    %1152 = vmatprep.subr.mxu0 %v71
    %1153 = vmatpush1.msra.mxu0 %v70
    %1154 = vmatprep.subr.mxu0 %v74
    %1155 = vmatpush1.msra.mxu0 %v73
    %1156 = vmatprep.subr.mxu0 %v77
    %1157 = vmatpush1.msra.mxu0 %v76
    %1158 = vmatprep.subr.mxu0 %v80
    %1159 = vmatpush1.msra.mxu0 %v79
    %1160 = vmatprep.subr.mxu0 %v83
    %1161 = vmatpush1.msra.mxu0 %v82
    %1162 = vmatprep.subr.mxu0 %v86
    %1163 = vmatpush1.msra.mxu0 %v85
    %1164 = vmatprep.subr.mxu0 %v89
    %1165 = vmatpush1.msra.mxu0 %v88
    %1166 = vmatprep.subr.mxu0 %v92
    %1167 = vmatpush1.msra.mxu0 %v91
    %1168 = vmatprep.subr.mxu0 0.0
    %1169 = vmatpush1.msra.mxu0 0.0
    %1170 = vmatprep.subr.mxu0 0.0
    %1171 = vmatpush1.msra.mxu0 0.0
    %1172 = vmatprep.subr.mxu0 0.0
    %1173 = vmatpush1.msra.mxu0 0.0
    %1174 = vmatprep.subr.mxu0 0.0
    %1175 = vmatpush1.msra.mxu0 0.0
    %1176 = vmatprep.subr.mxu0 0.0
    %1177 = vmatpush1.msra.mxu0 0.0
    %1178 = vmatprep.subr.mxu0 0.0
    %1179 = vmatpush1.msra.mxu0 0.0
    %1180 = vmatprep.subr.mxu0 0.0
    %1181 = vmatpush1.msra.mxu0 0.0
    %1182 = vmatprep.subr.mxu0 0.0
    %1183 = vmatpush1.msra.mxu0 0.0
    %1184 = vmatprep.subr.mxu0 0.0
    %1185 = vmatpush1.msra.mxu0 0.0
    %1186 = vmatprep.subr.mxu0 0.0
    %1187 = vmatpush1.msra.mxu0 0.0
    %1188 = vmatprep.subr.mxu0 0.0
    %1189 = vmatpush1.msra.mxu0 0.0
    %1190 = vmatprep.subr.mxu0 0.0
    %1191 = vmatpush1.msra.mxu0 0.0
    %1192 = vmatprep.subr.mxu0 0.0
    %1193 = vmatpush1.msra.mxu0 0.0
    %1194 = vmatprep.subr.mxu0 0.0
    %1195 = vmatpush1.msra.mxu0 0.0
    %1196 = vmatprep.subr.mxu0 0.0
    %1197 = vmatpush1.msra.mxu0 0.0
    %1198 = vmatprep.subr.mxu0 0.0
    %1199 = vmatpush1.msra.mxu0 0.0
    %1200 = vmatprep.mubr.f32.mxu0 0.0
    %1201 = vmatmul.mubr.f32.gmra.mrb[0].mxu0 %v1127
    %v1202 = vpop.f32.mrb[0].mxu0
    %v1203 = vadd.f32 %v105, %v1202
    %v1204 = vpop.f32.mrb[0].mxu0
    %v1205 = vadd.f32 %v109, %v1204
    %1206 = vdwg.mxu0
    %1207 = vmatprep.subr.mxu0 0.0
    %1208 = vmatpush1.msra.mxu0 %v48
    %1209 = vmatprep.subr.mxu0 0.0
    %1210 = vmatpush1.msra.mxu0 %v51
    %1211 = vmatprep.subr.mxu0 0.0
    %1212 = vmatpush1.msra.mxu0 %v54
    %1213 = vmatprep.subr.mxu0 0.0
    %1214 = vmatpush1.msra.mxu0 %v57
    %1215 = vmatprep.subr.mxu0 0.0
    %1216 = vmatpush1.msra.mxu0 %v60
    %1217 = vmatprep.subr.mxu0 0.0
    %1218 = vmatpush1.msra.mxu0 %v63
    %1219 = vmatprep.subr.mxu0 0.0
    %1220 = vmatpush1.msra.mxu0 %v66
    %1221 = vmatprep.subr.mxu0 0.0
    %1222 = vmatpush1.msra.mxu0 %v69
    %1223 = vmatprep.subr.mxu0 0.0
    %1224 = vmatpush1.msra.mxu0 %v72
    %1225 = vmatprep.subr.mxu0 0.0
    %1226 = vmatpush1.msra.mxu0 %v75
    %1227 = vmatprep.subr.mxu0 0.0
    %1228 = vmatpush1.msra.mxu0 %v78
    %1229 = vmatprep.subr.mxu0 0.0
    %1230 = vmatpush1.msra.mxu0 %v81
    %1231 = vmatprep.subr.mxu0 0.0
    %1232 = vmatpush1.msra.mxu0 %v84
    %1233 = vmatprep.subr.mxu0 0.0
    %1234 = vmatpush1.msra.mxu0 %v87
    %1235 = vmatprep.subr.mxu0 0.0
    %1236 = vmatpush1.msra.mxu0 %v90
    %1237 = vmatprep.subr.mxu0 0.0
    %1238 = vmatpush1.msra.mxu0 %v93
    %1239 = vmatprep.subr.mxu0 0.0
    %1240 = vmatpush1.msra.mxu0 0.0
    %1241 = vmatprep.subr.mxu0 0.0
    %1242 = vmatpush1.msra.mxu0 0.0
    %1243 = vmatprep.subr.mxu0 0.0
    %1244 = vmatpush1.msra.mxu0 0.0
    %1245 = vmatprep.subr.mxu0 0.0
    %1246 = vmatpush1.msra.mxu0 0.0
    %1247 = vmatprep.subr.mxu0 0.0
    %1248 = vmatpush1.msra.mxu0 0.0
    %1249 = vmatprep.subr.mxu0 0.0
    %1250 = vmatpush1.msra.mxu0 0.0
    %1251 = vmatprep.subr.mxu0 0.0
    %1252 = vmatpush1.msra.mxu0 0.0
    %1253 = vmatprep.subr.mxu0 0.0
    %1254 = vmatpush1.msra.mxu0 0.0
    %1255 = vmatprep.subr.mxu0 0.0
    %1256 = vmatpush1.msra.mxu0 0.0
    %1257 = vmatprep.subr.mxu0 0.0
    %1258 = vmatpush1.msra.mxu0 0.0
    %1259 = vmatprep.subr.mxu0 0.0
    %1260 = vmatpush1.msra.mxu0 0.0
    %1261 = vmatprep.subr.mxu0 0.0
    %1262 = vmatpush1.msra.mxu0 0.0
    %1263 = vmatprep.subr.mxu0 0.0
    %1264 = vmatpush1.msra.mxu0 0.0
    %1265 = vmatprep.subr.mxu0 0.0
    %1266 = vmatpush1.msra.mxu0 0.0
    %1267 = vmatprep.subr.mxu0 0.0
    %1268 = vmatpush1.msra.mxu0 0.0
    %1269 = vmatprep.subr.mxu0 0.0
    %1270 = vmatpush1.msra.mxu0 0.0
    %1271 = vmatprep.mubr.f32.mxu0 0.0
    %1272 = vmatmul.mubr.f32.gmra.mrb[0].mxu0 %v1127
    %v1273 = vpop.f32.mrb[0].mxu0
    %v1274 = vadd.f32 %v113, %v1273
    %v1275 = vpop.f32.mrb[0].mxu0
    %1276 = vdwg.mxu0
    %v1277 = vadd.f32 %v1133, %v1203
    %v1278 = vxor.u32 %v1277, 2147483648
    %v1279 = vmul.f32 %v1278, 1.442695
    %v1280 = vpow.pop %v1279
    %v1281 = vadd.f32 %v1280, 1.0
    %v1282 = vrcp.pop %v1281
    %v1283 = vmul.f32 1.0, %v1282
    %v1284 = vadd.f32 %v1134, %v1205
    %v1285 = vxor.u32 %v1284, 2147483648
    %v1286 = vmul.f32 %v1285, 1.442695
    %v1287 = vpow.pop %v1286
    %v1288 = vadd.f32 %v1287, 1.0
    %v1289 = vrcp.pop %v1288
    %v1290 = vmul.f32 1.0, %v1289
    %v1291 = vmul.f32 %v1283, %v1274
    %v1292 = vadd.f32 %v1135, %v1291
    %v1293 = vtanh.pop %v1292
    %v1294 = vsub.f32 1.0, %v1290
    %v1295 = vmul.f32 %v1294, %v1293
    %v1296 = vmul.f32 %v1290, %v1127
    %v1297 = vadd.f32 %v1295, %v1296
    %s1298 = scalar_lea.vmem [#allocation3], 48
    %1299 = vst [vmem:[%s1298] sm:$0xff] %v1297
    %s1300 = smul.u32 7, 3
    %s1301 = smul.addr %s1300, 8
    %s1302 = scalar_lea.vmem %s0, %s1301
    %v1303 = vld [vmem:[%s1302] sm:$0xff]
    %v1304 = vld [vmem:[%s1302 + $0x8] sm:$0xff]
    %v1305 = vld [vmem:[%s1302 + $0x10] sm:$0xff]
    %1306 = vmatprep.subr.mxu0 %v47
    %1307 = vmatpush1.msra.mxu0 %v46
    %1308 = vmatprep.subr.mxu0 %v50
    %1309 = vmatpush1.msra.mxu0 %v49
    %1310 = vmatprep.subr.mxu0 %v53
    %1311 = vmatpush1.msra.mxu0 %v52
    %1312 = vmatprep.subr.mxu0 %v56
    %1313 = vmatpush1.msra.mxu0 %v55
    %1314 = vmatprep.subr.mxu0 %v59
    %1315 = vmatpush1.msra.mxu0 %v58
    %1316 = vmatprep.subr.mxu0 %v62
    %1317 = vmatpush1.msra.mxu0 %v61
    %1318 = vmatprep.subr.mxu0 %v65
    %1319 = vmatpush1.msra.mxu0 %v64
    %1320 = vmatprep.subr.mxu0 %v68
    %1321 = vmatpush1.msra.mxu0 %v67
    %1322 = vmatprep.subr.mxu0 %v71
    %1323 = vmatpush1.msra.mxu0 %v70
    %1324 = vmatprep.subr.mxu0 %v74
    %1325 = vmatpush1.msra.mxu0 %v73
    %1326 = vmatprep.subr.mxu0 %v77
    %1327 = vmatpush1.msra.mxu0 %v76
    %1328 = vmatprep.subr.mxu0 %v80
    %1329 = vmatpush1.msra.mxu0 %v79
    %1330 = vmatprep.subr.mxu0 %v83
    %1331 = vmatpush1.msra.mxu0 %v82
    %1332 = vmatprep.subr.mxu0 %v86
    %1333 = vmatpush1.msra.mxu0 %v85
    %1334 = vmatprep.subr.mxu0 %v89
    %1335 = vmatpush1.msra.mxu0 %v88
    %1336 = vmatprep.subr.mxu0 %v92
    %1337 = vmatpush1.msra.mxu0 %v91
    %1338 = vmatprep.subr.mxu0 0.0
    %1339 = vmatpush1.msra.mxu0 0.0
    %1340 = vmatprep.subr.mxu0 0.0
    %1341 = vmatpush1.msra.mxu0 0.0
    %1342 = vmatprep.subr.mxu0 0.0
    %1343 = vmatpush1.msra.mxu0 0.0
    %1344 = vmatprep.subr.mxu0 0.0
    %1345 = vmatpush1.msra.mxu0 0.0
    %1346 = vmatprep.subr.mxu0 0.0
    %1347 = vmatpush1.msra.mxu0 0.0
    %1348 = vmatprep.subr.mxu0 0.0
    %1349 = vmatpush1.msra.mxu0 0.0
    %1350 = vmatprep.subr.mxu0 0.0
    %1351 = vmatpush1.msra.mxu0 0.0
    %1352 = vmatprep.subr.mxu0 0.0
    %1353 = vmatpush1.msra.mxu0 0.0
    %1354 = vmatprep.subr.mxu0 0.0
    %1355 = vmatpush1.msra.mxu0 0.0
    %1356 = vmatprep.subr.mxu0 0.0
    %1357 = vmatpush1.msra.mxu0 0.0
    %1358 = vmatprep.subr.mxu0 0.0
    %1359 = vmatpush1.msra.mxu0 0.0
    %1360 = vmatprep.subr.mxu0 0.0
    %1361 = vmatpush1.msra.mxu0 0.0
    %1362 = vmatprep.subr.mxu0 0.0
    %1363 = vmatpush1.msra.mxu0 0.0
    %1364 = vmatprep.subr.mxu0 0.0
    %1365 = vmatpush1.msra.mxu0 0.0
    %1366 = vmatprep.subr.mxu0 0.0
    %1367 = vmatpush1.msra.mxu0 0.0
    %1368 = vmatprep.subr.mxu0 0.0
    %1369 = vmatpush1.msra.mxu0 0.0
    %1370 = vmatprep.mubr.f32.mxu0 0.0
    %1371 = vmatmul.mubr.f32.gmra.mrb[0].mxu0 %v1297
    %v1372 = vpop.f32.mrb[0].mxu0
    %v1373 = vadd.f32 %v105, %v1372
    %v1374 = vpop.f32.mrb[0].mxu0
    %v1375 = vadd.f32 %v109, %v1374
    %1376 = vdwg.mxu0
    %1377 = vmatprep.subr.mxu0 0.0
    %1378 = vmatpush1.msra.mxu0 %v48
    %1379 = vmatprep.subr.mxu0 0.0
    %1380 = vmatpush1.msra.mxu0 %v51
    %1381 = vmatprep.subr.mxu0 0.0
    %1382 = vmatpush1.msra.mxu0 %v54
    %1383 = vmatprep.subr.mxu0 0.0
    %1384 = vmatpush1.msra.mxu0 %v57
    %1385 = vmatprep.subr.mxu0 0.0
    %1386 = vmatpush1.msra.mxu0 %v60
    %1387 = vmatprep.subr.mxu0 0.0
    %1388 = vmatpush1.msra.mxu0 %v63
    %1389 = vmatprep.subr.mxu0 0.0
    %1390 = vmatpush1.msra.mxu0 %v66
    %1391 = vmatprep.subr.mxu0 0.0
    %1392 = vmatpush1.msra.mxu0 %v69
    %1393 = vmatprep.subr.mxu0 0.0
    %1394 = vmatpush1.msra.mxu0 %v72
    %1395 = vmatprep.subr.mxu0 0.0
    %1396 = vmatpush1.msra.mxu0 %v75
    %1397 = vmatprep.subr.mxu0 0.0
    %1398 = vmatpush1.msra.mxu0 %v78
    %1399 = vmatprep.subr.mxu0 0.0
    %1400 = vmatpush1.msra.mxu0 %v81
    %1401 = vmatprep.subr.mxu0 0.0
    %1402 = vmatpush1.msra.mxu0 %v84
    %1403 = vmatprep.subr.mxu0 0.0
    %1404 = vmatpush1.msra.mxu0 %v87
    %1405 = vmatprep.subr.mxu0 0.0
    %1406 = vmatpush1.msra.mxu0 %v90
    %1407 = vmatprep.subr.mxu0 0.0
    %1408 = vmatpush1.msra.mxu0 %v93
    %1409 = vmatprep.subr.mxu0 0.0
    %1410 = vmatpush1.msra.mxu0 0.0
    %1411 = vmatprep.subr.mxu0 0.0
    %1412 = vmatpush1.msra.mxu0 0.0
    %1413 = vmatprep.subr.mxu0 0.0
    %1414 = vmatpush1.msra.mxu0 0.0
    %1415 = vmatprep.subr.mxu0 0.0
    %1416 = vmatpush1.msra.mxu0 0.0
    %1417 = vmatprep.subr.mxu0 0.0
    %1418 = vmatpush1.msra.mxu0 0.0
    %1419 = vmatprep.subr.mxu0 0.0
    %1420 = vmatpush1.msra.mxu0 0.0
    %1421 = vmatprep.subr.mxu0 0.0
    %1422 = vmatpush1.msra.mxu0 0.0
    %1423 = vmatprep.subr.mxu0 0.0
    %1424 = vmatpush1.msra.mxu0 0.0
    %1425 = vmatprep.subr.mxu0 0.0
    %1426 = vmatpush1.msra.mxu0 0.0
    %1427 = vmatprep.subr.mxu0 0.0
    %1428 = vmatpush1.msra.mxu0 0.0
    %1429 = vmatprep.subr.mxu0 0.0
    %1430 = vmatpush1.msra.mxu0 0.0
    %1431 = vmatprep.subr.mxu0 0.0
    %1432 = vmatpush1.msra.mxu0 0.0
    %1433 = vmatprep.subr.mxu0 0.0
    %1434 = vmatpush1.msra.mxu0 0.0
    %1435 = vmatprep.subr.mxu0 0.0
    %1436 = vmatpush1.msra.mxu0 0.0
    %1437 = vmatprep.subr.mxu0 0.0
    %1438 = vmatpush1.msra.mxu0 0.0
    %1439 = vmatprep.subr.mxu0 0.0
    %1440 = vmatpush1.msra.mxu0 0.0
    %1441 = vmatprep.mubr.f32.mxu0 0.0
    %1442 = vmatmul.mubr.f32.gmra.mrb[0].mxu0 %v1297
    %v1443 = vpop.f32.mrb[0].mxu0
    %v1444 = vadd.f32 %v113, %v1443
    %v1445 = vpop.f32.mrb[0].mxu0
    %1446 = vdwg.mxu0
    %v1447 = vadd.f32 %v1303, %v1373
    %v1448 = vxor.u32 %v1447, 2147483648
    %v1449 = vmul.f32 %v1448, 1.442695
    %v1450 = vpow.pop %v1449
    %v1451 = vadd.f32 %v1450, 1.0
    %v1452 = vrcp.pop %v1451
    %v1453 = vmul.f32 1.0, %v1452
    %v1454 = vadd.f32 %v1304, %v1375
    %v1455 = vxor.u32 %v1454, 2147483648
    %v1456 = vmul.f32 %v1455, 1.442695
    %v1457 = vpow.pop %v1456
    %v1458 = vadd.f32 %v1457, 1.0
    %v1459 = vrcp.pop %v1458
    %v1460 = vmul.f32 1.0, %v1459
    %v1461 = vmul.f32 %v1453, %v1444
    %v1462 = vadd.f32 %v1305, %v1461
    %v1463 = vtanh.pop %v1462
    %v1464 = vsub.f32 1.0, %v1460
    %v1465 = vmul.f32 %v1464, %v1463
    %v1466 = vmul.f32 %v1460, %v1297
    %v1467 = vadd.f32 %v1465, %v1466
    %s1468 = scalar_lea.vmem [#allocation3], 56
    %1469 = vst [vmem:[%s1468] sm:$0xff] %v1467
    %v1470 = vld [vmem:[#allocation3] sm:$0xff]
    %v1471 = vld [vmem:[#allocation3 + $0x8] sm:$0xff]
    %v1472 = vld [vmem:[#allocation3 + $0x10] sm:$0xff]
    %v1473 = vld [vmem:[#allocation3 + $0x18] sm:$0xff]
    %v1474 = vld [vmem:[#allocation3 + $0x20] sm:$0xff]
    %v1475 = vld [vmem:[#allocation3 + $0x28] sm:$0xff]
    %v1476 = vld [vmem:[#allocation3 + $0x30] sm:$0xff]
    %v1477 = vld [vmem:[#allocation3 + $0x38] sm:$0xff]
    %v1478 = vld [vmem:[%s3] sm:$0xff]
    %v1479 = vld [vmem:[%s3 + $0x8] sm:$0xff]
    %v1480 = vld [vmem:[%s3 + $0x10] sm:$0xff]
    %v1481 = vld [vmem:[%s3 + $0x18] sm:$0xff]
    %v1482 = vld [vmem:[%s3 + $0x20] sm:$0xff]
    %v1483 = vld [vmem:[%s3 + $0x28] sm:$0xff]
    %v1484 = vld [vmem:[%s3 + $0x30] sm:$0xff]
    %v1485 = vld [vmem:[%s3 + $0x38] sm:$0xff]
    %v1486 = vld [vmem:[%s3 + $0x40] sm:$0xff]
    %v1487 = vld [vmem:[%s3 + $0x48] sm:$0xff]
    %v1488 = vld [vmem:[%s3 + $0x50] sm:$0xff]
    %v1489 = vld [vmem:[%s3 + $0x58] sm:$0xff]
    %v1490 = vld [vmem:[%s3 + $0x60] sm:$0xff]
    %v1491 = vld [vmem:[%s3 + $0x68] sm:$0xff]
    %v1492 = vld [vmem:[%s3 + $0x70] sm:$0xff]
    %v1493 = vld [vmem:[%s3 + $0x78] sm:$0xff]
    %v1494 = vld [vmem:[%s3 + $0x80] sm:$0xff]
    %v1495 = vld [vmem:[%s3 + $0x88] sm:$0xff]
    %v1496 = vld [vmem:[%s3 + $0x90] sm:$0xff]
    %v1497 = vld [vmem:[%s3 + $0x98] sm:$0xff]
    %v1498 = vld [vmem:[%s3 + $0xa0] sm:$0xff]
    %v1499 = vld [vmem:[%s3 + $0xa8] sm:$0xff]
    %v1500 = vld [vmem:[%s3 + $0xb0] sm:$0xff]
    %v1501 = vld [vmem:[%s3 + $0xb8] sm:$0xff]
    %v1502 = vld [vmem:[%s3 + $0xc0] sm:$0xff]
    %v1503 = vld [vmem:[%s3 + $0xc8] sm:$0xff]
    %v1504 = vld [vmem:[%s3 + $0xd0] sm:$0xff]
    %v1505 = vld [vmem:[%s3 + $0xd8] sm:$0xff]
    %v1506 = vld [vmem:[%s3 + $0xe0] sm:$0xff]
    %v1507 = vld [vmem:[%s3 + $0xe8] sm:$0xff]
    %v1508 = vld [vmem:[%s3 + $0xf0] sm:$0xff]
    %v1509 = vld [vmem:[%s3 + $0xf8] sm:$0xff]
    %v1510 = vld [vmem:[%s3 + $0x100] sm:$0xff]
    %v1511 = vld [vmem:[%s3 + $0x108] sm:$0xff]
    %v1512 = vld [vmem:[%s3 + $0x110] sm:$0xff]
    %v1513 = vld [vmem:[%s3 + $0x118] sm:$0xff]
    %v1514 = vld [vmem:[%s3 + $0x120] sm:$0xff]
    %v1515 = vld [vmem:[%s3 + $0x128] sm:$0xff]
    %v1516 = vld [vmem:[%s3 + $0x130] sm:$0xff]
    %v1517 = vld [vmem:[%s3 + $0x138] sm:$0xff]
    %v1518 = vld [vmem:[%s3 + $0x140] sm:$0xff]
    %v1519 = vld [vmem:[%s3 + $0x148] sm:$0xff]
    %v1520 = vld [vmem:[%s3 + $0x150] sm:$0xff]
    %v1521 = vld [vmem:[%s3 + $0x158] sm:$0xff]
    %v1522 = vld [vmem:[%s3 + $0x160] sm:$0xff]
    %v1523 = vld [vmem:[%s3 + $0x168] sm:$0xff]
    %v1524 = vld [vmem:[%s3 + $0x170] sm:$0xff]
    %v1525 = vld [vmem:[%s3 + $0x178] sm:$0xff]
    %v1526 = vld [vmem:[%s5] sm:$0x7]
    %v1528 = vlaneseq
    %v1529 = vshrl.u32 %v1528, 7
    %v1530 = vsub.s32 0, %v1529
    %v1531 = vrot.slane %v1526, %v1530
    %v1532 = vlaneseq
    %v1533 = vshrl.u32 %v1532, 7
    %v1534 = vsub.s32 1, %v1533
    %v1535 = vrot.slane %v1526, %v1534
    %v1536 = vlaneseq
    %v1537 = vshrl.u32 %v1536, 7
    %v1538 = vsub.s32 2, %v1537
    %v1539 = vrot.slane %v1526, %v1538
    %1543 = vmatprep.subr.mxu0 %v1479
    %1544 = vmatpush1.msra.mxu0 %v1478
    %1545 = vmatprep.subr.mxu0 %v1482
    %1546 = vmatpush1.msra.mxu0 %v1481
    %1547 = vmatprep.subr.mxu0 %v1485
    %1548 = vmatpush1.msra.mxu0 %v1484
    %1549 = vmatprep.subr.mxu0 %v1488
    %1550 = vmatpush1.msra.mxu0 %v1487
    %1551 = vmatprep.subr.mxu0 %v1491
    %1552 = vmatpush1.msra.mxu0 %v1490
    %1553 = vmatprep.subr.mxu0 %v1494
    %1554 = vmatpush1.msra.mxu0 %v1493
    %1555 = vmatprep.subr.mxu0 %v1497
    %1556 = vmatpush1.msra.mxu0 %v1496
    %1557 = vmatprep.subr.mxu0 %v1500
    %1558 = vmatpush1.msra.mxu0 %v1499
    %1559 = vmatprep.subr.mxu0 %v1503
    %1560 = vmatpush1.msra.mxu0 %v1502
    %1561 = vmatprep.subr.mxu0 %v1506
    %1562 = vmatpush1.msra.mxu0 %v1505
    %1563 = vmatprep.subr.mxu0 %v1509
    %1564 = vmatpush1.msra.mxu0 %v1508
    %1565 = vmatprep.subr.mxu0 %v1512
    %1566 = vmatpush1.msra.mxu0 %v1511
    %1567 = vmatprep.subr.mxu0 %v1515
    %1568 = vmatpush1.msra.mxu0 %v1514
    %1569 = vmatprep.subr.mxu0 %v1518
    %1570 = vmatpush1.msra.mxu0 %v1517
    %1571 = vmatprep.subr.mxu0 %v1521
    %1572 = vmatpush1.msra.mxu0 %v1520
    %1573 = vmatprep.subr.mxu0 %v1524
    %1574 = vmatpush1.msra.mxu0 %v1523
    %1575 = vmatprep.subr.mxu0 0.0
    %1576 = vmatpush1.msra.mxu0 0.0
    %1577 = vmatprep.subr.mxu0 0.0
    %1578 = vmatpush1.msra.mxu0 0.0
    %1579 = vmatprep.subr.mxu0 0.0
    %1580 = vmatpush1.msra.mxu0 0.0
    %1581 = vmatprep.subr.mxu0 0.0
    %1582 = vmatpush1.msra.mxu0 0.0
    %1583 = vmatprep.subr.mxu0 0.0
    %1584 = vmatpush1.msra.mxu0 0.0
    %1585 = vmatprep.subr.mxu0 0.0
    %1586 = vmatpush1.msra.mxu0 0.0
    %1587 = vmatprep.subr.mxu0 0.0
    %1588 = vmatpush1.msra.mxu0 0.0
    %1589 = vmatprep.subr.mxu0 0.0
    %1590 = vmatpush1.msra.mxu0 0.0
    %1591 = vmatprep.subr.mxu0 0.0
    %1592 = vmatpush1.msra.mxu0 0.0
    %1593 = vmatprep.subr.mxu0 0.0
    %1594 = vmatpush1.msra.mxu0 0.0
    %1595 = vmatprep.subr.mxu0 0.0
    %1596 = vmatpush1.msra.mxu0 0.0
    %1597 = vmatprep.subr.mxu0 0.0
    %1598 = vmatpush1.msra.mxu0 0.0
    %1599 = vmatprep.subr.mxu0 0.0
    %1600 = vmatpush1.msra.mxu0 0.0
    %1601 = vmatprep.subr.mxu0 0.0
    %1602 = vmatpush1.msra.mxu0 0.0
    %1603 = vmatprep.subr.mxu0 0.0
    %1604 = vmatpush1.msra.mxu0 0.0
    %1605 = vmatprep.subr.mxu0 0.0
    %1606 = vmatpush1.msra.mxu0 0.0
    %1607 = vmatprep.mubr.f32.mxu0 0.0
    %1608 = vmatmul.mubr.f32.gmra.mrb[0].mxu0 %v1470
    %v1609 = vpop.f32.mrb[0].mxu0
    %v1610 = vadd.f32 %v1531, %v1609
    %v1611 = vpop.f32.mrb[0].mxu0
    %v1612 = vadd.f32 %v1535, %v1611
    %1613 = vmatprep.mubr.f32.mxu0 0.0
    %1614 = vmatmul.mubr.f32.gmra.mrb[0].mxu0 %v1471
    %v1615 = vpop.f32.mrb[0].mxu0
    %v1616 = vadd.f32 %v1531, %v1615
    %v1617 = vpop.f32.mrb[0].mxu0
    %v1618 = vadd.f32 %v1535, %v1617
    %1619 = vmatprep.mubr.f32.mxu0 0.0
    %1620 = vmatmul.mubr.f32.gmra.mrb[0].mxu0 %v1472
    %v1621 = vpop.f32.mrb[0].mxu0
    %v1622 = vadd.f32 %v1531, %v1621
    %v1623 = vpop.f32.mrb[0].mxu0
    %v1624 = vadd.f32 %v1535, %v1623
    %1625 = vmatprep.mubr.f32.mxu0 0.0
    %1626 = vmatmul.mubr.f32.gmra.mrb[0].mxu0 %v1473
    %v1627 = vpop.f32.mrb[0].mxu0
    %v1628 = vadd.f32 %v1531, %v1627
    %v1629 = vpop.f32.mrb[0].mxu0
    %v1630 = vadd.f32 %v1535, %v1629
    %1631 = vmatprep.mubr.f32.mxu0 0.0
    %1632 = vmatmul.mubr.f32.gmra.mrb[0].mxu0 %v1474
    %v1633 = vpop.f32.mrb[0].mxu0
    %v1634 = vadd.f32 %v1531, %v1633
    %v1635 = vpop.f32.mrb[0].mxu0
    %v1636 = vadd.f32 %v1535, %v1635
    %1637 = vmatprep.mubr.f32.mxu0 0.0
    %1638 = vmatmul.mubr.f32.gmra.mrb[0].mxu0 %v1475
    %v1639 = vpop.f32.mrb[0].mxu0
    %v1640 = vadd.f32 %v1531, %v1639
    %v1641 = vpop.f32.mrb[0].mxu0
    %v1642 = vadd.f32 %v1535, %v1641
    %1643 = vmatprep.mubr.f32.mxu0 0.0
    %1644 = vmatmul.mubr.f32.gmra.mrb[0].mxu0 %v1476
    %v1645 = vpop.f32.mrb[0].mxu0
    %v1646 = vadd.f32 %v1531, %v1645
    %v1647 = vpop.f32.mrb[0].mxu0
    %v1648 = vadd.f32 %v1535, %v1647
    %1649 = vmatprep.mubr.f32.mxu0 0.0
    %1650 = vmatmul.mubr.f32.gmra.mrb[0].mxu0 %v1477
    %v1651 = vpop.f32.mrb[0].mxu0
    %v1652 = vadd.f32 %v1531, %v1651
    %v1653 = vpop.f32.mrb[0].mxu0
    %v1654 = vadd.f32 %v1535, %v1653
    %1655 = vdwg.mxu0
    %1656 = vmatprep.subr.mxu0 0.0
    %1657 = vmatpush1.msra.mxu0 %v1480
    %1658 = vmatprep.subr.mxu0 0.0
    %1659 = vmatpush1.msra.mxu0 %v1483
    %1660 = vmatprep.subr.mxu0 0.0
    %1661 = vmatpush1.msra.mxu0 %v1486
    %1662 = vmatprep.subr.mxu0 0.0
    %1663 = vmatpush1.msra.mxu0 %v1489
    %1664 = vmatprep.subr.mxu0 0.0
    %1665 = vmatpush1.msra.mxu0 %v1492
    %1666 = vmatprep.subr.mxu0 0.0
    %1667 = vmatpush1.msra.mxu0 %v1495
    %1668 = vmatprep.subr.mxu0 0.0
    %1669 = vmatpush1.msra.mxu0 %v1498
    %1670 = vmatprep.subr.mxu0 0.0
    %1671 = vmatpush1.msra.mxu0 %v1501
    %1672 = vmatprep.subr.mxu0 0.0
    %1673 = vmatpush1.msra.mxu0 %v1504
    %1674 = vmatprep.subr.mxu0 0.0
    %1675 = vmatpush1.msra.mxu0 %v1507
    %1676 = vmatprep.subr.mxu0 0.0
    %1677 = vmatpush1.msra.mxu0 %v1510
    %1678 = vmatprep.subr.mxu0 0.0
    %1679 = vmatpush1.msra.mxu0 %v1513
    %1680 = vmatprep.subr.mxu0 0.0
    %1681 = vmatpush1.msra.mxu0 %v1516
    %1682 = vmatprep.subr.mxu0 0.0
    %1683 = vmatpush1.msra.mxu0 %v1519
    %1684 = vmatprep.subr.mxu0 0.0
    %1685 = vmatpush1.msra.mxu0 %v1522
    %1686 = vmatprep.subr.mxu0 0.0
    %1687 = vmatpush1.msra.mxu0 %v1525
    %1688 = vmatprep.subr.mxu0 0.0
    %1689 = vmatpush1.msra.mxu0 0.0
    %1690 = vmatprep.subr.mxu0 0.0
    %1691 = vmatpush1.msra.mxu0 0.0
    %1692 = vmatprep.subr.mxu0 0.0
    %1693 = vmatpush1.msra.mxu0 0.0
    %1694 = vmatprep.subr.mxu0 0.0
    %1695 = vmatpush1.msra.mxu0 0.0
    %1696 = vmatprep.subr.mxu0 0.0
    %1697 = vmatpush1.msra.mxu0 0.0
    %1698 = vmatprep.subr.mxu0 0.0
    %1699 = vmatpush1.msra.mxu0 0.0
    %1700 = vmatprep.subr.mxu0 0.0
    %1701 = vmatpush1.msra.mxu0 0.0
    %1702 = vmatprep.subr.mxu0 0.0
    %1703 = vmatpush1.msra.mxu0 0.0
    %1704 = vmatprep.subr.mxu0 0.0
    %1705 = vmatpush1.msra.mxu0 0.0
    %1706 = vmatprep.subr.mxu0 0.0
    %1707 = vmatpush1.msra.mxu0 0.0
    %1708 = vmatprep.subr.mxu0 0.0
    %1709 = vmatpush1.msra.mxu0 0.0
    %1710 = vmatprep.subr.mxu0 0.0
    %1711 = vmatpush1.msra.mxu0 0.0
    %1712 = vmatprep.subr.mxu0 0.0
    %1713 = vmatpush1.msra.mxu0 0.0
    %1714 = vmatprep.subr.mxu0 0.0
    %1715 = vmatpush1.msra.mxu0 0.0
    %1716 = vmatprep.subr.mxu0 0.0
    %1717 = vmatpush1.msra.mxu0 0.0
    %1718 = vmatprep.subr.mxu0 0.0
    %1719 = vmatpush1.msra.mxu0 0.0
    %1720 = vmatprep.mubr.f32.mxu0 0.0
    %1721 = vmatmul.mubr.f32.gmra.mrb[0].mxu0 %v1470
    %v1722 = vpop.f32.mrb[0].mxu0
    %v1723 = vadd.f32 %v1539, %v1722
    %v1724 = vpop.f32.mrb[0].mxu0
    %1725 = vmatprep.mubr.f32.mxu0 0.0
    %1726 = vmatmul.mubr.f32.gmra.mrb[0].mxu0 %v1471
    %v1727 = vpop.f32.mrb[0].mxu0
    %v1728 = vadd.f32 %v1539, %v1727
    %v1729 = vpop.f32.mrb[0].mxu0
    %1730 = vmatprep.mubr.f32.mxu0 0.0
    %1731 = vmatmul.mubr.f32.gmra.mrb[0].mxu0 %v1472
    %v1732 = vpop.f32.mrb[0].mxu0
    %v1733 = vadd.f32 %v1539, %v1732
    %v1734 = vpop.f32.mrb[0].mxu0
    %1735 = vmatprep.mubr.f32.mxu0 0.0
    %1736 = vmatmul.mubr.f32.gmra.mrb[0].mxu0 %v1473
    %v1737 = vpop.f32.mrb[0].mxu0
    %v1738 = vadd.f32 %v1539, %v1737
    %v1739 = vpop.f32.mrb[0].mxu0
    %1740 = vmatprep.mubr.f32.mxu0 0.0
    %1741 = vmatmul.mubr.f32.gmra.mrb[0].mxu0 %v1474
    %v1742 = vpop.f32.mrb[0].mxu0
    %v1743 = vadd.f32 %v1539, %v1742
    %v1744 = vpop.f32.mrb[0].mxu0
    %1745 = vmatprep.mubr.f32.mxu0 0.0
    %1746 = vmatmul.mubr.f32.gmra.mrb[0].mxu0 %v1475
    %v1747 = vpop.f32.mrb[0].mxu0
    %v1748 = vadd.f32 %v1539, %v1747
    %v1749 = vpop.f32.mrb[0].mxu0
    %1750 = vmatprep.mubr.f32.mxu0 0.0
    %1751 = vmatmul.mubr.f32.gmra.mrb[0].mxu0 %v1476
    %v1752 = vpop.f32.mrb[0].mxu0
    %v1753 = vadd.f32 %v1539, %v1752
    %v1754 = vpop.f32.mrb[0].mxu0
    %1755 = vmatprep.mubr.f32.mxu0 0.0
    %1756 = vmatmul.mubr.f32.gmra.mrb[0].mxu0 %v1477
    %v1757 = vpop.f32.mrb[0].mxu0
    %v1758 = vadd.f32 %v1539, %v1757
    %v1759 = vpop.f32.mrb[0].mxu0
    %1760 = vdwg.mxu0
    %1761 = vst [vmem:[#allocation2] sm:$0xff] %v1610
    %1762 = vst [vmem:[#allocation2 + $0x8] sm:$0xff] %v1612
    %1763 = vst [vmem:[#allocation2 + $0x10] sm:$0xff] %v1723
    %1764 = vst [vmem:[#allocation2 + $0x18] sm:$0xff] %v1616
    %1765 = vst [vmem:[#allocation2 + $0x20] sm:$0xff] %v1618
    %1766 = vst [vmem:[#allocation2 + $0x28] sm:$0xff] %v1728
    %1767 = vst [vmem:[#allocation2 + $0x30] sm:$0xff] %v1622
    %1768 = vst [vmem:[#allocation2 + $0x38] sm:$0xff] %v1624
    %1769 = vst [vmem:[#allocation2 + $0x40] sm:$0xff] %v1733
    %1770 = vst [vmem:[#allocation2 + $0x48] sm:$0xff] %v1628
    %1771 = vst [vmem:[#allocation2 + $0x50] sm:$0xff] %v1630
    %1772 = vst [vmem:[#allocation2 + $0x58] sm:$0xff] %v1738
    %1773 = vst [vmem:[#allocation2 + $0x60] sm:$0xff] %v1634
    %1774 = vst [vmem:[#allocation2 + $0x68] sm:$0xff] %v1636
    %1775 = vst [vmem:[#allocation2 + $0x70] sm:$0xff] %v1743
    %1776 = vst [vmem:[#allocation2 + $0x78] sm:$0xff] %v1640
    %1777 = vst [vmem:[#allocation2 + $0x80] sm:$0xff] %v1642
    %1778 = vst [vmem:[#allocation2 + $0x88] sm:$0xff] %v1748
    %1779 = vst [vmem:[#allocation2 + $0x90] sm:$0xff] %v1646
    %1780 = vst [vmem:[#allocation2 + $0x98] sm:$0xff] %v1648
    %1781 = vst [vmem:[#allocation2 + $0xa0] sm:$0xff] %v1753
    %1782 = vst [vmem:[#allocation2 + $0xa8] sm:$0xff] %v1652
    %1783 = vst [vmem:[#allocation2 + $0xb0] sm:$0xff] %v1654
    %1784 = vst [vmem:[#allocation2 + $0xb8] sm:$0xff] %v1758
    %v1785 = vld [vmem:[#allocation4] sm:$0xff]
    %v1786 = vld [vmem:[#allocation4 + $0x8] sm:$0xff]
    %v1787 = vld [vmem:[#allocation4 + $0x10] sm:$0xff]
    %v1788 = vld [vmem:[#allocation4 + $0x18] sm:$0xff]
    %v1789 = vld [vmem:[#allocation4 + $0x20] sm:$0xff]
    %v1790 = vld [vmem:[#allocation4 + $0x28] sm:$0xff]
    %v1791 = vld [vmem:[#allocation4 + $0x30] sm:$0xff]
    %v1792 = vld [vmem:[#allocation4 + $0x38] sm:$0xff]
    %v1793 = vld [vmem:[#allocation4 + $0x40] sm:$0xff]
    %v1794 = vld [vmem:[#allocation4 + $0x48] sm:$0xff]
    %v1795 = vld [vmem:[#allocation4 + $0x50] sm:$0xff]
    %v1796 = vld [vmem:[#allocation4 + $0x58] sm:$0xff]
    %v1797 = vld [vmem:[#allocation4 + $0x60] sm:$0xff]
    %v1798 = vld [vmem:[#allocation4 + $0x68] sm:$0xff]
    %v1799 = vld [vmem:[#allocation4 + $0x70] sm:$0xff]
    %v1800 = vld [vmem:[#allocation4 + $0x78] sm:$0xff]
    %v1801 = vld [vmem:[#allocation4 + $0x80] sm:$0xff]
    %v1802 = vld [vmem:[#allocation4 + $0x88] sm:$0xff]
    %v1803 = vld [vmem:[#allocation4 + $0x90] sm:$0xff]
    %v1804 = vld [vmem:[#allocation4 + $0x98] sm:$0xff]
    %v1805 = vld [vmem:[#allocation4 + $0xa0] sm:$0xff]
    %v1806 = vld [vmem:[#allocation4 + $0xa8] sm:$0xff]
    %v1807 = vld [vmem:[#allocation4 + $0xb0] sm:$0xff]
    %v1808 = vld [vmem:[#allocation4 + $0xb8] sm:$0xff]
    %v1809 = vld [vmem:[#allocation4 + $0xc0] sm:$0xff]
    %v1810 = vld [vmem:[#allocation4 + $0xc8] sm:$0xff]
    %v1811 = vld [vmem:[#allocation4 + $0xd0] sm:$0xff]
    %v1812 = vld [vmem:[#allocation4 + $0xd8] sm:$0xff]
    %v1813 = vld [vmem:[#allocation4 + $0xe0] sm:$0xff]
    %v1814 = vld [vmem:[#allocation4 + $0xe8] sm:$0xff]
    %v1815 = vld [vmem:[#allocation4 + $0xf0] sm:$0xff]
    %v1816 = vld [vmem:[#allocation4 + $0xf8] sm:$0xff]
    %v1817 = vld [vmem:[#allocation4 + $0x100] sm:$0xff]
    %v1818 = vld [vmem:[#allocation4 + $0x108] sm:$0xff]
    %v1819 = vld [vmem:[#allocation4 + $0x110] sm:$0xff]
    %v1820 = vld [vmem:[#allocation4 + $0x118] sm:$0xff]
    %v1821 = vld [vmem:[#allocation4 + $0x120] sm:$0xff]
    %v1822 = vld [vmem:[#allocation4 + $0x128] sm:$0xff]
    %v1823 = vld [vmem:[#allocation4 + $0x130] sm:$0xff]
    %v1824 = vld [vmem:[#allocation4 + $0x138] sm:$0xff]
    %v1825 = vld [vmem:[#allocation4 + $0x140] sm:$0xff]
    %v1826 = vld [vmem:[#allocation4 + $0x148] sm:$0xff]
    %v1827 = vld [vmem:[#allocation4 + $0x150] sm:$0xff]
    %v1828 = vld [vmem:[#allocation4 + $0x158] sm:$0xff]
    %v1829 = vld [vmem:[#allocation4 + $0x160] sm:$0xff]
    %v1830 = vld [vmem:[#allocation4 + $0x168] sm:$0xff]
    %v1831 = vld [vmem:[#allocation4 + $0x170] sm:$0xff]
    %v1832 = vld [vmem:[#allocation4 + $0x178] sm:$0xff]
    %v1833 = vld [vmem:[%s6] sm:$0x7]
    %s1834 = smul.addr %s95, 8
    %s1835 = scalar_lea.vmem [#allocation2], %s1834
    %v1836 = vld [vmem:[%s1835] sm:$0xff]
    %v1837 = vld [vmem:[%s1835 + $0x8] sm:$0xff]
    %v1838 = vld [vmem:[%s1835 + $0x10] sm:$0xff]
    %v1840 = vlaneseq
    %v1841 = vshrl.u32 %v1840, 7
    %v1842 = vsub.s32 0, %v1841
    %v1843 = vrot.slane %v1833, %v1842
    %v1844 = vlaneseq
    %v1845 = vshrl.u32 %v1844, 7
    %v1846 = vsub.s32 1, %v1845
    %v1847 = vrot.slane %v1833, %v1846
    %v1848 = vlaneseq
    %v1849 = vshrl.u32 %v1848, 7
    %v1850 = vsub.s32 2, %v1849
    %v1851 = vrot.slane %v1833, %v1850
    %1855 = vmatprep.subr.mxu0 %v1786
    %1856 = vmatpush1.msra.mxu0 %v1785
    %1857 = vmatprep.subr.mxu0 %v1789
    %1858 = vmatpush1.msra.mxu0 %v1788
    %1859 = vmatprep.subr.mxu0 %v1792
    %1860 = vmatpush1.msra.mxu0 %v1791
    %1861 = vmatprep.subr.mxu0 %v1795
    %1862 = vmatpush1.msra.mxu0 %v1794
    %1863 = vmatprep.subr.mxu0 %v1798
    %1864 = vmatpush1.msra.mxu0 %v1797
    %1865 = vmatprep.subr.mxu0 %v1801
    %1866 = vmatpush1.msra.mxu0 %v1800
    %1867 = vmatprep.subr.mxu0 %v1804
    %1868 = vmatpush1.msra.mxu0 %v1803
    %1869 = vmatprep.subr.mxu0 %v1807
    %1870 = vmatpush1.msra.mxu0 %v1806
    %1871 = vmatprep.subr.mxu0 %v1810
    %1872 = vmatpush1.msra.mxu0 %v1809
    %1873 = vmatprep.subr.mxu0 %v1813
    %1874 = vmatpush1.msra.mxu0 %v1812
    %1875 = vmatprep.subr.mxu0 %v1816
    %1876 = vmatpush1.msra.mxu0 %v1815
    %1877 = vmatprep.subr.mxu0 %v1819
    %1878 = vmatpush1.msra.mxu0 %v1818
    %1879 = vmatprep.subr.mxu0 %v1822
    %1880 = vmatpush1.msra.mxu0 %v1821
    %1881 = vmatprep.subr.mxu0 %v1825
    %1882 = vmatpush1.msra.mxu0 %v1824
    %1883 = vmatprep.subr.mxu0 %v1828
    %1884 = vmatpush1.msra.mxu0 %v1827
    %1885 = vmatprep.subr.mxu0 %v1831
    %1886 = vmatpush1.msra.mxu0 %v1830
    %1887 = vmatprep.subr.mxu0 0.0
    %1888 = vmatpush1.msra.mxu0 0.0
    %1889 = vmatprep.subr.mxu0 0.0
    %1890 = vmatpush1.msra.mxu0 0.0
    %1891 = vmatprep.subr.mxu0 0.0
    %1892 = vmatpush1.msra.mxu0 0.0
    %1893 = vmatprep.subr.mxu0 0.0
    %1894 = vmatpush1.msra.mxu0 0.0
    %1895 = vmatprep.subr.mxu0 0.0
    %1896 = vmatpush1.msra.mxu0 0.0
    %1897 = vmatprep.subr.mxu0 0.0
    %1898 = vmatpush1.msra.mxu0 0.0
    %1899 = vmatprep.subr.mxu0 0.0
    %1900 = vmatpush1.msra.mxu0 0.0
    %1901 = vmatprep.subr.mxu0 0.0
    %1902 = vmatpush1.msra.mxu0 0.0
    %1903 = vmatprep.subr.mxu0 0.0
    %1904 = vmatpush1.msra.mxu0 0.0
    %1905 = vmatprep.subr.mxu0 0.0
    %1906 = vmatpush1.msra.mxu0 0.0
    %1907 = vmatprep.subr.mxu0 0.0
    %1908 = vmatpush1.msra.mxu0 0.0
    %1909 = vmatprep.subr.mxu0 0.0
    %1910 = vmatpush1.msra.mxu0 0.0
    %1911 = vmatprep.subr.mxu0 0.0
    %1912 = vmatpush1.msra.mxu0 0.0
    %1913 = vmatprep.subr.mxu0 0.0
    %1914 = vmatpush1.msra.mxu0 0.0
    %1915 = vmatprep.subr.mxu0 0.0
    %1916 = vmatpush1.msra.mxu0 0.0
    %1917 = vmatprep.subr.mxu0 0.0
    %1918 = vmatpush1.msra.mxu0 0.0
    %1919 = vmatprep.mubr.f32.mxu0 0.0
    %1920 = vmatmul.mubr.f32.gmra.mrb[0].mxu0 0.0
    %v1921 = vpop.f32.mrb[0].mxu0
    %v1922 = vadd.f32 %v1843, %v1921
    %v1923 = vpop.f32.mrb[0].mxu0
    %v1924 = vadd.f32 %v1847, %v1923
    %1925 = vdwg.mxu0
    %1926 = vmatprep.subr.mxu0 0.0
    %1927 = vmatpush1.msra.mxu0 %v1787
    %1928 = vmatprep.subr.mxu0 0.0
    %1929 = vmatpush1.msra.mxu0 %v1790
    %1930 = vmatprep.subr.mxu0 0.0
    %1931 = vmatpush1.msra.mxu0 %v1793
    %1932 = vmatprep.subr.mxu0 0.0
    %1933 = vmatpush1.msra.mxu0 %v1796
    %1934 = vmatprep.subr.mxu0 0.0
    %1935 = vmatpush1.msra.mxu0 %v1799
    %1936 = vmatprep.subr.mxu0 0.0
    %1937 = vmatpush1.msra.mxu0 %v1802
    %1938 = vmatprep.subr.mxu0 0.0
    %1939 = vmatpush1.msra.mxu0 %v1805
    %1940 = vmatprep.subr.mxu0 0.0
    %1941 = vmatpush1.msra.mxu0 %v1808
    %1942 = vmatprep.subr.mxu0 0.0
    %1943 = vmatpush1.msra.mxu0 %v1811
    %1944 = vmatprep.subr.mxu0 0.0
    %1945 = vmatpush1.msra.mxu0 %v1814
    %1946 = vmatprep.subr.mxu0 0.0
    %1947 = vmatpush1.msra.mxu0 %v1817
    %1948 = vmatprep.subr.mxu0 0.0
    %1949 = vmatpush1.msra.mxu0 %v1820
    %1950 = vmatprep.subr.mxu0 0.0
    %1951 = vmatpush1.msra.mxu0 %v1823
    %1952 = vmatprep.subr.mxu0 0.0
    %1953 = vmatpush1.msra.mxu0 %v1826
    %1954 = vmatprep.subr.mxu0 0.0
    %1955 = vmatpush1.msra.mxu0 %v1829
    %1956 = vmatprep.subr.mxu0 0.0
    %1957 = vmatpush1.msra.mxu0 %v1832
    %1958 = vmatprep.subr.mxu0 0.0
    %1959 = vmatpush1.msra.mxu0 0.0
    %1960 = vmatprep.subr.mxu0 0.0
    %1961 = vmatpush1.msra.mxu0 0.0
    %1962 = vmatprep.subr.mxu0 0.0
    %1963 = vmatpush1.msra.mxu0 0.0
    %1964 = vmatprep.subr.mxu0 0.0
    %1965 = vmatpush1.msra.mxu0 0.0
    %1966 = vmatprep.subr.mxu0 0.0
    %1967 = vmatpush1.msra.mxu0 0.0
    %1968 = vmatprep.subr.mxu0 0.0
    %1969 = vmatpush1.msra.mxu0 0.0
    %1970 = vmatprep.subr.mxu0 0.0
    %1971 = vmatpush1.msra.mxu0 0.0
    %1972 = vmatprep.subr.mxu0 0.0
    %1973 = vmatpush1.msra.mxu0 0.0
    %1974 = vmatprep.subr.mxu0 0.0
    %1975 = vmatpush1.msra.mxu0 0.0
    %1976 = vmatprep.subr.mxu0 0.0
    %1977 = vmatpush1.msra.mxu0 0.0
    %1978 = vmatprep.subr.mxu0 0.0
    %1979 = vmatpush1.msra.mxu0 0.0
    %1980 = vmatprep.subr.mxu0 0.0
    %1981 = vmatpush1.msra.mxu0 0.0
    %1982 = vmatprep.subr.mxu0 0.0
    %1983 = vmatpush1.msra.mxu0 0.0
    %1984 = vmatprep.subr.mxu0 0.0
    %1985 = vmatpush1.msra.mxu0 0.0
    %1986 = vmatprep.subr.mxu0 0.0
    %1987 = vmatpush1.msra.mxu0 0.0
    %1988 = vmatprep.subr.mxu0 0.0
    %1989 = vmatpush1.msra.mxu0 0.0
    %1990 = vmatprep.mubr.f32.mxu0 0.0
    %1991 = vmatmul.mubr.f32.gmra.mrb[0].mxu0 0.0
    %v1992 = vpop.f32.mrb[0].mxu0
    %v1993 = vadd.f32 %v1851, %v1992
    %v1994 = vpop.f32.mrb[0].mxu0
    %1995 = vdwg.mxu0
    %v1996 = vadd.f32 %v1836, %v1922
    %v1997 = vxor.u32 %v1996, 2147483648
    %v1998 = vmul.f32 %v1997, 1.442695
    %v1999 = vpow.pop %v1998
    %v2000 = vadd.f32 %v1999, 1.0
    %v2001 = vrcp.pop %v2000
    %v2002 = vmul.f32 1.0, %v2001
    %v2003 = vadd.f32 %v1837, %v1924
    %v2004 = vxor.u32 %v2003, 2147483648
    %v2005 = vmul.f32 %v2004, 1.442695
    %v2006 = vpow.pop %v2005
    %v2007 = vadd.f32 %v2006, 1.0
    %v2008 = vrcp.pop %v2007
    %v2009 = vmul.f32 1.0, %v2008
    %v2010 = vmul.f32 %v2002, %v1993
    %v2011 = vadd.f32 %v1838, %v2010
    %v2012 = vtanh.pop %v2011
    %v2013 = vsub.f32 1.0, %v2009
    %v2014 = vmul.f32 %v2013, %v2012
    %v2015 = vmul.f32 %v2009, 0.0
    %v2016 = vadd.f32 %v2014, %v2015
    %s2017 = smul.addr %s280, 8
    %s2018 = scalar_lea.vmem [#allocation2], %s2017
    %v2019 = vld [vmem:[%s2018] sm:$0xff]
    %v2020 = vld [vmem:[%s2018 + $0x8] sm:$0xff]
    %v2021 = vld [vmem:[%s2018 + $0x10] sm:$0xff]
    %2022 = vmatprep.subr.mxu0 %v1786
    %2023 = vmatpush1.msra.mxu0 %v1785
    %2024 = vmatprep.subr.mxu0 %v1789
    %2025 = vmatpush1.msra.mxu0 %v1788
    %2026 = vmatprep.subr.mxu0 %v1792
    %2027 = vmatpush1.msra.mxu0 %v1791
    %2028 = vmatprep.subr.mxu0 %v1795
    %2029 = vmatpush1.msra.mxu0 %v1794
    %2030 = vmatprep.subr.mxu0 %v1798
    %2031 = vmatpush1.msra.mxu0 %v1797
    %2032 = vmatprep.subr.mxu0 %v1801
    %2033 = vmatpush1.msra.mxu0 %v1800
    %2034 = vmatprep.subr.mxu0 %v1804
    %2035 = vmatpush1.msra.mxu0 %v1803
    %2036 = vmatprep.subr.mxu0 %v1807
    %2037 = vmatpush1.msra.mxu0 %v1806
    %2038 = vmatprep.subr.mxu0 %v1810
    %2039 = vmatpush1.msra.mxu0 %v1809
    %2040 = vmatprep.subr.mxu0 %v1813
    %2041 = vmatpush1.msra.mxu0 %v1812
    %2042 = vmatprep.subr.mxu0 %v1816
    %2043 = vmatpush1.msra.mxu0 %v1815
    %2044 = vmatprep.subr.mxu0 %v1819
    %2045 = vmatpush1.msra.mxu0 %v1818
    %2046 = vmatprep.subr.mxu0 %v1822
    %2047 = vmatpush1.msra.mxu0 %v1821
    %2048 = vmatprep.subr.mxu0 %v1825
    %2049 = vmatpush1.msra.mxu0 %v1824
    %2050 = vmatprep.subr.mxu0 %v1828
    %2051 = vmatpush1.msra.mxu0 %v1827
    %2052 = vmatprep.subr.mxu0 %v1831
    %2053 = vmatpush1.msra.mxu0 %v1830
    %2054 = vmatprep.subr.mxu0 0.0
    %2055 = vmatpush1.msra.mxu0 0.0
    %2056 = vmatprep.subr.mxu0 0.0
    %2057 = vmatpush1.msra.mxu0 0.0
    %2058 = vmatprep.subr.mxu0 0.0
    %2059 = vmatpush1.msra.mxu0 0.0
    %2060 = vmatprep.subr.mxu0 0.0
    %2061 = vmatpush1.msra.mxu0 0.0
    %2062 = vmatprep.subr.mxu0 0.0
    %2063 = vmatpush1.msra.mxu0 0.0
    %2064 = vmatprep.subr.mxu0 0.0
    %2065 = vmatpush1.msra.mxu0 0.0
    %2066 = vmatprep.subr.mxu0 0.0
    %2067 = vmatpush1.msra.mxu0 0.0
    %2068 = vmatprep.subr.mxu0 0.0
    %2069 = vmatpush1.msra.mxu0 0.0
    %2070 = vmatprep.subr.mxu0 0.0
    %2071 = vmatpush1.msra.mxu0 0.0
    %2072 = vmatprep.subr.mxu0 0.0
    %2073 = vmatpush1.msra.mxu0 0.0
    %2074 = vmatprep.subr.mxu0 0.0
    %2075 = vmatpush1.msra.mxu0 0.0
    %2076 = vmatprep.subr.mxu0 0.0
    %2077 = vmatpush1.msra.mxu0 0.0
    %2078 = vmatprep.subr.mxu0 0.0
    %2079 = vmatpush1.msra.mxu0 0.0
    %2080 = vmatprep.subr.mxu0 0.0
    %2081 = vmatpush1.msra.mxu0 0.0
    %2082 = vmatprep.subr.mxu0 0.0
    %2083 = vmatpush1.msra.mxu0 0.0
    %2084 = vmatprep.subr.mxu0 0.0
    %2085 = vmatpush1.msra.mxu0 0.0
    %2086 = vmatprep.mubr.f32.mxu0 0.0
    %2087 = vmatmul.mubr.f32.gmra.mrb[0].mxu0 %v2016
    %v2088 = vpop.f32.mrb[0].mxu0
    %v2089 = vadd.f32 %v1843, %v2088
    %v2090 = vpop.f32.mrb[0].mxu0
    %v2091 = vadd.f32 %v1847, %v2090
    %2092 = vdwg.mxu0
    %2093 = vmatprep.subr.mxu0 0.0
    %2094 = vmatpush1.msra.mxu0 %v1787
    %2095 = vmatprep.subr.mxu0 0.0
    %2096 = vmatpush1.msra.mxu0 %v1790
    %2097 = vmatprep.subr.mxu0 0.0
    %2098 = vmatpush1.msra.mxu0 %v1793
    %2099 = vmatprep.subr.mxu0 0.0
    %2100 = vmatpush1.msra.mxu0 %v1796
    %2101 = vmatprep.subr.mxu0 0.0
    %2102 = vmatpush1.msra.mxu0 %v1799
    %2103 = vmatprep.subr.mxu0 0.0
    %2104 = vmatpush1.msra.mxu0 %v1802
    %2105 = vmatprep.subr.mxu0 0.0
    %2106 = vmatpush1.msra.mxu0 %v1805
    %2107 = vmatprep.subr.mxu0 0.0
    %2108 = vmatpush1.msra.mxu0 %v1808
    %2109 = vmatprep.subr.mxu0 0.0
    %2110 = vmatpush1.msra.mxu0 %v1811
    %2111 = vmatprep.subr.mxu0 0.0
    %2112 = vmatpush1.msra.mxu0 %v1814
    %2113 = vmatprep.subr.mxu0 0.0
    %2114 = vmatpush1.msra.mxu0 %v1817
    %2115 = vmatprep.subr.mxu0 0.0
    %2116 = vmatpush1.msra.mxu0 %v1820
    %2117 = vmatprep.subr.mxu0 0.0
    %2118 = vmatpush1.msra.mxu0 %v1823
    %2119 = vmatprep.subr.mxu0 0.0
    %2120 = vmatpush1.msra.mxu0 %v1826
    %2121 = vmatprep.subr.mxu0 0.0
    %2122 = vmatpush1.msra.mxu0 %v1829
    %2123 = vmatprep.subr.mxu0 0.0
    %2124 = vmatpush1.msra.mxu0 %v1832
    %2125 = vmatprep.subr.mxu0 0.0
    %2126 = vmatpush1.msra.mxu0 0.0
    %2127 = vmatprep.subr.mxu0 0.0
    %2128 = vmatpush1.msra.mxu0 0.0
    %2129 = vmatprep.subr.mxu0 0.0
    %2130 = vmatpush1.msra.mxu0 0.0
    %2131 = vmatprep.subr.mxu0 0.0
    %2132 = vmatpush1.msra.mxu0 0.0
    %2133 = vmatprep.subr.mxu0 0.0
    %2134 = vmatpush1.msra.mxu0 0.0
    %2135 = vmatprep.subr.mxu0 0.0
    %2136 = vmatpush1.msra.mxu0 0.0
    %2137 = vmatprep.subr.mxu0 0.0
    %2138 = vmatpush1.msra.mxu0 0.0
    %2139 = vmatprep.subr.mxu0 0.0
    %2140 = vmatpush1.msra.mxu0 0.0
    %2141 = vmatprep.subr.mxu0 0.0
    %2142 = vmatpush1.msra.mxu0 0.0
    %2143 = vmatprep.subr.mxu0 0.0
    %2144 = vmatpush1.msra.mxu0 0.0
    %2145 = vmatprep.subr.mxu0 0.0
    %2146 = vmatpush1.msra.mxu0 0.0
    %2147 = vmatprep.subr.mxu0 0.0
    %2148 = vmatpush1.msra.mxu0 0.0
    %2149 = vmatprep.subr.mxu0 0.0
    %2150 = vmatpush1.msra.mxu0 0.0
    %2151 = vmatprep.subr.mxu0 0.0
    %2152 = vmatpush1.msra.mxu0 0.0
    %2153 = vmatprep.subr.mxu0 0.0
    %2154 = vmatpush1.msra.mxu0 0.0
    %2155 = vmatprep.subr.mxu0 0.0
    %2156 = vmatpush1.msra.mxu0 0.0
    %2157 = vmatprep.mubr.f32.mxu0 0.0
    %2158 = vmatmul.mubr.f32.gmra.mrb[0].mxu0 %v2016
    %v2159 = vpop.f32.mrb[0].mxu0
    %v2160 = vadd.f32 %v1851, %v2159
    %v2161 = vpop.f32.mrb[0].mxu0
    %2162 = vdwg.mxu0
    %v2163 = vadd.f32 %v2019, %v2089
    %v2164 = vxor.u32 %v2163, 2147483648
    %v2165 = vmul.f32 %v2164, 1.442695
    %v2166 = vpow.pop %v2165
    %v2167 = vadd.f32 %v2166, 1.0
    %v2168 = vrcp.pop %v2167
    %v2169 = vmul.f32 1.0, %v2168
    %v2170 = vadd.f32 %v2020, %v2091
    %v2171 = vxor.u32 %v2170, 2147483648
    %v2172 = vmul.f32 %v2171, 1.442695
    %v2173 = vpow.pop %v2172
    %v2174 = vadd.f32 %v2173, 1.0
    %v2175 = vrcp.pop %v2174
    %v2176 = vmul.f32 1.0, %v2175
    %v2177 = vmul.f32 %v2169, %v2160
    %v2178 = vadd.f32 %v2021, %v2177
    %v2179 = vtanh.pop %v2178
    %v2180 = vsub.f32 1.0, %v2176
    %v2181 = vmul.f32 %v2180, %v2179
    %v2182 = vmul.f32 %v2176, %v2016
    %v2183 = vadd.f32 %v2181, %v2182
    %s2184 = smul.addr %s450, 8
    %s2185 = scalar_lea.vmem [#allocation2], %s2184
    %v2186 = vld [vmem:[%s2185] sm:$0xff]
    %v2187 = vld [vmem:[%s2185 + $0x8] sm:$0xff]
    %v2188 = vld [vmem:[%s2185 + $0x10] sm:$0xff]
    %2189 = vmatprep.subr.mxu0 %v1786
    %2190 = vmatpush1.msra.mxu0 %v1785
    %2191 = vmatprep.subr.mxu0 %v1789
    %2192 = vmatpush1.msra.mxu0 %v1788
    %2193 = vmatprep.subr.mxu0 %v1792
    %2194 = vmatpush1.msra.mxu0 %v1791
    %2195 = vmatprep.subr.mxu0 %v1795
    %2196 = vmatpush1.msra.mxu0 %v1794
    %2197 = vmatprep.subr.mxu0 %v1798
    %2198 = vmatpush1.msra.mxu0 %v1797
    %2199 = vmatprep.subr.mxu0 %v1801
    %2200 = vmatpush1.msra.mxu0 %v1800
    %2201 = vmatprep.subr.mxu0 %v1804
    %2202 = vmatpush1.msra.mxu0 %v1803
    %2203 = vmatprep.subr.mxu0 %v1807
    %2204 = vmatpush1.msra.mxu0 %v1806
    %2205 = vmatprep.subr.mxu0 %v1810
    %2206 = vmatpush1.msra.mxu0 %v1809
    %2207 = vmatprep.subr.mxu0 %v1813
    %2208 = vmatpush1.msra.mxu0 %v1812
    %2209 = vmatprep.subr.mxu0 %v1816
    %2210 = vmatpush1.msra.mxu0 %v1815
    %2211 = vmatprep.subr.mxu0 %v1819
    %2212 = vmatpush1.msra.mxu0 %v1818
    %2213 = vmatprep.subr.mxu0 %v1822
    %2214 = vmatpush1.msra.mxu0 %v1821
    %2215 = vmatprep.subr.mxu0 %v1825
    %2216 = vmatpush1.msra.mxu0 %v1824
    %2217 = vmatprep.subr.mxu0 %v1828
    %2218 = vmatpush1.msra.mxu0 %v1827
    %2219 = vmatprep.subr.mxu0 %v1831
    %2220 = vmatpush1.msra.mxu0 %v1830
    %2221 = vmatprep.subr.mxu0 0.0
    %2222 = vmatpush1.msra.mxu0 0.0
    %2223 = vmatprep.subr.mxu0 0.0
    %2224 = vmatpush1.msra.mxu0 0.0
    %2225 = vmatprep.subr.mxu0 0.0
    %2226 = vmatpush1.msra.mxu0 0.0
    %2227 = vmatprep.subr.mxu0 0.0
    %2228 = vmatpush1.msra.mxu0 0.0
    %2229 = vmatprep.subr.mxu0 0.0
    %2230 = vmatpush1.msra.mxu0 0.0
    %2231 = vmatprep.subr.mxu0 0.0
    %2232 = vmatpush1.msra.mxu0 0.0
    %2233 = vmatprep.subr.mxu0 0.0
    %2234 = vmatpush1.msra.mxu0 0.0
    %2235 = vmatprep.subr.mxu0 0.0
    %2236 = vmatpush1.msra.mxu0 0.0
    %2237 = vmatprep.subr.mxu0 0.0
    %2238 = vmatpush1.msra.mxu0 0.0
    %2239 = vmatprep.subr.mxu0 0.0
    %2240 = vmatpush1.msra.mxu0 0.0
    %2241 = vmatprep.subr.mxu0 0.0
    %2242 = vmatpush1.msra.mxu0 0.0
    %2243 = vmatprep.subr.mxu0 0.0
    %2244 = vmatpush1.msra.mxu0 0.0
    %2245 = vmatprep.subr.mxu0 0.0
    %2246 = vmatpush1.msra.mxu0 0.0
    %2247 = vmatprep.subr.mxu0 0.0
    %2248 = vmatpush1.msra.mxu0 0.0
    %2249 = vmatprep.subr.mxu0 0.0
    %2250 = vmatpush1.msra.mxu0 0.0
    %2251 = vmatprep.subr.mxu0 0.0
    %2252 = vmatpush1.msra.mxu0 0.0
    %2253 = vmatprep.mubr.f32.mxu0 0.0
    %2254 = vmatmul.mubr.f32.gmra.mrb[0].mxu0 %v2183
    %v2255 = vpop.f32.mrb[0].mxu0
    %v2256 = vadd.f32 %v1843, %v2255
    %v2257 = vpop.f32.mrb[0].mxu0
    %v2258 = vadd.f32 %v1847, %v2257
    %2259 = vdwg.mxu0
    %2260 = vmatprep.subr.mxu0 0.0
    %2261 = vmatpush1.msra.mxu0 %v1787
    %2262 = vmatprep.subr.mxu0 0.0
    %2263 = vmatpush1.msra.mxu0 %v1790
    %2264 = vmatprep.subr.mxu0 0.0
    %2265 = vmatpush1.msra.mxu0 %v1793
    %2266 = vmatprep.subr.mxu0 0.0
    %2267 = vmatpush1.msra.mxu0 %v1796
    %2268 = vmatprep.subr.mxu0 0.0
    %2269 = vmatpush1.msra.mxu0 %v1799
    %2270 = vmatprep.subr.mxu0 0.0
    %2271 = vmatpush1.msra.mxu0 %v1802
    %2272 = vmatprep.subr.mxu0 0.0
    %2273 = vmatpush1.msra.mxu0 %v1805
    %2274 = vmatprep.subr.mxu0 0.0
    %2275 = vmatpush1.msra.mxu0 %v1808
    %2276 = vmatprep.subr.mxu0 0.0
    %2277 = vmatpush1.msra.mxu0 %v1811
    %2278 = vmatprep.subr.mxu0 0.0
    %2279 = vmatpush1.msra.mxu0 %v1814
    %2280 = vmatprep.subr.mxu0 0.0
    %2281 = vmatpush1.msra.mxu0 %v1817
    %2282 = vmatprep.subr.mxu0 0.0
    %2283 = vmatpush1.msra.mxu0 %v1820
    %2284 = vmatprep.subr.mxu0 0.0
    %2285 = vmatpush1.msra.mxu0 %v1823
    %2286 = vmatprep.subr.mxu0 0.0
    %2287 = vmatpush1.msra.mxu0 %v1826
    %2288 = vmatprep.subr.mxu0 0.0
    %2289 = vmatpush1.msra.mxu0 %v1829
    %2290 = vmatprep.subr.mxu0 0.0
    %2291 = vmatpush1.msra.mxu0 %v1832
    %2292 = vmatprep.subr.mxu0 0.0
    %2293 = vmatpush1.msra.mxu0 0.0
    %2294 = vmatprep.subr.mxu0 0.0
    %2295 = vmatpush1.msra.mxu0 0.0
    %2296 = vmatprep.subr.mxu0 0.0
    %2297 = vmatpush1.msra.mxu0 0.0
    %2298 = vmatprep.subr.mxu0 0.0
    %2299 = vmatpush1.msra.mxu0 0.0
    %2300 = vmatprep.subr.mxu0 0.0
    %2301 = vmatpush1.msra.mxu0 0.0
    %2302 = vmatprep.subr.mxu0 0.0
    %2303 = vmatpush1.msra.mxu0 0.0
    %2304 = vmatprep.subr.mxu0 0.0
    %2305 = vmatpush1.msra.mxu0 0.0
    %2306 = vmatprep.subr.mxu0 0.0
    %2307 = vmatpush1.msra.mxu0 0.0
    %2308 = vmatprep.subr.mxu0 0.0
    %2309 = vmatpush1.msra.mxu0 0.0
    %2310 = vmatprep.subr.mxu0 0.0
    %2311 = vmatpush1.msra.mxu0 0.0
    %2312 = vmatprep.subr.mxu0 0.0
    %2313 = vmatpush1.msra.mxu0 0.0
    %2314 = vmatprep.subr.mxu0 0.0
    %2315 = vmatpush1.msra.mxu0 0.0
    %2316 = vmatprep.subr.mxu0 0.0
    %2317 = vmatpush1.msra.mxu0 0.0
    %2318 = vmatprep.subr.mxu0 0.0
    %2319 = vmatpush1.msra.mxu0 0.0
    %2320 = vmatprep.subr.mxu0 0.0
    %2321 = vmatpush1.msra.mxu0 0.0
    %2322 = vmatprep.subr.mxu0 0.0
    %2323 = vmatpush1.msra.mxu0 0.0
    %2324 = vmatprep.mubr.f32.mxu0 0.0
    %2325 = vmatmul.mubr.f32.gmra.mrb[0].mxu0 %v2183
    %v2326 = vpop.f32.mrb[0].mxu0
    %v2327 = vadd.f32 %v1851, %v2326
    %v2328 = vpop.f32.mrb[0].mxu0
    %2329 = vdwg.mxu0
    %v2330 = vadd.f32 %v2186, %v2256
    %v2331 = vxor.u32 %v2330, 2147483648
    %v2332 = vmul.f32 %v2331, 1.442695
    %v2333 = vpow.pop %v2332
    %v2334 = vadd.f32 %v2333, 1.0
    %v2335 = vrcp.pop %v2334
    %v2336 = vmul.f32 1.0, %v2335
    %v2337 = vadd.f32 %v2187, %v2258
    %v2338 = vxor.u32 %v2337, 2147483648
    %v2339 = vmul.f32 %v2338, 1.442695
    %v2340 = vpow.pop %v2339
    %v2341 = vadd.f32 %v2340, 1.0
    %v2342 = vrcp.pop %v2341
    %v2343 = vmul.f32 1.0, %v2342
    %v2344 = vmul.f32 %v2336, %v2327
    %v2345 = vadd.f32 %v2188, %v2344
    %v2346 = vtanh.pop %v2345
    %v2347 = vsub.f32 1.0, %v2343
    %v2348 = vmul.f32 %v2347, %v2346
    %v2349 = vmul.f32 %v2343, %v2183
    %v2350 = vadd.f32 %v2348, %v2349
    %s2351 = smul.addr %s620, 8
    %s2352 = scalar_lea.vmem [#allocation2], %s2351
    %v2353 = vld [vmem:[%s2352] sm:$0xff]
    %v2354 = vld [vmem:[%s2352 + $0x8] sm:$0xff]
    %v2355 = vld [vmem:[%s2352 + $0x10] sm:$0xff]
    %2356 = vmatprep.subr.mxu0 %v1786
    %2357 = vmatpush1.msra.mxu0 %v1785
    %2358 = vmatprep.subr.mxu0 %v1789
    %2359 = vmatpush1.msra.mxu0 %v1788
    %2360 = vmatprep.subr.mxu0 %v1792
    %2361 = vmatpush1.msra.mxu0 %v1791
    %2362 = vmatprep.subr.mxu0 %v1795
    %2363 = vmatpush1.msra.mxu0 %v1794
    %2364 = vmatprep.subr.mxu0 %v1798
    %2365 = vmatpush1.msra.mxu0 %v1797
    %2366 = vmatprep.subr.mxu0 %v1801
    %2367 = vmatpush1.msra.mxu0 %v1800
    %2368 = vmatprep.subr.mxu0 %v1804
    %2369 = vmatpush1.msra.mxu0 %v1803
    %2370 = vmatprep.subr.mxu0 %v1807
    %2371 = vmatpush1.msra.mxu0 %v1806
    %2372 = vmatprep.subr.mxu0 %v1810
    %2373 = vmatpush1.msra.mxu0 %v1809
    %2374 = vmatprep.subr.mxu0 %v1813
    %2375 = vmatpush1.msra.mxu0 %v1812
    %2376 = vmatprep.subr.mxu0 %v1816
    %2377 = vmatpush1.msra.mxu0 %v1815
    %2378 = vmatprep.subr.mxu0 %v1819
    %2379 = vmatpush1.msra.mxu0 %v1818
    %2380 = vmatprep.subr.mxu0 %v1822
    %2381 = vmatpush1.msra.mxu0 %v1821
    %2382 = vmatprep.subr.mxu0 %v1825
    %2383 = vmatpush1.msra.mxu0 %v1824
    %2384 = vmatprep.subr.mxu0 %v1828
    %2385 = vmatpush1.msra.mxu0 %v1827
    %2386 = vmatprep.subr.mxu0 %v1831
    %2387 = vmatpush1.msra.mxu0 %v1830
    %2388 = vmatprep.subr.mxu0 0.0
    %2389 = vmatpush1.msra.mxu0 0.0
    %2390 = vmatprep.subr.mxu0 0.0
    %2391 = vmatpush1.msra.mxu0 0.0
    %2392 = vmatprep.subr.mxu0 0.0
    %2393 = vmatpush1.msra.mxu0 0.0
    %2394 = vmatprep.subr.mxu0 0.0
    %2395 = vmatpush1.msra.mxu0 0.0
    %2396 = vmatprep.subr.mxu0 0.0
    %2397 = vmatpush1.msra.mxu0 0.0
    %2398 = vmatprep.subr.mxu0 0.0
    %2399 = vmatpush1.msra.mxu0 0.0
    %2400 = vmatprep.subr.mxu0 0.0
    %2401 = vmatpush1.msra.mxu0 0.0
    %2402 = vmatprep.subr.mxu0 0.0
    %2403 = vmatpush1.msra.mxu0 0.0
    %2404 = vmatprep.subr.mxu0 0.0
    %2405 = vmatpush1.msra.mxu0 0.0
    %2406 = vmatprep.subr.mxu0 0.0
    %2407 = vmatpush1.msra.mxu0 0.0
    %2408 = vmatprep.subr.mxu0 0.0
    %2409 = vmatpush1.msra.mxu0 0.0
    %2410 = vmatprep.subr.mxu0 0.0
    %2411 = vmatpush1.msra.mxu0 0.0
    %2412 = vmatprep.subr.mxu0 0.0
    %2413 = vmatpush1.msra.mxu0 0.0
    %2414 = vmatprep.subr.mxu0 0.0
    %2415 = vmatpush1.msra.mxu0 0.0
    %2416 = vmatprep.subr.mxu0 0.0
    %2417 = vmatpush1.msra.mxu0 0.0
    %2418 = vmatprep.subr.mxu0 0.0
    %2419 = vmatpush1.msra.mxu0 0.0
    %2420 = vmatprep.mubr.f32.mxu0 0.0
    %2421 = vmatmul.mubr.f32.gmra.mrb[0].mxu0 %v2350
    %v2422 = vpop.f32.mrb[0].mxu0
    %v2423 = vadd.f32 %v1843, %v2422
    %v2424 = vpop.f32.mrb[0].mxu0
    %v2425 = vadd.f32 %v1847, %v2424
    %2426 = vdwg.mxu0
    %2427 = vmatprep.subr.mxu0 0.0
    %2428 = vmatpush1.msra.mxu0 %v1787
    %2429 = vmatprep.subr.mxu0 0.0
    %2430 = vmatpush1.msra.mxu0 %v1790
    %2431 = vmatprep.subr.mxu0 0.0
    %2432 = vmatpush1.msra.mxu0 %v1793
    %2433 = vmatprep.subr.mxu0 0.0
    %2434 = vmatpush1.msra.mxu0 %v1796
    %2435 = vmatprep.subr.mxu0 0.0
    %2436 = vmatpush1.msra.mxu0 %v1799
    %2437 = vmatprep.subr.mxu0 0.0
    %2438 = vmatpush1.msra.mxu0 %v1802
    %2439 = vmatprep.subr.mxu0 0.0
    %2440 = vmatpush1.msra.mxu0 %v1805
    %2441 = vmatprep.subr.mxu0 0.0
    %2442 = vmatpush1.msra.mxu0 %v1808
    %2443 = vmatprep.subr.mxu0 0.0
    %2444 = vmatpush1.msra.mxu0 %v1811
    %2445 = vmatprep.subr.mxu0 0.0
    %2446 = vmatpush1.msra.mxu0 %v1814
    %2447 = vmatprep.subr.mxu0 0.0
    %2448 = vmatpush1.msra.mxu0 %v1817
    %2449 = vmatprep.subr.mxu0 0.0
    %2450 = vmatpush1.msra.mxu0 %v1820
    %2451 = vmatprep.subr.mxu0 0.0
    %2452 = vmatpush1.msra.mxu0 %v1823
    %2453 = vmatprep.subr.mxu0 0.0
    %2454 = vmatpush1.msra.mxu0 %v1826
    %2455 = vmatprep.subr.mxu0 0.0
    %2456 = vmatpush1.msra.mxu0 %v1829
    %2457 = vmatprep.subr.mxu0 0.0
    %2458 = vmatpush1.msra.mxu0 %v1832
    %2459 = vmatprep.subr.mxu0 0.0
    %2460 = vmatpush1.msra.mxu0 0.0
    %2461 = vmatprep.subr.mxu0 0.0
    %2462 = vmatpush1.msra.mxu0 0.0
    %2463 = vmatprep.subr.mxu0 0.0
    %2464 = vmatpush1.msra.mxu0 0.0
    %2465 = vmatprep.subr.mxu0 0.0
    %2466 = vmatpush1.msra.mxu0 0.0
    %2467 = vmatprep.subr.mxu0 0.0
    %2468 = vmatpush1.msra.mxu0 0.0
    %2469 = vmatprep.subr.mxu0 0.0
    %2470 = vmatpush1.msra.mxu0 0.0
    %2471 = vmatprep.subr.mxu0 0.0
    %2472 = vmatpush1.msra.mxu0 0.0
    %2473 = vmatprep.subr.mxu0 0.0
    %2474 = vmatpush1.msra.mxu0 0.0
    %2475 = vmatprep.subr.mxu0 0.0
    %2476 = vmatpush1.msra.mxu0 0.0
    %2477 = vmatprep.subr.mxu0 0.0
    %2478 = vmatpush1.msra.mxu0 0.0
    %2479 = vmatprep.subr.mxu0 0.0
    %2480 = vmatpush1.msra.mxu0 0.0
    %2481 = vmatprep.subr.mxu0 0.0
    %2482 = vmatpush1.msra.mxu0 0.0
    %2483 = vmatprep.subr.mxu0 0.0
    %2484 = vmatpush1.msra.mxu0 0.0
    %2485 = vmatprep.subr.mxu0 0.0
    %2486 = vmatpush1.msra.mxu0 0.0
    %2487 = vmatprep.subr.mxu0 0.0
    %2488 = vmatpush1.msra.mxu0 0.0
    %2489 = vmatprep.subr.mxu0 0.0
    %2490 = vmatpush1.msra.mxu0 0.0
    %2491 = vmatprep.mubr.f32.mxu0 0.0
    %2492 = vmatmul.mubr.f32.gmra.mrb[0].mxu0 %v2350
    %v2493 = vpop.f32.mrb[0].mxu0
    %v2494 = vadd.f32 %v1851, %v2493
    %v2495 = vpop.f32.mrb[0].mxu0
    %2496 = vdwg.mxu0
    %v2497 = vadd.f32 %v2353, %v2423
    %v2498 = vxor.u32 %v2497, 2147483648
    %v2499 = vmul.f32 %v2498, 1.442695
    %v2500 = vpow.pop %v2499
    %v2501 = vadd.f32 %v2500, 1.0
    %v2502 = vrcp.pop %v2501
    %v2503 = vmul.f32 1.0, %v2502
    %v2504 = vadd.f32 %v2354, %v2425
    %v2505 = vxor.u32 %v2504, 2147483648
    %v2506 = vmul.f32 %v2505, 1.442695
    %v2507 = vpow.pop %v2506
    %v2508 = vadd.f32 %v2507, 1.0
    %v2509 = vrcp.pop %v2508
    %v2510 = vmul.f32 1.0, %v2509
    %v2511 = vmul.f32 %v2503, %v2494
    %v2512 = vadd.f32 %v2355, %v2511
    %v2513 = vtanh.pop %v2512
    %v2514 = vsub.f32 1.0, %v2510
    %v2515 = vmul.f32 %v2514, %v2513
    %v2516 = vmul.f32 %v2510, %v2350
    %v2517 = vadd.f32 %v2515, %v2516
    %s2518 = smul.addr %s790, 8
    %s2519 = scalar_lea.vmem [#allocation2], %s2518
    %v2520 = vld [vmem:[%s2519] sm:$0xff]
    %v2521 = vld [vmem:[%s2519 + $0x8] sm:$0xff]
    %v2522 = vld [vmem:[%s2519 + $0x10] sm:$0xff]
    %2523 = vmatprep.subr.mxu0 %v1786
    %2524 = vmatpush1.msra.mxu0 %v1785
    %2525 = vmatprep.subr.mxu0 %v1789
    %2526 = vmatpush1.msra.mxu0 %v1788
    %2527 = vmatprep.subr.mxu0 %v1792
    %2528 = vmatpush1.msra.mxu0 %v1791
    %2529 = vmatprep.subr.mxu0 %v1795
    %2530 = vmatpush1.msra.mxu0 %v1794
    %2531 = vmatprep.subr.mxu0 %v1798
    %2532 = vmatpush1.msra.mxu0 %v1797
    %2533 = vmatprep.subr.mxu0 %v1801
    %2534 = vmatpush1.msra.mxu0 %v1800
    %2535 = vmatprep.subr.mxu0 %v1804
    %2536 = vmatpush1.msra.mxu0 %v1803
    %2537 = vmatprep.subr.mxu0 %v1807
    %2538 = vmatpush1.msra.mxu0 %v1806
    %2539 = vmatprep.subr.mxu0 %v1810
    %2540 = vmatpush1.msra.mxu0 %v1809
    %2541 = vmatprep.subr.mxu0 %v1813
    %2542 = vmatpush1.msra.mxu0 %v1812
    %2543 = vmatprep.subr.mxu0 %v1816
    %2544 = vmatpush1.msra.mxu0 %v1815
    %2545 = vmatprep.subr.mxu0 %v1819
    %2546 = vmatpush1.msra.mxu0 %v1818
    %2547 = vmatprep.subr.mxu0 %v1822
    %2548 = vmatpush1.msra.mxu0 %v1821
    %2549 = vmatprep.subr.mxu0 %v1825
    %2550 = vmatpush1.msra.mxu0 %v1824
    %2551 = vmatprep.subr.mxu0 %v1828
    %2552 = vmatpush1.msra.mxu0 %v1827
    %2553 = vmatprep.subr.mxu0 %v1831
    %2554 = vmatpush1.msra.mxu0 %v1830
    %2555 = vmatprep.subr.mxu0 0.0
    %2556 = vmatpush1.msra.mxu0 0.0
    %2557 = vmatprep.subr.mxu0 0.0
    %2558 = vmatpush1.msra.mxu0 0.0
    %2559 = vmatprep.subr.mxu0 0.0
    %2560 = vmatpush1.msra.mxu0 0.0
    %2561 = vmatprep.subr.mxu0 0.0
    %2562 = vmatpush1.msra.mxu0 0.0
    %2563 = vmatprep.subr.mxu0 0.0
    %2564 = vmatpush1.msra.mxu0 0.0
    %2565 = vmatprep.subr.mxu0 0.0
    %2566 = vmatpush1.msra.mxu0 0.0
    %2567 = vmatprep.subr.mxu0 0.0
    %2568 = vmatpush1.msra.mxu0 0.0
    %2569 = vmatprep.subr.mxu0 0.0
    %2570 = vmatpush1.msra.mxu0 0.0
    %2571 = vmatprep.subr.mxu0 0.0
    %2572 = vmatpush1.msra.mxu0 0.0
    %2573 = vmatprep.subr.mxu0 0.0
    %2574 = vmatpush1.msra.mxu0 0.0
    %2575 = vmatprep.subr.mxu0 0.0
    %2576 = vmatpush1.msra.mxu0 0.0
    %2577 = vmatprep.subr.mxu0 0.0
    %2578 = vmatpush1.msra.mxu0 0.0
    %2579 = vmatprep.subr.mxu0 0.0
    %2580 = vmatpush1.msra.mxu0 0.0
    %2581 = vmatprep.subr.mxu0 0.0
    %2582 = vmatpush1.msra.mxu0 0.0
    %2583 = vmatprep.subr.mxu0 0.0
    %2584 = vmatpush1.msra.mxu0 0.0
    %2585 = vmatprep.subr.mxu0 0.0
    %2586 = vmatpush1.msra.mxu0 0.0
    %2587 = vmatprep.mubr.f32.mxu0 0.0
    %2588 = vmatmul.mubr.f32.gmra.mrb[0].mxu0 %v2517
    %v2589 = vpop.f32.mrb[0].mxu0
    %v2590 = vadd.f32 %v1843, %v2589
    %v2591 = vpop.f32.mrb[0].mxu0
    %v2592 = vadd.f32 %v1847, %v2591
    %2593 = vdwg.mxu0
    %2594 = vmatprep.subr.mxu0 0.0
    %2595 = vmatpush1.msra.mxu0 %v1787
    %2596 = vmatprep.subr.mxu0 0.0
    %2597 = vmatpush1.msra.mxu0 %v1790
    %2598 = vmatprep.subr.mxu0 0.0
    %2599 = vmatpush1.msra.mxu0 %v1793
    %2600 = vmatprep.subr.mxu0 0.0
    %2601 = vmatpush1.msra.mxu0 %v1796
    %2602 = vmatprep.subr.mxu0 0.0
    %2603 = vmatpush1.msra.mxu0 %v1799
    %2604 = vmatprep.subr.mxu0 0.0
    %2605 = vmatpush1.msra.mxu0 %v1802
    %2606 = vmatprep.subr.mxu0 0.0
    %2607 = vmatpush1.msra.mxu0 %v1805
    %2608 = vmatprep.subr.mxu0 0.0
    %2609 = vmatpush1.msra.mxu0 %v1808
    %2610 = vmatprep.subr.mxu0 0.0
    %2611 = vmatpush1.msra.mxu0 %v1811
    %2612 = vmatprep.subr.mxu0 0.0
    %2613 = vmatpush1.msra.mxu0 %v1814
    %2614 = vmatprep.subr.mxu0 0.0
    %2615 = vmatpush1.msra.mxu0 %v1817
    %2616 = vmatprep.subr.mxu0 0.0
    %2617 = vmatpush1.msra.mxu0 %v1820
    %2618 = vmatprep.subr.mxu0 0.0
    %2619 = vmatpush1.msra.mxu0 %v1823
    %2620 = vmatprep.subr.mxu0 0.0
    %2621 = vmatpush1.msra.mxu0 %v1826
    %2622 = vmatprep.subr.mxu0 0.0
    %2623 = vmatpush1.msra.mxu0 %v1829
    %2624 = vmatprep.subr.mxu0 0.0
    %2625 = vmatpush1.msra.mxu0 %v1832
    %2626 = vmatprep.subr.mxu0 0.0
    %2627 = vmatpush1.msra.mxu0 0.0
    %2628 = vmatprep.subr.mxu0 0.0
    %2629 = vmatpush1.msra.mxu0 0.0
    %2630 = vmatprep.subr.mxu0 0.0
    %2631 = vmatpush1.msra.mxu0 0.0
    %2632 = vmatprep.subr.mxu0 0.0
    %2633 = vmatpush1.msra.mxu0 0.0
    %2634 = vmatprep.subr.mxu0 0.0
    %2635 = vmatpush1.msra.mxu0 0.0
    %2636 = vmatprep.subr.mxu0 0.0
    %2637 = vmatpush1.msra.mxu0 0.0
    %2638 = vmatprep.subr.mxu0 0.0
    %2639 = vmatpush1.msra.mxu0 0.0
    %2640 = vmatprep.subr.mxu0 0.0
    %2641 = vmatpush1.msra.mxu0 0.0
    %2642 = vmatprep.subr.mxu0 0.0
    %2643 = vmatpush1.msra.mxu0 0.0
    %2644 = vmatprep.subr.mxu0 0.0
    %2645 = vmatpush1.msra.mxu0 0.0
    %2646 = vmatprep.subr.mxu0 0.0
    %2647 = vmatpush1.msra.mxu0 0.0
    %2648 = vmatprep.subr.mxu0 0.0
    %2649 = vmatpush1.msra.mxu0 0.0
    %2650 = vmatprep.subr.mxu0 0.0
    %2651 = vmatpush1.msra.mxu0 0.0
    %2652 = vmatprep.subr.mxu0 0.0
    %2653 = vmatpush1.msra.mxu0 0.0
    %2654 = vmatprep.subr.mxu0 0.0
    %2655 = vmatpush1.msra.mxu0 0.0
    %2656 = vmatprep.subr.mxu0 0.0
    %2657 = vmatpush1.msra.mxu0 0.0
    %2658 = vmatprep.mubr.f32.mxu0 0.0
    %2659 = vmatmul.mubr.f32.gmra.mrb[0].mxu0 %v2517
    %v2660 = vpop.f32.mrb[0].mxu0
    %v2661 = vadd.f32 %v1851, %v2660
    %v2662 = vpop.f32.mrb[0].mxu0
    %2663 = vdwg.mxu0
    %v2664 = vadd.f32 %v2520, %v2590
    %v2665 = vxor.u32 %v2664, 2147483648
    %v2666 = vmul.f32 %v2665, 1.442695
    %v2667 = vpow.pop %v2666
    %v2668 = vadd.f32 %v2667, 1.0
    %v2669 = vrcp.pop %v2668
    %v2670 = vmul.f32 1.0, %v2669
    %v2671 = vadd.f32 %v2521, %v2592
    %v2672 = vxor.u32 %v2671, 2147483648
    %v2673 = vmul.f32 %v2672, 1.442695
    %v2674 = vpow.pop %v2673
    %v2675 = vadd.f32 %v2674, 1.0
    %v2676 = vrcp.pop %v2675
    %v2677 = vmul.f32 1.0, %v2676
    %v2678 = vmul.f32 %v2670, %v2661
    %v2679 = vadd.f32 %v2522, %v2678
    %v2680 = vtanh.pop %v2679
    %v2681 = vsub.f32 1.0, %v2677
    %v2682 = vmul.f32 %v2681, %v2680
    %v2683 = vmul.f32 %v2677, %v2517
    %v2684 = vadd.f32 %v2682, %v2683
    %s2685 = smul.addr %s960, 8
    %s2686 = scalar_lea.vmem [#allocation2], %s2685
    %v2687 = vld [vmem:[%s2686] sm:$0xff]
    %v2688 = vld [vmem:[%s2686 + $0x8] sm:$0xff]
    %v2689 = vld [vmem:[%s2686 + $0x10] sm:$0xff]
    %2690 = vmatprep.subr.mxu0 %v1786
    %2691 = vmatpush1.msra.mxu0 %v1785
    %2692 = vmatprep.subr.mxu0 %v1789
    %2693 = vmatpush1.msra.mxu0 %v1788
    %2694 = vmatprep.subr.mxu0 %v1792
    %2695 = vmatpush1.msra.mxu0 %v1791
    %2696 = vmatprep.subr.mxu0 %v1795
    %2697 = vmatpush1.msra.mxu0 %v1794
    %2698 = vmatprep.subr.mxu0 %v1798
    %2699 = vmatpush1.msra.mxu0 %v1797
    %2700 = vmatprep.subr.mxu0 %v1801
    %2701 = vmatpush1.msra.mxu0 %v1800
    %2702 = vmatprep.subr.mxu0 %v1804
    %2703 = vmatpush1.msra.mxu0 %v1803
    %2704 = vmatprep.subr.mxu0 %v1807
    %2705 = vmatpush1.msra.mxu0 %v1806
    %2706 = vmatprep.subr.mxu0 %v1810
    %2707 = vmatpush1.msra.mxu0 %v1809
    %2708 = vmatprep.subr.mxu0 %v1813
    %2709 = vmatpush1.msra.mxu0 %v1812
    %2710 = vmatprep.subr.mxu0 %v1816
    %2711 = vmatpush1.msra.mxu0 %v1815
    %2712 = vmatprep.subr.mxu0 %v1819
    %2713 = vmatpush1.msra.mxu0 %v1818
    %2714 = vmatprep.subr.mxu0 %v1822
    %2715 = vmatpush1.msra.mxu0 %v1821
    %2716 = vmatprep.subr.mxu0 %v1825
    %2717 = vmatpush1.msra.mxu0 %v1824
    %2718 = vmatprep.subr.mxu0 %v1828
    %2719 = vmatpush1.msra.mxu0 %v1827
    %2720 = vmatprep.subr.mxu0 %v1831
    %2721 = vmatpush1.msra.mxu0 %v1830
    %2722 = vmatprep.subr.mxu0 0.0
    %2723 = vmatpush1.msra.mxu0 0.0
    %2724 = vmatprep.subr.mxu0 0.0
    %2725 = vmatpush1.msra.mxu0 0.0
    %2726 = vmatprep.subr.mxu0 0.0
    %2727 = vmatpush1.msra.mxu0 0.0
    %2728 = vmatprep.subr.mxu0 0.0
    %2729 = vmatpush1.msra.mxu0 0.0
    %2730 = vmatprep.subr.mxu0 0.0
    %2731 = vmatpush1.msra.mxu0 0.0
    %2732 = vmatprep.subr.mxu0 0.0
    %2733 = vmatpush1.msra.mxu0 0.0
    %2734 = vmatprep.subr.mxu0 0.0
    %2735 = vmatpush1.msra.mxu0 0.0
    %2736 = vmatprep.subr.mxu0 0.0
    %2737 = vmatpush1.msra.mxu0 0.0
    %2738 = vmatprep.subr.mxu0 0.0
    %2739 = vmatpush1.msra.mxu0 0.0
    %2740 = vmatprep.subr.mxu0 0.0
    %2741 = vmatpush1.msra.mxu0 0.0
    %2742 = vmatprep.subr.mxu0 0.0
    %2743 = vmatpush1.msra.mxu0 0.0
    %2744 = vmatprep.subr.mxu0 0.0
    %2745 = vmatpush1.msra.mxu0 0.0
    %2746 = vmatprep.subr.mxu0 0.0
    %2747 = vmatpush1.msra.mxu0 0.0
    %2748 = vmatprep.subr.mxu0 0.0
    %2749 = vmatpush1.msra.mxu0 0.0
    %2750 = vmatprep.subr.mxu0 0.0
    %2751 = vmatpush1.msra.mxu0 0.0
    %2752 = vmatprep.subr.mxu0 0.0
    %2753 = vmatpush1.msra.mxu0 0.0
    %2754 = vmatprep.mubr.f32.mxu0 0.0
    %2755 = vmatmul.mubr.f32.gmra.mrb[0].mxu0 %v2684
    %v2756 = vpop.f32.mrb[0].mxu0
    %v2757 = vadd.f32 %v1843, %v2756
    %v2758 = vpop.f32.mrb[0].mxu0
    %v2759 = vadd.f32 %v1847, %v2758
    %2760 = vdwg.mxu0
    %2761 = vmatprep.subr.mxu0 0.0
    %2762 = vmatpush1.msra.mxu0 %v1787
    %2763 = vmatprep.subr.mxu0 0.0
    %2764 = vmatpush1.msra.mxu0 %v1790
    %2765 = vmatprep.subr.mxu0 0.0
    %2766 = vmatpush1.msra.mxu0 %v1793
    %2767 = vmatprep.subr.mxu0 0.0
    %2768 = vmatpush1.msra.mxu0 %v1796
    %2769 = vmatprep.subr.mxu0 0.0
    %2770 = vmatpush1.msra.mxu0 %v1799
    %2771 = vmatprep.subr.mxu0 0.0
    %2772 = vmatpush1.msra.mxu0 %v1802
    %2773 = vmatprep.subr.mxu0 0.0
    %2774 = vmatpush1.msra.mxu0 %v1805
    %2775 = vmatprep.subr.mxu0 0.0
    %2776 = vmatpush1.msra.mxu0 %v1808
    %2777 = vmatprep.subr.mxu0 0.0
    %2778 = vmatpush1.msra.mxu0 %v1811
    %2779 = vmatprep.subr.mxu0 0.0
    %2780 = vmatpush1.msra.mxu0 %v1814
    %2781 = vmatprep.subr.mxu0 0.0
    %2782 = vmatpush1.msra.mxu0 %v1817
    %2783 = vmatprep.subr.mxu0 0.0
    %2784 = vmatpush1.msra.mxu0 %v1820
    %2785 = vmatprep.subr.mxu0 0.0
    %2786 = vmatpush1.msra.mxu0 %v1823
    %2787 = vmatprep.subr.mxu0 0.0
    %2788 = vmatpush1.msra.mxu0 %v1826
    %2789 = vmatprep.subr.mxu0 0.0
    %2790 = vmatpush1.msra.mxu0 %v1829
    %2791 = vmatprep.subr.mxu0 0.0
    %2792 = vmatpush1.msra.mxu0 %v1832
    %2793 = vmatprep.subr.mxu0 0.0
    %2794 = vmatpush1.msra.mxu0 0.0
    %2795 = vmatprep.subr.mxu0 0.0
    %2796 = vmatpush1.msra.mxu0 0.0
    %2797 = vmatprep.subr.mxu0 0.0
    %2798 = vmatpush1.msra.mxu0 0.0
    %2799 = vmatprep.subr.mxu0 0.0
    %2800 = vmatpush1.msra.mxu0 0.0
    %2801 = vmatprep.subr.mxu0 0.0
    %2802 = vmatpush1.msra.mxu0 0.0
    %2803 = vmatprep.subr.mxu0 0.0
    %2804 = vmatpush1.msra.mxu0 0.0
    %2805 = vmatprep.subr.mxu0 0.0
    %2806 = vmatpush1.msra.mxu0 0.0
    %2807 = vmatprep.subr.mxu0 0.0
    %2808 = vmatpush1.msra.mxu0 0.0
    %2809 = vmatprep.subr.mxu0 0.0
    %2810 = vmatpush1.msra.mxu0 0.0
    %2811 = vmatprep.subr.mxu0 0.0
    %2812 = vmatpush1.msra.mxu0 0.0
    %2813 = vmatprep.subr.mxu0 0.0
    %2814 = vmatpush1.msra.mxu0 0.0
    %2815 = vmatprep.subr.mxu0 0.0
    %2816 = vmatpush1.msra.mxu0 0.0
    %2817 = vmatprep.subr.mxu0 0.0
    %2818 = vmatpush1.msra.mxu0 0.0
    %2819 = vmatprep.subr.mxu0 0.0
    %2820 = vmatpush1.msra.mxu0 0.0
    %2821 = vmatprep.subr.mxu0 0.0
    %2822 = vmatpush1.msra.mxu0 0.0
    %2823 = vmatprep.subr.mxu0 0.0
    %2824 = vmatpush1.msra.mxu0 0.0
    %2825 = vmatprep.mubr.f32.mxu0 0.0
    %2826 = vmatmul.mubr.f32.gmra.mrb[0].mxu0 %v2684
    %v2827 = vpop.f32.mrb[0].mxu0
    %v2828 = vadd.f32 %v1851, %v2827
    %v2829 = vpop.f32.mrb[0].mxu0
    %2830 = vdwg.mxu0
    %v2831 = vadd.f32 %v2687, %v2757
    %v2832 = vxor.u32 %v2831, 2147483648
    %v2833 = vmul.f32 %v2832, 1.442695
    %v2834 = vpow.pop %v2833
    %v2835 = vadd.f32 %v2834, 1.0
    %v2836 = vrcp.pop %v2835
    %v2837 = vmul.f32 1.0, %v2836
    %v2838 = vadd.f32 %v2688, %v2759
    %v2839 = vxor.u32 %v2838, 2147483648
    %v2840 = vmul.f32 %v2839, 1.442695
    %v2841 = vpow.pop %v2840
    %v2842 = vadd.f32 %v2841, 1.0
    %v2843 = vrcp.pop %v2842
    %v2844 = vmul.f32 1.0, %v2843
    %v2845 = vmul.f32 %v2837, %v2828
    %v2846 = vadd.f32 %v2689, %v2845
    %v2847 = vtanh.pop %v2846
    %v2848 = vsub.f32 1.0, %v2844
    %v2849 = vmul.f32 %v2848, %v2847
    %v2850 = vmul.f32 %v2844, %v2684
    %v2851 = vadd.f32 %v2849, %v2850
    %s2852 = smul.addr %s1130, 8
    %s2853 = scalar_lea.vmem [#allocation2], %s2852
    %v2854 = vld [vmem:[%s2853] sm:$0xff]
    %v2855 = vld [vmem:[%s2853 + $0x8] sm:$0xff]
    %v2856 = vld [vmem:[%s2853 + $0x10] sm:$0xff]
    %2857 = vmatprep.subr.mxu0 %v1786
    %2858 = vmatpush1.msra.mxu0 %v1785
    %2859 = vmatprep.subr.mxu0 %v1789
    %2860 = vmatpush1.msra.mxu0 %v1788
    %2861 = vmatprep.subr.mxu0 %v1792
    %2862 = vmatpush1.msra.mxu0 %v1791
    %2863 = vmatprep.subr.mxu0 %v1795
    %2864 = vmatpush1.msra.mxu0 %v1794
    %2865 = vmatprep.subr.mxu0 %v1798
    %2866 = vmatpush1.msra.mxu0 %v1797
    %2867 = vmatprep.subr.mxu0 %v1801
    %2868 = vmatpush1.msra.mxu0 %v1800
    %2869 = vmatprep.subr.mxu0 %v1804
    %2870 = vmatpush1.msra.mxu0 %v1803
    %2871 = vmatprep.subr.mxu0 %v1807
    %2872 = vmatpush1.msra.mxu0 %v1806
    %2873 = vmatprep.subr.mxu0 %v1810
    %2874 = vmatpush1.msra.mxu0 %v1809
    %2875 = vmatprep.subr.mxu0 %v1813
    %2876 = vmatpush1.msra.mxu0 %v1812
    %2877 = vmatprep.subr.mxu0 %v1816
    %2878 = vmatpush1.msra.mxu0 %v1815
    %2879 = vmatprep.subr.mxu0 %v1819
    %2880 = vmatpush1.msra.mxu0 %v1818
    %2881 = vmatprep.subr.mxu0 %v1822
    %2882 = vmatpush1.msra.mxu0 %v1821
    %2883 = vmatprep.subr.mxu0 %v1825
    %2884 = vmatpush1.msra.mxu0 %v1824
    %2885 = vmatprep.subr.mxu0 %v1828
    %2886 = vmatpush1.msra.mxu0 %v1827
    %2887 = vmatprep.subr.mxu0 %v1831
    %2888 = vmatpush1.msra.mxu0 %v1830
    %2889 = vmatprep.subr.mxu0 0.0
    %2890 = vmatpush1.msra.mxu0 0.0
    %2891 = vmatprep.subr.mxu0 0.0
    %2892 = vmatpush1.msra.mxu0 0.0
    %2893 = vmatprep.subr.mxu0 0.0
    %2894 = vmatpush1.msra.mxu0 0.0
    %2895 = vmatprep.subr.mxu0 0.0
    %2896 = vmatpush1.msra.mxu0 0.0
    %2897 = vmatprep.subr.mxu0 0.0
    %2898 = vmatpush1.msra.mxu0 0.0
    %2899 = vmatprep.subr.mxu0 0.0
    %2900 = vmatpush1.msra.mxu0 0.0
    %2901 = vmatprep.subr.mxu0 0.0
    %2902 = vmatpush1.msra.mxu0 0.0
    %2903 = vmatprep.subr.mxu0 0.0
    %2904 = vmatpush1.msra.mxu0 0.0
    %2905 = vmatprep.subr.mxu0 0.0
    %2906 = vmatpush1.msra.mxu0 0.0
    %2907 = vmatprep.subr.mxu0 0.0
    %2908 = vmatpush1.msra.mxu0 0.0
    %2909 = vmatprep.subr.mxu0 0.0
    %2910 = vmatpush1.msra.mxu0 0.0
    %2911 = vmatprep.subr.mxu0 0.0
    %2912 = vmatpush1.msra.mxu0 0.0
    %2913 = vmatprep.subr.mxu0 0.0
    %2914 = vmatpush1.msra.mxu0 0.0
    %2915 = vmatprep.subr.mxu0 0.0
    %2916 = vmatpush1.msra.mxu0 0.0
    %2917 = vmatprep.subr.mxu0 0.0
    %2918 = vmatpush1.msra.mxu0 0.0
    %2919 = vmatprep.subr.mxu0 0.0
    %2920 = vmatpush1.msra.mxu0 0.0
    %2921 = vmatprep.mubr.f32.mxu0 0.0
    %2922 = vmatmul.mubr.f32.gmra.mrb[0].mxu0 %v2851
    %v2923 = vpop.f32.mrb[0].mxu0
    %v2924 = vadd.f32 %v1843, %v2923
    %v2925 = vpop.f32.mrb[0].mxu0
    %v2926 = vadd.f32 %v1847, %v2925
    %2927 = vdwg.mxu0
    %2928 = vmatprep.subr.mxu0 0.0
    %2929 = vmatpush1.msra.mxu0 %v1787
    %2930 = vmatprep.subr.mxu0 0.0
    %2931 = vmatpush1.msra.mxu0 %v1790
    %2932 = vmatprep.subr.mxu0 0.0
    %2933 = vmatpush1.msra.mxu0 %v1793
    %2934 = vmatprep.subr.mxu0 0.0
    %2935 = vmatpush1.msra.mxu0 %v1796
    %2936 = vmatprep.subr.mxu0 0.0
    %2937 = vmatpush1.msra.mxu0 %v1799
    %2938 = vmatprep.subr.mxu0 0.0
    %2939 = vmatpush1.msra.mxu0 %v1802
    %2940 = vmatprep.subr.mxu0 0.0
    %2941 = vmatpush1.msra.mxu0 %v1805
    %2942 = vmatprep.subr.mxu0 0.0
    %2943 = vmatpush1.msra.mxu0 %v1808
    %2944 = vmatprep.subr.mxu0 0.0
    %2945 = vmatpush1.msra.mxu0 %v1811
    %2946 = vmatprep.subr.mxu0 0.0
    %2947 = vmatpush1.msra.mxu0 %v1814
    %2948 = vmatprep.subr.mxu0 0.0
    %2949 = vmatpush1.msra.mxu0 %v1817
    %2950 = vmatprep.subr.mxu0 0.0
    %2951 = vmatpush1.msra.mxu0 %v1820
    %2952 = vmatprep.subr.mxu0 0.0
    %2953 = vmatpush1.msra.mxu0 %v1823
    %2954 = vmatprep.subr.mxu0 0.0
    %2955 = vmatpush1.msra.mxu0 %v1826
    %2956 = vmatprep.subr.mxu0 0.0
    %2957 = vmatpush1.msra.mxu0 %v1829
    %2958 = vmatprep.subr.mxu0 0.0
    %2959 = vmatpush1.msra.mxu0 %v1832
    %2960 = vmatprep.subr.mxu0 0.0
    %2961 = vmatpush1.msra.mxu0 0.0
    %2962 = vmatprep.subr.mxu0 0.0
    %2963 = vmatpush1.msra.mxu0 0.0
    %2964 = vmatprep.subr.mxu0 0.0
    %2965 = vmatpush1.msra.mxu0 0.0
    %2966 = vmatprep.subr.mxu0 0.0
    %2967 = vmatpush1.msra.mxu0 0.0
    %2968 = vmatprep.subr.mxu0 0.0
    %2969 = vmatpush1.msra.mxu0 0.0
    %2970 = vmatprep.subr.mxu0 0.0
    %2971 = vmatpush1.msra.mxu0 0.0
    %2972 = vmatprep.subr.mxu0 0.0
    %2973 = vmatpush1.msra.mxu0 0.0
    %2974 = vmatprep.subr.mxu0 0.0
    %2975 = vmatpush1.msra.mxu0 0.0
    %2976 = vmatprep.subr.mxu0 0.0
    %2977 = vmatpush1.msra.mxu0 0.0
    %2978 = vmatprep.subr.mxu0 0.0
    %2979 = vmatpush1.msra.mxu0 0.0
    %2980 = vmatprep.subr.mxu0 0.0
    %2981 = vmatpush1.msra.mxu0 0.0
    %2982 = vmatprep.subr.mxu0 0.0
    %2983 = vmatpush1.msra.mxu0 0.0
    %2984 = vmatprep.subr.mxu0 0.0
    %2985 = vmatpush1.msra.mxu0 0.0
    %2986 = vmatprep.subr.mxu0 0.0
    %2987 = vmatpush1.msra.mxu0 0.0
    %2988 = vmatprep.subr.mxu0 0.0
    %2989 = vmatpush1.msra.mxu0 0.0
    %2990 = vmatprep.subr.mxu0 0.0
    %2991 = vmatpush1.msra.mxu0 0.0
    %2992 = vmatprep.mubr.f32.mxu0 0.0
    %2993 = vmatmul.mubr.f32.gmra.mrb[0].mxu0 %v2851
    %v2994 = vpop.f32.mrb[0].mxu0
    %v2995 = vadd.f32 %v1851, %v2994
    %v2996 = vpop.f32.mrb[0].mxu0
    %2997 = vdwg.mxu0
    %v2998 = vadd.f32 %v2854, %v2924
    %v2999 = vxor.u32 %v2998, 2147483648
    %v3000 = vmul.f32 %v2999, 1.442695
    %v3001 = vpow.pop %v3000
    %v3002 = vadd.f32 %v3001, 1.0
    %v3003 = vrcp.pop %v3002
    %v3004 = vmul.f32 1.0, %v3003
    %v3005 = vadd.f32 %v2855, %v2926
    %v3006 = vxor.u32 %v3005, 2147483648
    %v3007 = vmul.f32 %v3006, 1.442695
    %v3008 = vpow.pop %v3007
    %v3009 = vadd.f32 %v3008, 1.0
    %v3010 = vrcp.pop %v3009
    %v3011 = vmul.f32 1.0, %v3010
    %v3012 = vmul.f32 %v3004, %v2995
    %v3013 = vadd.f32 %v2856, %v3012
    %v3014 = vtanh.pop %v3013
    %v3015 = vsub.f32 1.0, %v3011
    %v3016 = vmul.f32 %v3015, %v3014
    %v3017 = vmul.f32 %v3011, %v2851
    %v3018 = vadd.f32 %v3016, %v3017
    %s3019 = smul.addr %s1300, 8
    %s3020 = scalar_lea.vmem [#allocation2], %s3019
    %v3021 = vld [vmem:[%s3020] sm:$0xff]
    %v3022 = vld [vmem:[%s3020 + $0x8] sm:$0xff]
    %v3023 = vld [vmem:[%s3020 + $0x10] sm:$0xff]
    %3024 = vmatprep.subr.mxu0 %v1786
    %3025 = vmatpush1.msra.mxu0 %v1785
    %3026 = vmatprep.subr.mxu0 %v1789
    %3027 = vmatpush1.msra.mxu0 %v1788
    %3028 = vmatprep.subr.mxu0 %v1792
    %3029 = vmatpush1.msra.mxu0 %v1791
    %3030 = vmatprep.subr.mxu0 %v1795
    %3031 = vmatpush1.msra.mxu0 %v1794
    %3032 = vmatprep.subr.mxu0 %v1798
    %3033 = vmatpush1.msra.mxu0 %v1797
    %3034 = vmatprep.subr.mxu0 %v1801
    %3035 = vmatpush1.msra.mxu0 %v1800
    %3036 = vmatprep.subr.mxu0 %v1804
    %3037 = vmatpush1.msra.mxu0 %v1803
    %3038 = vmatprep.subr.mxu0 %v1807
    %3039 = vmatpush1.msra.mxu0 %v1806
    %3040 = vmatprep.subr.mxu0 %v1810
    %3041 = vmatpush1.msra.mxu0 %v1809
    %3042 = vmatprep.subr.mxu0 %v1813
    %3043 = vmatpush1.msra.mxu0 %v1812
    %3044 = vmatprep.subr.mxu0 %v1816
    %3045 = vmatpush1.msra.mxu0 %v1815
    %3046 = vmatprep.subr.mxu0 %v1819
    %3047 = vmatpush1.msra.mxu0 %v1818
    %3048 = vmatprep.subr.mxu0 %v1822
    %3049 = vmatpush1.msra.mxu0 %v1821
    %3050 = vmatprep.subr.mxu0 %v1825
    %3051 = vmatpush1.msra.mxu0 %v1824
    %3052 = vmatprep.subr.mxu0 %v1828
    %3053 = vmatpush1.msra.mxu0 %v1827
    %3054 = vmatprep.subr.mxu0 %v1831
    %3055 = vmatpush1.msra.mxu0 %v1830
    %3056 = vmatprep.subr.mxu0 0.0
    %3057 = vmatpush1.msra.mxu0 0.0
    %3058 = vmatprep.subr.mxu0 0.0
    %3059 = vmatpush1.msra.mxu0 0.0
    %3060 = vmatprep.subr.mxu0 0.0
    %3061 = vmatpush1.msra.mxu0 0.0
    %3062 = vmatprep.subr.mxu0 0.0
    %3063 = vmatpush1.msra.mxu0 0.0
    %3064 = vmatprep.subr.mxu0 0.0
    %3065 = vmatpush1.msra.mxu0 0.0
    %3066 = vmatprep.subr.mxu0 0.0
    %3067 = vmatpush1.msra.mxu0 0.0
    %3068 = vmatprep.subr.mxu0 0.0
    %3069 = vmatpush1.msra.mxu0 0.0
    %3070 = vmatprep.subr.mxu0 0.0
    %3071 = vmatpush1.msra.mxu0 0.0
    %3072 = vmatprep.subr.mxu0 0.0
    %3073 = vmatpush1.msra.mxu0 0.0
    %3074 = vmatprep.subr.mxu0 0.0
    %3075 = vmatpush1.msra.mxu0 0.0
    %3076 = vmatprep.subr.mxu0 0.0
    %3077 = vmatpush1.msra.mxu0 0.0
    %3078 = vmatprep.subr.mxu0 0.0
    %3079 = vmatpush1.msra.mxu0 0.0
    %3080 = vmatprep.subr.mxu0 0.0
    %3081 = vmatpush1.msra.mxu0 0.0
    %3082 = vmatprep.subr.mxu0 0.0
    %3083 = vmatpush1.msra.mxu0 0.0
    %3084 = vmatprep.subr.mxu0 0.0
    %3085 = vmatpush1.msra.mxu0 0.0
    %3086 = vmatprep.subr.mxu0 0.0
    %3087 = vmatpush1.msra.mxu0 0.0
    %3088 = vmatprep.mubr.f32.mxu0 0.0
    %3089 = vmatmul.mubr.f32.gmra.mrb[0].mxu0 %v3018
    %v3090 = vpop.f32.mrb[0].mxu0
    %v3091 = vadd.f32 %v1843, %v3090
    %v3092 = vpop.f32.mrb[0].mxu0
    %v3093 = vadd.f32 %v1847, %v3092
    %3094 = vdwg.mxu0
    %3095 = vmatprep.subr.mxu0 0.0
    %3096 = vmatpush1.msra.mxu0 %v1787
    %3097 = vmatprep.subr.mxu0 0.0
    %3098 = vmatpush1.msra.mxu0 %v1790
    %3099 = vmatprep.subr.mxu0 0.0
    %3100 = vmatpush1.msra.mxu0 %v1793
    %3101 = vmatprep.subr.mxu0 0.0
    %3102 = vmatpush1.msra.mxu0 %v1796
    %3103 = vmatprep.subr.mxu0 0.0
    %3104 = vmatpush1.msra.mxu0 %v1799
    %3105 = vmatprep.subr.mxu0 0.0
    %3106 = vmatpush1.msra.mxu0 %v1802
    %3107 = vmatprep.subr.mxu0 0.0
    %3108 = vmatpush1.msra.mxu0 %v1805
    %3109 = vmatprep.subr.mxu0 0.0
    %3110 = vmatpush1.msra.mxu0 %v1808
    %3111 = vmatprep.subr.mxu0 0.0
    %3112 = vmatpush1.msra.mxu0 %v1811
    %3113 = vmatprep.subr.mxu0 0.0
    %3114 = vmatpush1.msra.mxu0 %v1814
    %3115 = vmatprep.subr.mxu0 0.0
    %3116 = vmatpush1.msra.mxu0 %v1817
    %3117 = vmatprep.subr.mxu0 0.0
    %3118 = vmatpush1.msra.mxu0 %v1820
    %3119 = vmatprep.subr.mxu0 0.0
    %3120 = vmatpush1.msra.mxu0 %v1823
    %3121 = vmatprep.subr.mxu0 0.0
    %3122 = vmatpush1.msra.mxu0 %v1826
    %3123 = vmatprep.subr.mxu0 0.0
    %3124 = vmatpush1.msra.mxu0 %v1829
    %3125 = vmatprep.subr.mxu0 0.0
    %3126 = vmatpush1.msra.mxu0 %v1832
    %3127 = vmatprep.subr.mxu0 0.0
    %3128 = vmatpush1.msra.mxu0 0.0
    %3129 = vmatprep.subr.mxu0 0.0
    %3130 = vmatpush1.msra.mxu0 0.0
    %3131 = vmatprep.subr.mxu0 0.0
    %3132 = vmatpush1.msra.mxu0 0.0
    %3133 = vmatprep.subr.mxu0 0.0
    %3134 = vmatpush1.msra.mxu0 0.0
    %3135 = vmatprep.subr.mxu0 0.0
    %3136 = vmatpush1.msra.mxu0 0.0
    %3137 = vmatprep.subr.mxu0 0.0
    %3138 = vmatpush1.msra.mxu0 0.0
    %3139 = vmatprep.subr.mxu0 0.0
    %3140 = vmatpush1.msra.mxu0 0.0
    %3141 = vmatprep.subr.mxu0 0.0
    %3142 = vmatpush1.msra.mxu0 0.0
    %3143 = vmatprep.subr.mxu0 0.0
    %3144 = vmatpush1.msra.mxu0 0.0
    %3145 = vmatprep.subr.mxu0 0.0
    %3146 = vmatpush1.msra.mxu0 0.0
    %3147 = vmatprep.subr.mxu0 0.0
    %3148 = vmatpush1.msra.mxu0 0.0
    %3149 = vmatprep.subr.mxu0 0.0
    %3150 = vmatpush1.msra.mxu0 0.0
    %3151 = vmatprep.subr.mxu0 0.0
    %3152 = vmatpush1.msra.mxu0 0.0
    %3153 = vmatprep.subr.mxu0 0.0
    %3154 = vmatpush1.msra.mxu0 0.0
    %3155 = vmatprep.subr.mxu0 0.0
    %3156 = vmatpush1.msra.mxu0 0.0
    %3157 = vmatprep.subr.mxu0 0.0
    %3158 = vmatpush1.msra.mxu0 0.0
    %3159 = vmatprep.mubr.f32.mxu0 0.0
    %3160 = vmatmul.mubr.f32.gmra.mrb[0].mxu0 %v3018
    %v3161 = vpop.f32.mrb[0].mxu0
    %v3162 = vadd.f32 %v1851, %v3161
    %v3163 = vpop.f32.mrb[0].mxu0
    %3164 = vdwg.mxu0
    %v3165 = vadd.f32 %v3021, %v3091
    %v3166 = vxor.u32 %v3165, 2147483648
    %v3167 = vmul.f32 %v3166, 1.442695
    %v3168 = vpow.pop %v3167
    %v3169 = vadd.f32 %v3168, 1.0
    %v3170 = vrcp.pop %v3169
    %v3171 = vmul.f32 1.0, %v3170
    %v3172 = vadd.f32 %v3022, %v3093
    %v3173 = vxor.u32 %v3172, 2147483648
    %v3174 = vmul.f32 %v3173, 1.442695
    %v3175 = vpow.pop %v3174
    %v3176 = vadd.f32 %v3175, 1.0
    %v3177 = vrcp.pop %v3176
    %v3178 = vmul.f32 1.0, %v3177
    %v3179 = vmul.f32 %v3171, %v3162
    %v3180 = vadd.f32 %v3023, %v3179
    %v3181 = vtanh.pop %v3180
    %v3182 = vsub.f32 1.0, %v3178
    %v3183 = vmul.f32 %v3182, %v3181
    %v3184 = vmul.f32 %v3178, %v3018
    %v3185 = vadd.f32 %v3183, %v3184
    %v3186 = vld [vmem:[%s7] sm:$0xff]
    %v3187 = vld [vmem:[%s7 + $0x8] sm:$0xff]
    %v3188 = vld [vmem:[%s7 + $0x10] sm:$0xff]
    %v3189 = vld [vmem:[%s7 + $0x18] sm:$0xff]
    %v3190 = vld [vmem:[%s7 + $0x20] sm:$0xff]
    %v3191 = vld [vmem:[%s7 + $0x28] sm:$0xff]
    %v3192 = vld [vmem:[%s7 + $0x30] sm:$0xff]
    %v3193 = vld [vmem:[%s7 + $0x38] sm:$0xff]
    %v3194 = vld [vmem:[%s7 + $0x40] sm:$0xff]
    %v3195 = vld [vmem:[%s7 + $0x48] sm:$0xff]
    %v3196 = vld [vmem:[%s7 + $0x50] sm:$0xff]
    %v3197 = vld [vmem:[%s7 + $0x58] sm:$0xff]
    %v3198 = vld [vmem:[%s7 + $0x60] sm:$0xff]
    %v3199 = vld [vmem:[%s7 + $0x68] sm:$0xff]
    %v3200 = vld [vmem:[%s7 + $0x70] sm:$0xff]
    %v3201 = vld [vmem:[%s7 + $0x78] sm:$0xff]
    %v3202 = vld [vmem:[%s8] sm:$0x1]
    %v3204 = vlaneseq
    %v3205 = vshrl.u32 %v3204, 7
    %v3206 = vsub.s32 0, %v3205
    %v3207 = vrot.slane %v3202, %v3206
    %3209 = vmatprep.subr.mxu0 0.0
    %3210 = vmatpush1.msra.mxu0 %v3186
    %3211 = vmatprep.subr.mxu0 0.0
    %3212 = vmatpush1.msra.mxu0 %v3187
    %3213 = vmatprep.subr.mxu0 0.0
    %3214 = vmatpush1.msra.mxu0 %v3188
    %3215 = vmatprep.subr.mxu0 0.0
    %3216 = vmatpush1.msra.mxu0 %v3189
    %3217 = vmatprep.subr.mxu0 0.0
    %3218 = vmatpush1.msra.mxu0 %v3190
    %3219 = vmatprep.subr.mxu0 0.0
    %3220 = vmatpush1.msra.mxu0 %v3191
    %3221 = vmatprep.subr.mxu0 0.0
    %3222 = vmatpush1.msra.mxu0 %v3192
    %3223 = vmatprep.subr.mxu0 0.0
    %3224 = vmatpush1.msra.mxu0 %v3193
    %3225 = vmatprep.subr.mxu0 0.0
    %3226 = vmatpush1.msra.mxu0 %v3194
    %3227 = vmatprep.subr.mxu0 0.0
    %3228 = vmatpush1.msra.mxu0 %v3195
    %3229 = vmatprep.subr.mxu0 0.0
    %3230 = vmatpush1.msra.mxu0 %v3196
    %3231 = vmatprep.subr.mxu0 0.0
    %3232 = vmatpush1.msra.mxu0 %v3197
    %3233 = vmatprep.subr.mxu0 0.0
    %3234 = vmatpush1.msra.mxu0 %v3198
    %3235 = vmatprep.subr.mxu0 0.0
    %3236 = vmatpush1.msra.mxu0 %v3199
    %3237 = vmatprep.subr.mxu0 0.0
    %3238 = vmatpush1.msra.mxu0 %v3200
    %3239 = vmatprep.subr.mxu0 0.0
    %3240 = vmatpush1.msra.mxu0 %v3201
    %3241 = vmatprep.subr.mxu0 0.0
    %3242 = vmatpush1.msra.mxu0 0.0
    %3243 = vmatprep.subr.mxu0 0.0
    %3244 = vmatpush1.msra.mxu0 0.0
    %3245 = vmatprep.subr.mxu0 0.0
    %3246 = vmatpush1.msra.mxu0 0.0
    %3247 = vmatprep.subr.mxu0 0.0
    %3248 = vmatpush1.msra.mxu0 0.0
    %3249 = vmatprep.subr.mxu0 0.0
    %3250 = vmatpush1.msra.mxu0 0.0
    %3251 = vmatprep.subr.mxu0 0.0
    %3252 = vmatpush1.msra.mxu0 0.0
    %3253 = vmatprep.subr.mxu0 0.0
    %3254 = vmatpush1.msra.mxu0 0.0
    %3255 = vmatprep.subr.mxu0 0.0
    %3256 = vmatpush1.msra.mxu0 0.0
    %3257 = vmatprep.subr.mxu0 0.0
    %3258 = vmatpush1.msra.mxu0 0.0
    %3259 = vmatprep.subr.mxu0 0.0
    %3260 = vmatpush1.msra.mxu0 0.0
    %3261 = vmatprep.subr.mxu0 0.0
    %3262 = vmatpush1.msra.mxu0 0.0
    %3263 = vmatprep.subr.mxu0 0.0
    %3264 = vmatpush1.msra.mxu0 0.0
    %3265 = vmatprep.subr.mxu0 0.0
    %3266 = vmatpush1.msra.mxu0 0.0
    %3267 = vmatprep.subr.mxu0 0.0
    %3268 = vmatpush1.msra.mxu0 0.0
    %3269 = vmatprep.subr.mxu0 0.0
    %3270 = vmatpush1.msra.mxu0 0.0
    %3271 = vmatprep.subr.mxu0 0.0
    %3272 = vmatpush1.msra.mxu0 0.0
    %3273 = vmatprep.mubr.f32.mxu0 0.0
    %3274 = vmatmul.mubr.f32.gmra.mrb[0].mxu0 %v3185
    %v3275 = vpop.f32.mrb[0].mxu0
    %v3276 = vadd.f32 %v3207, %v3275
    %v3277 = vpop.f32.mrb[0].mxu0
    %3278 = vdwg.mxu0
    %3279 = vst [vmem:[%s9] sm:$0xff] %v3276
    // Predicated region
    $region42: #{clf_gru_forward.1} parent=1 // pred_check
      _
    $region43: #{clf_gru_forward.1} parent=1 // pred_check_branch
      %3281 = sbr.rel (0) target = $region45
    $region44: #{clf_gru_forward.1} parent=1 // pred_region
      _
    $region45: #{clf_gru_forward.1} parent=1 // pred_fallthru
      _
    // Predicated region
    $region46: #{clf_gru_forward.1} parent=1 // pred_check
      _
    $region47: #{clf_gru_forward.1} parent=1 // pred_check_branch
      %3283 = sbr.rel (0) target = $region49
    $region48: #{clf_gru_forward.1} parent=1 // pred_region
      _
    $region49: #{clf_gru_forward.1} parent=1 // pred_fallthru
      _
    %3284 = vsyncpa [#allocation5], 1

</llo_original>
